<compile_context>
chip_gen: v6e
topology: v6e:2x2x1
jax: 0.10.0
libtpu: 0.0.40
codegen_flags: <defaults>
</compile_context>

<pallas_src>
import jax
import jax.numpy as jnp
from jax import lax
from jax.experimental import pallas as pl
from jax.experimental.pallas import tpu as pltpu

MID_C = 1024  # conv1 output channels (fixed by the module)


def _spatial_attn_kernel(x_ref, w1_ref, b1_ref, w2_ref, b2_ref, out_ref, att_ref):
    # x block: (1, C_in, TM) -> (C_in, TM); channels on sublanes, pixels on lanes.
    x = x_ref[0].astype(jnp.float32)                       # (C_in, TM)
    w1 = w1_ref[...].astype(jnp.float32)                   # (MID_C, C_in), BN folded in

    # 1x1 conv #1 + BN (folded): h[c, p]
    h = jnp.dot(w1, x, preferred_element_type=jnp.float32)  # (MID_C, TM), MXU
    h = h + b1_ref[...]                                     # fused bias (MID_C, 1)

    # F.normalize(p=2, dim=channel): per-pixel scalar 1 / max(||h||, 1e-12)
    ssq = jnp.sum(h * h, axis=0, keepdims=True)             # (1, TM)
    inv_norm = lax.rsqrt(jnp.maximum(ssq, 1e-24))           # EUP; == 1/max(||h||,1e-12)

    # ReLU -> 1x1 conv #2 (1024 -> 1): keep it on the MXU, result is lane-dense (1, TM)
    r = jnp.maximum(h, 0.0)
    s = jnp.dot(w2_ref[...].astype(jnp.float32), r,
                preferred_element_type=jnp.float32) + b2_ref[...]    # (1, TM)

    # Softplus(beta=1, threshold=20)
    att = jnp.where(s > 20.0, s, jnp.log1p(jnp.exp(jnp.minimum(s, 20.0))))  # (1, TM)

    # out = att * normalize(h): apply a single per-pixel scalar to h (no fmap_norm temp)
    out_ref[0] = (h * (att * inv_norm)).astype(out_ref.dtype)   # (MID_C, TM) -> NCHW slab
    att_ref[0] = att.astype(att_ref.dtype)                      # (1, TM), lane-dense


def _choose_spatial_tile(hw):
    """Pick a pixel-tile TM (lanes) and the padded spatial extent."""
    if hw <= 1024:
        return hw, hw                        # full-extent block is always legal
    for tm in (1024, 512, 256, 128):
        if hw % tm == 0:
            return tm, hw
    tm = 512
    return tm, ((hw + tm - 1) // tm) * tm    # pad tail, slice off afterwards


@jax.jit
def spatial_attention_2d(x_nchw, w1, b1, bn_gamma, bn_beta, bn_mean, bn_var,
                         w2, b2, eps=1e-5):
    """x_nchw: (B, C_in, H, W). Returns (out, att_score) in NCHW, matching PyTorch."""
    B, C_in, H, W = x_nchw.shape
    HW = H * W
    TM, HW_pad = _choose_spatial_tile(HW)

    # Fold inference-mode BN and conv1 bias into the conv1 weight/bias.
    inv_std = 1.0 / jnp.sqrt(bn_var + eps)
    bn_scale = bn_gamma * inv_std                                   # (MID_C,)
    bn_shift = bn_beta - bn_mean * bn_scale                         # (MID_C,)
    w1_f = w1.reshape(MID_C, C_in) * bn_scale[:, None]              # (MID_C, C_in)
    b1_f = (bn_scale * b1 + bn_shift).reshape(MID_C, 1)             # (MID_C, 1)
    w2_row = w2.reshape(1, MID_C)                                   # (1, MID_C)
    b2_mat = b2.reshape(1, 1)

    # NCHW -> (B, C_in, H*W): pure reshape, no transpose / data movement.
    x_flat = x_nchw.reshape(B, C_in, HW)
    if HW_pad != HW:
        x_flat = jnp.pad(x_flat, ((0, 0), (0, 0), (0, HW_pad - HW)))

    grid = (B, HW_pad // TM)
    out_flat, att_flat = pl.pallas_call(
        _spatial_attn_kernel,
        out_shape=(jax.ShapeDtypeStruct((B, MID_C, HW_pad), jnp.float32),
                   jax.ShapeDtypeStruct((B, 1, HW_pad), jnp.float32)),
        grid_spec=pltpu.PrefetchScalarGridSpec(
            num_scalar_prefetch=0,
            grid=grid,
            in_specs=[
                pl.BlockSpec((1, C_in, TM), lambda b, j: (b, 0, j)),   # x tile
                pl.BlockSpec((MID_C, C_in), lambda b, j: (0, 0)),      # folded w1
                pl.BlockSpec((MID_C, 1), lambda b, j: (0, 0)),         # folded bias
                pl.BlockSpec((1, MID_C), lambda b, j: (0, 0)),         # w2
                pl.BlockSpec((1, 1), lambda b, j: (0, 0)),             # b2
            ],
            out_specs=[
                pl.BlockSpec((1, MID_C, TM), lambda b, j: (b, 0, j)),  # att * normalized(h)
                pl.BlockSpec((1, 1, TM), lambda b, j: (b, 0, j)),      # att_score
            ],
        ),
        compiler_params=pltpu.CompilerParams(
            dimension_semantics=("parallel", "parallel")),
    )(x_flat, w1_f, b1_f, w2_row, b2_mat)

    # (B, MID_C, HW) -> (B, MID_C, H, W): reshape only, no transpose.
    out = out_flat[:, :, :HW].reshape(B, MID_C, H, W)
    att_score = att_flat[:, :, :HW].reshape(B, 1, H, W)
    return out, att_score


def _reference(x_nchw, w1, b1, bn_gamma, bn_beta, bn_mean, bn_var, w2, b2, eps=1e-5):
    """Plain-JAX reference of the PyTorch forward (inference BN)."""
    B, C_in, H, W = x_nchw.shape
    xr = jnp.transpose(x_nchw, (0, 2, 3, 1)).reshape(-1, C_in)
    h = xr @ w1.reshape(MID_C, C_in).T + b1
    h = (h - bn_mean) / jnp.sqrt(bn_var + eps) * bn_gamma + bn_beta
    nrm = jnp.maximum(jnp.linalg.norm(h, axis=-1, keepdims=True), 1e-12)
    fmn = h / nrm
    r = jnp.maximum(h, 0.0)
    s = r @ w2.reshape(1, MID_C).T + b2
    att = jnp.where(s > 20.0, s, jnp.log1p(jnp.exp(jnp.minimum(s, 20.0))))
    out = att * fmn
    out = jnp.transpose(out.reshape(B, H, W, MID_C), (0, 3, 1, 2))
    att = jnp.transpose(att.reshape(B, H, W, 1), (0, 3, 1, 2))
    return out, att


if __name__ == "__main__":
    key = jax.random.PRNGKey(0)
    B, C_in, H, W = 2, 4, 16, 16

    k = jax.random.split(key, 8)
    x = jax.random.normal(k[0], (B, C_in, H, W), jnp.float32)

    # Deterministic parameter init (shapes match nn.Conv2d / nn.BatchNorm2d in the module).
    w1 = jax.random.normal(k[1], (MID_C, C_in, 1, 1), jnp.float32) * 0.1   # conv1 weight
    b1 = jax.random.normal(k[2], (MID_C,), jnp.float32) * 0.1              # conv1 bias
    bn_gamma = 1.0 + 0.1 * jax.random.normal(k[3], (MID_C,), jnp.float32)
    bn_beta = 0.1 * jax.random.normal(k[4], (MID_C,), jnp.float32)
    bn_mean = 0.05 * jax.random.normal(k[5], (MID_C,), jnp.float32)
    bn_var = jnp.abs(1.0 + 0.1 * jax.random.normal(k[6], (MID_C,), jnp.float32))
    w2 = jax.random.normal(k[7], (1, MID_C, 1, 1), jnp.float32) * 0.05     # conv2 weight
    b2 = jnp.array([0.1], jnp.float32)                                     # conv2 bias

    out, att = spatial_attention_2d(x, w1, b1, bn_gamma, bn_beta, bn_mean, bn_var, w2, b2)
    jax.block_until_ready((out, att))

    out_ref, att_ref = _reference(x, w1, b1, bn_gamma, bn_beta, bn_mean, bn_var, w2, b2)
    assert out.shape == (B, MID_C, H, W) and att.shape == (B, 1, H, W)
    assert jnp.allclose(out, out_ref, atol=1e-4, rtol=1e-4)
    assert jnp.allclose(att, att_ref, atol=1e-4, rtol=1e-4)

    print("KERNEL_OK")
</pallas_src>

<mosaic_0001>
module attributes {stable_mosaic.version = 11 : i64} {
  func.func @_spatial_attn_kernel(%arg0: i32, %arg1: i32, %arg2: memref<1x4x256xf32, #tpu.memory_space<vmem>>, %arg3: memref<1024x4xf32, #tpu.memory_space<vmem>>, %arg4: memref<1024x1xf32, #tpu.memory_space<vmem>>, %arg5: memref<1x1024xf32, #tpu.memory_space<vmem>>, %arg6: memref<1x1xf32, #tpu.memory_space<vmem>>, %arg7: memref<1x1024x256xf32, #tpu.memory_space<vmem>>, %arg8: memref<1x1x256xf32, #tpu.memory_space<vmem>>) attributes {dimension_semantics = [#tpu.dimension_semantics<parallel>, #tpu.dimension_semantics<parallel>], iteration_bounds = array<i64: 2, 1>, scalar_prefetch = 0 : i64, scratch_operands = 0 : i64, tpu.core_type = #tpu.core_type<tc>, window_params = [{transform_indices = @transform_0, window_bounds = array<i64: 1, 4, 256>}, {pipeline_mode = #tpu.pipeline_mode<synchronous>, transform_indices = @transform_1, window_bounds = array<i64: 1024, 4>}, {pipeline_mode = #tpu.pipeline_mode<synchronous>, transform_indices = @transform_2, window_bounds = array<i64: 1024, 1>}, {pipeline_mode = #tpu.pipeline_mode<synchronous>, transform_indices = @transform_3, window_bounds = array<i64: 1, 1024>}, {pipeline_mode = #tpu.pipeline_mode<synchronous>, transform_indices = @transform_4, window_bounds = array<i64: 1, 1>}, {transform_indices = @transform_5, window_bounds = array<i64: 1, 1024, 256>}, {transform_indices = @transform_6, window_bounds = array<i64: 1, 1, 256>}]} {
    %c0 = arith.constant 0 : index
    %c0_0 = arith.constant 0 : index
    %c0_1 = arith.constant 0 : index
    %0 = vector.load %arg2[%c0, %c0_0, %c0_1] : memref<1x4x256xf32, #tpu.memory_space<vmem>>, vector<1x4x256xf32>
    %1 = vector.shape_cast %0 : vector<1x4x256xf32> to vector<4x256xf32>
    %c0_2 = arith.constant 0 : index
    %c0_3 = arith.constant 0 : index
    %2 = vector.load %arg3[%c0_2, %c0_3] : memref<1024x4xf32, #tpu.memory_space<vmem>>, vector<1024x4xf32>
    %cst = arith.constant dense<0.000000e+00> : vector<1024x256xf32>
    %3 = tpu.matmul %2, %1, %cst {dimension_numbers = #tpu.dot_dimension_numbers<[1], [0], [0], [1], [0, 0, 1, 1], [], []>} : vector<1024x4xf32>, vector<4x256xf32>, vector<1024x256xf32> -> vector<1024x256xf32>
    %c0_4 = arith.constant 0 : index
    %c0_5 = arith.constant 0 : index
    %4 = vector.load %arg4[%c0_4, %c0_5] : memref<1024x1xf32, #tpu.memory_space<vmem>>, vector<1024x1xf32>
    %5 = vector.broadcast %4 : vector<1024x1xf32> to vector<1024x256xf32>
    %6 = arith.addf %3, %5 : vector<1024x256xf32>
    %7 = arith.mulf %6, %6 : vector<1024x256xf32>
    %cst_6 = arith.constant dense<0.000000e+00> : vector<256xf32>
    %8 = vector.multi_reduction <add>, %7, %cst_6 [0] : vector<1024x256xf32> to vector<256xf32>
    %9 = vector.shape_cast %8 : vector<256xf32> to vector<1x256xf32>
    %cst_7 = arith.constant 1.000000e-24 : f32
    %10 = vector.broadcast %cst_7 : f32 to vector<1x256xf32>
    %11 = arith.maximumf %9, %10 : vector<1x256xf32>
    %12 = math.rsqrt %11 : vector<1x256xf32>
    %cst_8 = arith.constant 0.000000e+00 : f32
    %13 = vector.broadcast %cst_8 : f32 to vector<1024x256xf32>
    %14 = arith.maximumf %6, %13 : vector<1024x256xf32>
    %c0_9 = arith.constant 0 : index
    %c0_10 = arith.constant 0 : index
    %15 = vector.load %arg5[%c0_9, %c0_10] : memref<1x1024xf32, #tpu.memory_space<vmem>>, vector<1x1024xf32>
    %cst_11 = arith.constant dense<0.000000e+00> : vector<1x256xf32>
    %16 = tpu.matmul %15, %14, %cst_11 {dimension_numbers = #tpu.dot_dimension_numbers<[1], [0], [0], [1], [0, 0, 1, 1], [], []>} : vector<1x1024xf32>, vector<1024x256xf32>, vector<1x256xf32> -> vector<1x256xf32>
    %c0_12 = arith.constant 0 : index
    %c0_13 = arith.constant 0 : index
    %17 = vector.load %arg6[%c0_12, %c0_13] : memref<1x1xf32, #tpu.memory_space<vmem>>, vector<1x1xf32>
    %18 = vector.broadcast %17 : vector<1x1xf32> to vector<1x256xf32>
    %19 = arith.addf %16, %18 : vector<1x256xf32>
    %cst_14 = arith.constant 2.000000e+01 : f32
    %20 = vector.broadcast %cst_14 : f32 to vector<1x256xf32>
    %21 = arith.cmpf ogt, %19, %20 : vector<1x256xf32>
    %cst_15 = arith.constant 2.000000e+01 : f32
    %22 = vector.broadcast %cst_15 : f32 to vector<1x256xf32>
    %23 = arith.minimumf %19, %22 : vector<1x256xf32>
    %24 = math.exp %23 : vector<1x256xf32>
    %25 = math.log1p %24 : vector<1x256xf32>
    %26 = arith.select %21, %19, %25 : vector<1x256xi1>, vector<1x256xf32>
    %27 = arith.mulf %26, %12 : vector<1x256xf32>
    %28 = vector.broadcast %27 : vector<1x256xf32> to vector<1024x256xf32>
    %29 = arith.mulf %6, %28 : vector<1024x256xf32>
    %c0_16 = arith.constant 0 : index
    %c0_17 = arith.constant 0 : index
    %c0_18 = arith.constant 0 : index
    %30 = vector.load %arg7[%c0_16, %c0_17, %c0_18] : memref<1x1024x256xf32, #tpu.memory_space<vmem>>, vector<1x1024x256xf32>
    %31 = vector.shape_cast %30 : vector<1x1024x256xf32> to vector<1024x256xf32>
    %32 = vector.shape_cast %29 : vector<1024x256xf32> to vector<1x1024x256xf32>
    tpu.vector_store %arg7[%c0_16, %c0_17, %c0_18], %32 {strides = array<i32>} : memref<1x1024x256xf32, #tpu.memory_space<vmem>>, vector<1x1024x256xf32>,
    %c0_19 = arith.constant 0 : index
    %c0_20 = arith.constant 0 : index
    %c0_21 = arith.constant 0 : index
    %33 = vector.load %arg8[%c0_19, %c0_20, %c0_21] : memref<1x1x256xf32, #tpu.memory_space<vmem>>, vector<1x1x256xf32>
    %34 = vector.shape_cast %33 : vector<1x1x256xf32> to vector<1x256xf32>
    %35 = vector.shape_cast %26 : vector<1x256xf32> to vector<1x1x256xf32>
    tpu.vector_store %arg8[%c0_19, %c0_20, %c0_21], %35 {strides = array<i32>} : memref<1x1x256xf32, #tpu.memory_space<vmem>>, vector<1x1x256xf32>,
    return
  }
  func.func @transform_0(%arg0: i32, %arg1: i32) -> (i32, i32, i32) {
    %c0_i32 = arith.constant 0 : i32
    %c0_i32_0 = arith.constant 0 : i32
    return %arg0, %c0_i32, %arg1 : i32, i32, i32
  }
  func.func @transform_1(%arg0: i32, %arg1: i32) -> (i32, i32) {
    %c0_i32 = arith.constant 0 : i32
    %c0_i32_0 = arith.constant 0 : i32
    %c0_i32_1 = arith.constant 0 : i32
    return %c0_i32, %c0_i32_0 : i32, i32
  }
  func.func @transform_2(%arg0: i32, %arg1: i32) -> (i32, i32) {
    %c0_i32 = arith.constant 0 : i32
    %c0_i32_0 = arith.constant 0 : i32
    %c0_i32_1 = arith.constant 0 : i32
    return %c0_i32, %c0_i32_0 : i32, i32
  }
  func.func @transform_3(%arg0: i32, %arg1: i32) -> (i32, i32) {
    %c0_i32 = arith.constant 0 : i32
    %c0_i32_0 = arith.constant 0 : i32
    %c0_i32_1 = arith.constant 0 : i32
    return %c0_i32, %c0_i32_0 : i32, i32
  }
  func.func @transform_4(%arg0: i32, %arg1: i32) -> (i32, i32) {
    %c0_i32 = arith.constant 0 : i32
    %c0_i32_0 = arith.constant 0 : i32
    %c0_i32_1 = arith.constant 0 : i32
    return %c0_i32, %c0_i32_0 : i32, i32
  }
  func.func @transform_5(%arg0: i32, %arg1: i32) -> (i32, i32, i32) {
    %c0_i32 = arith.constant 0 : i32
    %c0_i32_0 = arith.constant 0 : i32
    return %arg0, %c0_i32, %arg1 : i32, i32, i32
  }
  func.func @transform_6(%arg0: i32, %arg1: i32) -> (i32, i32, i32) {
    %c0_i32 = arith.constant 0 : i32
    %c0_i32_0 = arith.constant 0 : i32
    return %arg0, %c0_i32, %arg1 : i32, i32, i32
  }
}

</mosaic_0001>

<llo_original>
// kernel: spatial_attention_2d.1
$region0: #{spatial_attention_2d.1}
  #allocation0 [shape = 'u32[]', space=smem, size = 0x4, offset = 0x4, fixed_abs, tag = 'smem constant byte address 0x4 - core index']
  #allocation1 [shape = 'u32[144,128]{1,0:T(1,128)}', space=vmem, size = 0x12000, scoped, tag = 'internal scratch']
  #allocation2 [shape = 'f32[1,1]{1,0:T(1,128)S(1)}', space=vmem, size = 0x200, scoped, tag = 'scoped memory for spatial_attention_2d.1']
  %s0 = inlined_call_operand.vmem [shape: f32[2,4,256], index: 0, kind: input, shape index: {}]
  %s1 = inlined_call_operand.vmem [shape: f32[1024,4], index: 1, kind: input, shape index: {}]
  %s2 = inlined_call_operand.vmem [shape: f32[1024,1], index: 2, kind: input, shape index: {}]
  %s3 = inlined_call_operand.vmem [shape: f32[1,1024], index: 3, kind: input, shape index: {}]
  %s4 = inlined_call_operand.<no memory space> [shape: f32[1,1], index: 4, kind: input, shape index: {}]
  %s5 = inlined_call_operand.vmem [shape: f32[2,1024,256], index: 5, kind: output, shape index: {0}]
  %s6 = inlined_call_operand.vmem [shape: f32[2,1,256], index: 6, kind: output, shape index: {1}]
  %7 = xla_tuple %s5, %s6
  %s8 = sld [smem:[#allocation0]]
  $region61: #{spatial_attention_2d.1} parent=0
    _
  %s10 = ssub.s32 1, %s8
  %s11 = scalar_select 0, %s10, %s8
  %v12 = vstv %s4
  %13 = vst [vmem:[#allocation2] sm:$0x1] %v12
  loop: start=0, step=1, limit=4
  $region2: #{spatial_attention_2d.1} parent=0 // loop_pre_header
    _
  $region3: #{spatial_attention_2d.1} parent=0 // loop_header
    %s15 = sphi 0, %s19
    %p16 = scmp.ge.s32.totalorder %s15, 4
    %s22 = sphi 0, %s34
    %s23 = sphi 0, %s30
    %s24 = sphi 0, %s22
    %s25 = sphi 0, %s23
    %s26 = sphi 0, %s24
    %s27 = sphi 0, %s25
    %s39 = sphi 0, %s41
    %s42 = sphi 0, %s39
    %s43 = sphi 0, %s42
    %s59 = sphi 0, %s43
    %s63 = sphi 0, %s63
    %s65 = sphi 0, %s63
    %s66 = sphi 0, %s65
    %s80 = sphi 0, %s66
    %s84 = sphi 0, %s84
    %s86 = sphi 0, %s84
    %s87 = sphi 0, %s86
    %s101 = sphi 0, %s87
    %s105 = sphi 0, %s105
    %s107 = sphi 0, %s105
    %s108 = sphi 0, %s107
    %s122 = sphi 0, %s108
    %s126 = sphi 0, %s126
    %s128 = sphi 0, %s126
    %s129 = sphi 0, %s128
    %s143 = sphi 0, %s129
    %s151 = sphi 0, %s153
    %s154 = sphi 0, %s151
    %s155 = sphi 0, %s154
    %s171 = sphi 0, %s155
    %s179 = sphi 0, %s181
    %s182 = sphi 0, %s179
    %s183 = sphi 0, %s182
    %s199 = sphi 0, %s183
  $region4: #{spatial_attention_2d.1} parent=0 // loop_header_branch
    %18 = sbr.rel (%p16) target = $region8
  $region5: #{spatial_attention_2d.1} parent=0 // loop_body
    %s20 = ssub.s32 %s15, 1
    %s21 = ssub.s32 %s15, 2
    %s28 = sadd.s32 1, %s23
    %p29 = scmp.ge.s32.totalorder %s28, 1
    %s30 = scalar_select %p29, 0, %s28
    %s31 = sadd.s32 1, %s22
    %s32 = scalar_select %p29, %s31, %s22
    %p33 = scmp.ge.s32.totalorder %s32, 2
    %s34 = scalar_select %p33, 0, %s32
    %s35 = ssub.s32 %s22, %s34
    %s36 = ssub.s32 %s23, %s30
    %s37 = sor.u32 %s35, %s36
    %p38 = scmp.eq.s32.totalorder %s37, 0
    %s40 = sadd.s32 %s39, 1
    %s41 = scalar_select %p38, %s39, %s40
    %p44 = pneg %p38
    %p45 = scmp.eq.s32.totalorder %s15, 1
    %p46 = por %p44, %p45
    %p47 = scmp.ne.s32.totalorder %s39, %s42
    %p48 = scmp.eq.s32.totalorder %s15, 0
    %p49 = por %p47, %p48
    %p50 = scmp.ne.s32.totalorder %s39, %s42
    %p51 = scmp.eq.s32.totalorder %s20, 1
    %p52 = por %p50, %p51
    %p53 = scmp.ne.s32.totalorder %s42, %s43
    %p54 = scmp.eq.s32.totalorder %s20, 0
    %p55 = por %p53, %p54
    %p56 = scmp.ne.s32.totalorder %s42, %s43
    %p57 = scmp.eq.s32.totalorder %s21, 1
    %p58 = por %p56, %p57
    %p60 = scmp.ne.s32.totalorder %s43, %s59
    %p61 = scmp.eq.s32.totalorder %s21, 0
    %p62 = por %p60, %p61
    %s64 = sadd.s32 %s63, 1
    %p67 = scmp.eq.s32.totalorder %s15, 1
    %p68 = scmp.ne.s32.totalorder %s63, %s65
    %p69 = scmp.eq.s32.totalorder %s15, 0
    %p70 = por %p68, %p69
    %p71 = scmp.ne.s32.totalorder %s63, %s65
    %p72 = scmp.eq.s32.totalorder %s20, 1
    %p73 = por %p71, %p72
    %p74 = scmp.ne.s32.totalorder %s65, %s66
    %p75 = scmp.eq.s32.totalorder %s20, 0
    %p76 = por %p74, %p75
    %p77 = scmp.ne.s32.totalorder %s65, %s66
    %p78 = scmp.eq.s32.totalorder %s21, 1
    %p79 = por %p77, %p78
    %p81 = scmp.ne.s32.totalorder %s66, %s80
    %p82 = scmp.eq.s32.totalorder %s21, 0
    %p83 = por %p81, %p82
    %s85 = sadd.s32 %s84, 1
    %p88 = scmp.eq.s32.totalorder %s15, 1
    %p89 = scmp.ne.s32.totalorder %s84, %s86
    %p90 = scmp.eq.s32.totalorder %s15, 0
    %p91 = por %p89, %p90
    %p92 = scmp.ne.s32.totalorder %s84, %s86
    %p93 = scmp.eq.s32.totalorder %s20, 1
    %p94 = por %p92, %p93
    %p95 = scmp.ne.s32.totalorder %s86, %s87
    %p96 = scmp.eq.s32.totalorder %s20, 0
    %p97 = por %p95, %p96
    %p98 = scmp.ne.s32.totalorder %s86, %s87
    %p99 = scmp.eq.s32.totalorder %s21, 1
    %p100 = por %p98, %p99
    %p102 = scmp.ne.s32.totalorder %s87, %s101
    %p103 = scmp.eq.s32.totalorder %s21, 0
    %p104 = por %p102, %p103
    %s106 = sadd.s32 %s105, 1
    %p109 = scmp.eq.s32.totalorder %s15, 1
    %p110 = scmp.ne.s32.totalorder %s105, %s107
    %p111 = scmp.eq.s32.totalorder %s15, 0
    %p112 = por %p110, %p111
    %p113 = scmp.ne.s32.totalorder %s105, %s107
    %p114 = scmp.eq.s32.totalorder %s20, 1
    %p115 = por %p113, %p114
    %p116 = scmp.ne.s32.totalorder %s107, %s108
    %p117 = scmp.eq.s32.totalorder %s20, 0
    %p118 = por %p116, %p117
    %p119 = scmp.ne.s32.totalorder %s107, %s108
    %p120 = scmp.eq.s32.totalorder %s21, 1
    %p121 = por %p119, %p120
    %p123 = scmp.ne.s32.totalorder %s108, %s122
    %p124 = scmp.eq.s32.totalorder %s21, 0
    %p125 = por %p123, %p124
    %s127 = sadd.s32 %s126, 1
    %p130 = scmp.eq.s32.totalorder %s15, 1
    %p131 = scmp.ne.s32.totalorder %s126, %s128
    %p132 = scmp.eq.s32.totalorder %s15, 0
    %p133 = por %p131, %p132
    %p134 = scmp.ne.s32.totalorder %s126, %s128
    %p135 = scmp.eq.s32.totalorder %s20, 1
    %p136 = por %p134, %p135
    %p137 = scmp.ne.s32.totalorder %s128, %s129
    %p138 = scmp.eq.s32.totalorder %s20, 0
    %p139 = por %p137, %p138
    %p140 = scmp.ne.s32.totalorder %s128, %s129
    %p141 = scmp.eq.s32.totalorder %s21, 1
    %p142 = por %p140, %p141
    %p144 = scmp.ne.s32.totalorder %s129, %s143
    %p145 = scmp.eq.s32.totalorder %s21, 0
    %p146 = por %p144, %p145
    %s147 = ssub.s32 %s22, %s34
    %s148 = ssub.s32 %s23, %s30
    %s149 = sor.u32 %s147, %s148
    %p150 = scmp.eq.s32.totalorder %s149, 0
    %s152 = sadd.s32 %s151, 1
    %s153 = scalar_select %p150, %s151, %s152
    %p156 = pneg %p150
    %p157 = scmp.eq.s32.totalorder %s15, 1
    %p158 = por %p156, %p157
    %p159 = scmp.ne.s32.totalorder %s151, %s154
    %p160 = scmp.eq.s32.totalorder %s15, 0
    %p161 = por %p159, %p160
    %p162 = scmp.ne.s32.totalorder %s151, %s154
    %p163 = scmp.eq.s32.totalorder %s20, 1
    %p164 = por %p162, %p163
    %p165 = scmp.ne.s32.totalorder %s154, %s155
    %p166 = scmp.eq.s32.totalorder %s20, 0
    %p167 = por %p165, %p166
    %p168 = scmp.ne.s32.totalorder %s154, %s155
    %p169 = scmp.eq.s32.totalorder %s21, 1
    %p170 = por %p168, %p169
    %p172 = scmp.ne.s32.totalorder %s155, %s171
    %p173 = scmp.eq.s32.totalorder %s21, 0
    %p174 = por %p172, %p173
    %s175 = ssub.s32 %s22, %s34
    %s176 = ssub.s32 %s23, %s30
    %s177 = sor.u32 %s175, %s176
    %p178 = scmp.eq.s32.totalorder %s177, 0
    %s180 = sadd.s32 %s179, 1
    %s181 = scalar_select %p178, %s179, %s180
    %p184 = pneg %p178
    %p185 = scmp.eq.s32.totalorder %s15, 1
    %p186 = por %p184, %p185
    %p187 = scmp.ne.s32.totalorder %s179, %s182
    %p188 = scmp.eq.s32.totalorder %s15, 0
    %p189 = por %p187, %p188
    %p190 = scmp.ne.s32.totalorder %s179, %s182
    %p191 = scmp.eq.s32.totalorder %s20, 1
    %p192 = por %p190, %p191
    %p193 = scmp.ne.s32.totalorder %s182, %s183
    %p194 = scmp.eq.s32.totalorder %s20, 0
    %p195 = por %p193, %p194
    %p196 = scmp.ne.s32.totalorder %s182, %s183
    %p197 = scmp.eq.s32.totalorder %s21, 1
    %p198 = por %p196, %p197
    %p200 = scmp.ne.s32.totalorder %s183, %s199
    %p201 = scmp.eq.s32.totalorder %s21, 0
    %p202 = por %p200, %p201
    %p203 = scmp.le.s32.totalorder 1, %s15
    %p204 = scmp.lt.s32.totalorder %s15, 3
    %p205 = pnand %p203, %p204
    %p206 = pneg %p205
    // Predicated region
    $region9: #{spatial_attention_2d.1} parent=5 // pred_check
      _
    $region10: #{spatial_attention_2d.1} parent=5 // pred_check_branch
      %208 = sbr.rel (%p205) target = $region12
    $region11: #{spatial_attention_2d.1} parent=5 // pred_region
      %s209 = ssub.s32 %s15, 1
      // Predicated region
      $region13: #{spatial_attention_2d.1} parent=11 // pred_check
        %p210 = pneg %p76
      $region14: #{spatial_attention_2d.1} parent=11 // pred_check_branch
        %212 = sbr.rel (%p210) target = $region16
      $region15: #{spatial_attention_2d.1} parent=11 // pred_region
        _
      $region16: #{spatial_attention_2d.1} parent=11 // pred_fallthru
        _
      // Predicated region
      $region17: #{spatial_attention_2d.1} parent=11 // pred_check
        %p213 = pneg %p97
      $region18: #{spatial_attention_2d.1} parent=11 // pred_check_branch
        %215 = sbr.rel (%p213) target = $region20
      $region19: #{spatial_attention_2d.1} parent=11 // pred_region
        _
      $region20: #{spatial_attention_2d.1} parent=11 // pred_fallthru
        _
      // Predicated region
      $region21: #{spatial_attention_2d.1} parent=11 // pred_check
        %p216 = pneg %p118
      $region22: #{spatial_attention_2d.1} parent=11 // pred_check_branch
        %218 = sbr.rel (%p216) target = $region24
      $region23: #{spatial_attention_2d.1} parent=11 // pred_region
        _
      $region24: #{spatial_attention_2d.1} parent=11 // pred_fallthru
        _
      // Predicated region
      $region25: #{spatial_attention_2d.1} parent=11 // pred_check
        %p219 = pneg %p139
      $region26: #{spatial_attention_2d.1} parent=11 // pred_check_branch
        %221 = sbr.rel (%p219) target = $region28
      $region27: #{spatial_attention_2d.1} parent=11 // pred_region
        _
      $region28: #{spatial_attention_2d.1} parent=11 // pred_fallthru
        _
    $region12: #{spatial_attention_2d.1} parent=5 // pred_fallthru
      _
    %p222 = scmp.lt.s32.totalorder %s15, 2
    // Predicated region
    $region29: #{spatial_attention_2d.1} parent=5 // pred_check
      %p223 = pneg %p222
    $region30: #{spatial_attention_2d.1} parent=5 // pred_check_branch
      %225 = sbr.rel (%p223) target = $region32
    $region31: #{spatial_attention_2d.1} parent=5 // pred_region
      // Predicated region
      $region33: #{spatial_attention_2d.1} parent=31 // pred_check
        %p226 = pneg %p49
      $region34: #{spatial_attention_2d.1} parent=31 // pred_check_branch
        %228 = sbr.rel (%p226) target = $region36
      $region35: #{spatial_attention_2d.1} parent=31 // pred_region
        %s229 = smul.u32 2, %s23
        %p230 = scmp.lt.s32.totalorder %s22, 1
        %s231 = scalar_select %p230, %s22, 1
        %p232 = scmp.lt.s32.totalorder %s229, 1
        %s233 = scalar_select %p232, %s229, 1
        %s234 = smul.addr %s231, 2
        %s235 = sadd.s32 %s233, %s234
        %s236 = smul.addr %s235, 4
        %s237 = scalar_lea.vmem %s0, %s236
        %s238 = smul.u32 2, %s23
      $region36: #{spatial_attention_2d.1} parent=31 // pred_fallthru
        _
    $region32: #{spatial_attention_2d.1} parent=5 // pred_fallthru
      _
    %p239 = scmp.le.s32.totalorder 1, %s15
    %p240 = scmp.lt.s32.totalorder %s15, 3
    %p241 = pnand %p239, %p240
    %p242 = pneg %p241
    // Predicated region
    $region37: #{spatial_attention_2d.1} parent=5 // pred_check
      _
    $region38: #{spatial_attention_2d.1} parent=5 // pred_check_branch
      %244 = sbr.rel (%p241) target = $region40
    $region39: #{spatial_attention_2d.1} parent=5 // pred_region
      %s245 = ssub.s32 %s15, 1
      %s246 = smul.u32 2, %s25
      %p247 = scmp.lt.s32.totalorder %s24, 1
      %s248 = scalar_select %p247, %s24, 1
      %p249 = scmp.lt.s32.totalorder %s246, 1
      %s250 = scalar_select %p249, %s246, 1
      %s251 = smul.addr %s248, 2
      %s252 = sadd.s32 %s250, %s251
      %s253 = smul.addr %s252, 4
      %s254 = scalar_lea.vmem %s0, %s253
      %p255 = pneg %p55
      %p256 = pneg %p52
      %p257 = pneg %p76
      %p258 = pneg %p73
      %p259 = pneg %p97
      %p260 = pneg %p94
      %p261 = pneg %p118
      %p262 = pneg %p115
      %p263 = pneg %p139
      %p264 = pneg %p136
      %p265 = pneg %p167
      %p266 = pneg %p164
      %s267 = smul.u32 2, %s25
      %p268 = scmp.lt.s32.totalorder %s24, 1
      %s269 = scalar_select %p268, %s24, 1
      %p270 = scmp.lt.s32.totalorder %s267, 1
      %s271 = scalar_select %p270, %s267, 1
      %s272 = smul.addr %s269, 256
      %s273 = sadd.s32 %s271, %s272
      %s274 = smul.addr %s273, 8
      %s275 = scalar_lea.vmem %s5, %s274
      %p276 = pneg %p195
      %p277 = pneg %p192
      %s278 = smul.u32 2, %s25
      %p279 = scmp.lt.s32.totalorder %s24, 1
      %s280 = scalar_select %p279, %s24, 1
      %p281 = scmp.lt.s32.totalorder %s278, 1
      %s282 = scalar_select %p281, %s278, 1
      %s283 = smul.addr %s280, 2
      %s284 = sadd.s32 %s282, %s283
      %s285 = scalar_lea.vmem %s6, %s284
      %s286 = smul.u32 2, %s25
      %p287 = scmp.lt.s32.totalorder %s24, 1
      %s288 = scalar_select %p287, %s24, 1
      %p289 = scmp.lt.s32.totalorder %s286, 1
      %s290 = scalar_select %p289, %s286, 1
      %s291 = smul.addr %s288, 2
      %s292 = sadd.s32 %s290, %s291
      %s293 = smul.addr %s292, 4
      %s294 = scalar_lea.vmem %s0, %s293
      %s295 = smul.u32 2, %s25
      %s296 = smul.u32 2, %s25
      %p297 = scmp.lt.s32.totalorder %s24, 1
      %s298 = scalar_select %p297, %s24, 1
      %p299 = scmp.lt.s32.totalorder %s296, 1
      %s300 = scalar_select %p299, %s296, 1
      %s301 = smul.addr %s298, 256
      %s302 = sadd.s32 %s300, %s301
      %s303 = smul.addr %s302, 8
      %s304 = scalar_lea.vmem %s5, %s303
      %s305 = smul.u32 2, %s25
      %s306 = smul.u32 2, %s25
      %p307 = scmp.lt.s32.totalorder %s24, 1
      %s308 = scalar_select %p307, %s24, 1
      %p309 = scmp.lt.s32.totalorder %s306, 1
      %s310 = scalar_select %p309, %s306, 1
      %s311 = smul.addr %s308, 2
      %s312 = sadd.s32 %s310, %s311
      %s313 = scalar_lea.vmem %s6, %s312
      %s314 = smul.u32 2, %s25
      %v315 = vld [vmem:[%s294] sm:$0xff]
      %v316 = vld [vmem:[%s1] sm:$0xff]
      %v317 = vld [vmem:[%s1 + $0x8] sm:$0xff]
      %v318 = vld [vmem:[%s1 + $0x10] sm:$0xff]
      %v319 = vld [vmem:[%s1 + $0x18] sm:$0xff]
      %v320 = vld [vmem:[%s1 + $0x20] sm:$0xff]
      %v321 = vld [vmem:[%s1 + $0x28] sm:$0xff]
      %v322 = vld [vmem:[%s1 + $0x30] sm:$0xff]
      %v323 = vld [vmem:[%s1 + $0x38] sm:$0xff]
      %v324 = vld [vmem:[%s1 + $0x40] sm:$0xff]
      %v325 = vld [vmem:[%s1 + $0x48] sm:$0xff]
      %v326 = vld [vmem:[%s1 + $0x50] sm:$0xff]
      %v327 = vld [vmem:[%s1 + $0x58] sm:$0xff]
      %v328 = vld [vmem:[%s1 + $0x60] sm:$0xff]
      %v329 = vld [vmem:[%s1 + $0x68] sm:$0xff]
      %v330 = vld [vmem:[%s1 + $0x70] sm:$0xff]
      %v331 = vld [vmem:[%s1 + $0x78] sm:$0xff]
      %v332 = vld [vmem:[%s1 + $0x80] sm:$0xff]
      %v333 = vld [vmem:[%s1 + $0x88] sm:$0xff]
      %v334 = vld [vmem:[%s1 + $0x90] sm:$0xff]
      %v335 = vld [vmem:[%s1 + $0x98] sm:$0xff]
      %v336 = vld [vmem:[%s1 + $0xa0] sm:$0xff]
      %v337 = vld [vmem:[%s1 + $0xa8] sm:$0xff]
      %v338 = vld [vmem:[%s1 + $0xb0] sm:$0xff]
      %v339 = vld [vmem:[%s1 + $0xb8] sm:$0xff]
      %v340 = vld [vmem:[%s1 + $0xc0] sm:$0xff]
      %v341 = vld [vmem:[%s1 + $0xc8] sm:$0xff]
      %v342 = vld [vmem:[%s1 + $0xd0] sm:$0xff]
      %v343 = vld [vmem:[%s1 + $0xd8] sm:$0xff]
      %v344 = vld [vmem:[%s1 + $0xe0] sm:$0xff]
      %v345 = vld [vmem:[%s1 + $0xe8] sm:$0xff]
      %v346 = vld [vmem:[%s1 + $0xf0] sm:$0xff]
      %v347 = vld [vmem:[%s1 + $0xf8] sm:$0xff]
      %v348 = vld [vmem:[%s1 + $0x100] sm:$0xff]
      %v349 = vld [vmem:[%s1 + $0x108] sm:$0xff]
      %v350 = vld [vmem:[%s1 + $0x110] sm:$0xff]
      %v351 = vld [vmem:[%s1 + $0x118] sm:$0xff]
      %v352 = vld [vmem:[%s1 + $0x120] sm:$0xff]
      %v353 = vld [vmem:[%s1 + $0x128] sm:$0xff]
      %v354 = vld [vmem:[%s1 + $0x130] sm:$0xff]
      %v355 = vld [vmem:[%s1 + $0x138] sm:$0xff]
      %v356 = vld [vmem:[%s1 + $0x140] sm:$0xff]
      %v357 = vld [vmem:[%s1 + $0x148] sm:$0xff]
      %v358 = vld [vmem:[%s1 + $0x150] sm:$0xff]
      %v359 = vld [vmem:[%s1 + $0x158] sm:$0xff]
      %v360 = vld [vmem:[%s1 + $0x160] sm:$0xff]
      %v361 = vld [vmem:[%s1 + $0x168] sm:$0xff]
      %v362 = vld [vmem:[%s1 + $0x170] sm:$0xff]
      %v363 = vld [vmem:[%s1 + $0x178] sm:$0xff]
      %v364 = vld [vmem:[%s1 + $0x180] sm:$0xff]
      %v365 = vld [vmem:[%s1 + $0x188] sm:$0xff]
      %v366 = vld [vmem:[%s1 + $0x190] sm:$0xff]
      %v367 = vld [vmem:[%s1 + $0x198] sm:$0xff]
      %v368 = vld [vmem:[%s1 + $0x1a0] sm:$0xff]
      %v369 = vld [vmem:[%s1 + $0x1a8] sm:$0xff]
      %v370 = vld [vmem:[%s1 + $0x1b0] sm:$0xff]
      %v371 = vld [vmem:[%s1 + $0x1b8] sm:$0xff]
      %v372 = vld [vmem:[%s1 + $0x1c0] sm:$0xff]
      %v373 = vld [vmem:[%s1 + $0x1c8] sm:$0xff]
      %v374 = vld [vmem:[%s1 + $0x1d0] sm:$0xff]
      %v375 = vld [vmem:[%s1 + $0x1d8] sm:$0xff]
      %v376 = vld [vmem:[%s1 + $0x1e0] sm:$0xff]
      %v377 = vld [vmem:[%s1 + $0x1e8] sm:$0xff]
      %v378 = vld [vmem:[%s1 + $0x1f0] sm:$0xff]
      %v379 = vld [vmem:[%s1 + $0x1f8] sm:$0xff]
      %v380 = vld [vmem:[%s1 + $0x200] sm:$0xff]
      %v381 = vld [vmem:[%s1 + $0x208] sm:$0xff]
      %v382 = vld [vmem:[%s1 + $0x210] sm:$0xff]
      %v383 = vld [vmem:[%s1 + $0x218] sm:$0xff]
      %v384 = vld [vmem:[%s1 + $0x220] sm:$0xff]
      %v385 = vld [vmem:[%s1 + $0x228] sm:$0xff]
      %v386 = vld [vmem:[%s1 + $0x230] sm:$0xff]
      %v387 = vld [vmem:[%s1 + $0x238] sm:$0xff]
      %v388 = vld [vmem:[%s1 + $0x240] sm:$0xff]
      %v389 = vld [vmem:[%s1 + $0x248] sm:$0xff]
      %v390 = vld [vmem:[%s1 + $0x250] sm:$0xff]
      %v391 = vld [vmem:[%s1 + $0x258] sm:$0xff]
      %v392 = vld [vmem:[%s1 + $0x260] sm:$0xff]
      %v393 = vld [vmem:[%s1 + $0x268] sm:$0xff]
      %v394 = vld [vmem:[%s1 + $0x270] sm:$0xff]
      %v395 = vld [vmem:[%s1 + $0x278] sm:$0xff]
      %v396 = vld [vmem:[%s1 + $0x280] sm:$0xff]
      %v397 = vld [vmem:[%s1 + $0x288] sm:$0xff]
      %v398 = vld [vmem:[%s1 + $0x290] sm:$0xff]
      %v399 = vld [vmem:[%s1 + $0x298] sm:$0xff]
      %v400 = vld [vmem:[%s1 + $0x2a0] sm:$0xff]
      %v401 = vld [vmem:[%s1 + $0x2a8] sm:$0xff]
      %v402 = vld [vmem:[%s1 + $0x2b0] sm:$0xff]
      %v403 = vld [vmem:[%s1 + $0x2b8] sm:$0xff]
      %v404 = vld [vmem:[%s1 + $0x2c0] sm:$0xff]
      %v405 = vld [vmem:[%s1 + $0x2c8] sm:$0xff]
      %v406 = vld [vmem:[%s1 + $0x2d0] sm:$0xff]
      %v407 = vld [vmem:[%s1 + $0x2d8] sm:$0xff]
      %v408 = vld [vmem:[%s1 + $0x2e0] sm:$0xff]
      %v409 = vld [vmem:[%s1 + $0x2e8] sm:$0xff]
      %v410 = vld [vmem:[%s1 + $0x2f0] sm:$0xff]
      %v411 = vld [vmem:[%s1 + $0x2f8] sm:$0xff]
      %v412 = vld [vmem:[%s1 + $0x300] sm:$0xff]
      %v413 = vld [vmem:[%s1 + $0x308] sm:$0xff]
      %v414 = vld [vmem:[%s1 + $0x310] sm:$0xff]
      %v415 = vld [vmem:[%s1 + $0x318] sm:$0xff]
      %v416 = vld [vmem:[%s1 + $0x320] sm:$0xff]
      %v417 = vld [vmem:[%s1 + $0x328] sm:$0xff]
      %v418 = vld [vmem:[%s1 + $0x330] sm:$0xff]
      %v419 = vld [vmem:[%s1 + $0x338] sm:$0xff]
      %v420 = vld [vmem:[%s1 + $0x340] sm:$0xff]
      %v421 = vld [vmem:[%s1 + $0x348] sm:$0xff]
      %v422 = vld [vmem:[%s1 + $0x350] sm:$0xff]
      %v423 = vld [vmem:[%s1 + $0x358] sm:$0xff]
      %v424 = vld [vmem:[%s1 + $0x360] sm:$0xff]
      %v425 = vld [vmem:[%s1 + $0x368] sm:$0xff]
      %v426 = vld [vmem:[%s1 + $0x370] sm:$0xff]
      %v427 = vld [vmem:[%s1 + $0x378] sm:$0xff]
      %v428 = vld [vmem:[%s1 + $0x380] sm:$0xff]
      %v429 = vld [vmem:[%s1 + $0x388] sm:$0xff]
      %v430 = vld [vmem:[%s1 + $0x390] sm:$0xff]
      %v431 = vld [vmem:[%s1 + $0x398] sm:$0xff]
      %v432 = vld [vmem:[%s1 + $0x3a0] sm:$0xff]
      %v433 = vld [vmem:[%s1 + $0x3a8] sm:$0xff]
      %v434 = vld [vmem:[%s1 + $0x3b0] sm:$0xff]
      %v435 = vld [vmem:[%s1 + $0x3b8] sm:$0xff]
      %v436 = vld [vmem:[%s1 + $0x3c0] sm:$0xff]
      %v437 = vld [vmem:[%s1 + $0x3c8] sm:$0xff]
      %v438 = vld [vmem:[%s1 + $0x3d0] sm:$0xff]
      %v439 = vld [vmem:[%s1 + $0x3d8] sm:$0xff]
      %v440 = vld [vmem:[%s1 + $0x3e0] sm:$0xff]
      %v441 = vld [vmem:[%s1 + $0x3e8] sm:$0xff]
      %v442 = vld [vmem:[%s1 + $0x3f0] sm:$0xff]
      %v443 = vld [vmem:[%s1 + $0x3f8] sm:$0xff]
      %v444 = vld [vmem:[%s2] sm:$0xff]
      %v445 = vld [vmem:[%s2 + $0x8] sm:$0xff]
      %v446 = vld [vmem:[%s2 + $0x10] sm:$0xff]
      %v447 = vld [vmem:[%s2 + $0x18] sm:$0xff]
      %v448 = vld [vmem:[%s2 + $0x20] sm:$0xff]
      %v449 = vld [vmem:[%s2 + $0x28] sm:$0xff]
      %v450 = vld [vmem:[%s2 + $0x30] sm:$0xff]
      %v451 = vld [vmem:[%s2 + $0x38] sm:$0xff]
      %v452 = vld [vmem:[%s2 + $0x40] sm:$0xff]
      %v453 = vld [vmem:[%s2 + $0x48] sm:$0xff]
      %v454 = vld [vmem:[%s2 + $0x50] sm:$0xff]
      %v455 = vld [vmem:[%s2 + $0x58] sm:$0xff]
      %v456 = vld [vmem:[%s2 + $0x60] sm:$0xff]
      %v457 = vld [vmem:[%s2 + $0x68] sm:$0xff]
      %v458 = vld [vmem:[%s2 + $0x70] sm:$0xff]
      %v459 = vld [vmem:[%s2 + $0x78] sm:$0xff]
      %v460 = vld [vmem:[%s2 + $0x80] sm:$0xff]
      %v461 = vld [vmem:[%s2 + $0x88] sm:$0xff]
      %v462 = vld [vmem:[%s2 + $0x90] sm:$0xff]
      %v463 = vld [vmem:[%s2 + $0x98] sm:$0xff]
      %v464 = vld [vmem:[%s2 + $0xa0] sm:$0xff]
      %v465 = vld [vmem:[%s2 + $0xa8] sm:$0xff]
      %v466 = vld [vmem:[%s2 + $0xb0] sm:$0xff]
      %v467 = vld [vmem:[%s2 + $0xb8] sm:$0xff]
      %v468 = vld [vmem:[%s2 + $0xc0] sm:$0xff]
      %v469 = vld [vmem:[%s2 + $0xc8] sm:$0xff]
      %v470 = vld [vmem:[%s2 + $0xd0] sm:$0xff]
      %v471 = vld [vmem:[%s2 + $0xd8] sm:$0xff]
      %v472 = vld [vmem:[%s2 + $0xe0] sm:$0xff]
      %v473 = vld [vmem:[%s2 + $0xe8] sm:$0xff]
      %v474 = vld [vmem:[%s2 + $0xf0] sm:$0xff]
      %v475 = vld [vmem:[%s2 + $0xf8] sm:$0xff]
      %v476 = vld [vmem:[%s2 + $0x100] sm:$0xff]
      %v477 = vld [vmem:[%s2 + $0x108] sm:$0xff]
      %v478 = vld [vmem:[%s2 + $0x110] sm:$0xff]
      %v479 = vld [vmem:[%s2 + $0x118] sm:$0xff]
      %v480 = vld [vmem:[%s2 + $0x120] sm:$0xff]
      %v481 = vld [vmem:[%s2 + $0x128] sm:$0xff]
      %v482 = vld [vmem:[%s2 + $0x130] sm:$0xff]
      %v483 = vld [vmem:[%s2 + $0x138] sm:$0xff]
      %v484 = vld [vmem:[%s2 + $0x140] sm:$0xff]
      %v485 = vld [vmem:[%s2 + $0x148] sm:$0xff]
      %v486 = vld [vmem:[%s2 + $0x150] sm:$0xff]
      %v487 = vld [vmem:[%s2 + $0x158] sm:$0xff]
      %v488 = vld [vmem:[%s2 + $0x160] sm:$0xff]
      %v489 = vld [vmem:[%s2 + $0x168] sm:$0xff]
      %v490 = vld [vmem:[%s2 + $0x170] sm:$0xff]
      %v491 = vld [vmem:[%s2 + $0x178] sm:$0xff]
      %v492 = vld [vmem:[%s2 + $0x180] sm:$0xff]
      %v493 = vld [vmem:[%s2 + $0x188] sm:$0xff]
      %v494 = vld [vmem:[%s2 + $0x190] sm:$0xff]
      %v495 = vld [vmem:[%s2 + $0x198] sm:$0xff]
      %v496 = vld [vmem:[%s2 + $0x1a0] sm:$0xff]
      %v497 = vld [vmem:[%s2 + $0x1a8] sm:$0xff]
      %v498 = vld [vmem:[%s2 + $0x1b0] sm:$0xff]
      %v499 = vld [vmem:[%s2 + $0x1b8] sm:$0xff]
      %v500 = vld [vmem:[%s2 + $0x1c0] sm:$0xff]
      %v501 = vld [vmem:[%s2 + $0x1c8] sm:$0xff]
      %v502 = vld [vmem:[%s2 + $0x1d0] sm:$0xff]
      %v503 = vld [vmem:[%s2 + $0x1d8] sm:$0xff]
      %v504 = vld [vmem:[%s2 + $0x1e0] sm:$0xff]
      %v505 = vld [vmem:[%s2 + $0x1e8] sm:$0xff]
      %v506 = vld [vmem:[%s2 + $0x1f0] sm:$0xff]
      %v507 = vld [vmem:[%s2 + $0x1f8] sm:$0xff]
      %v508 = vld [vmem:[%s2 + $0x200] sm:$0xff]
      %v509 = vld [vmem:[%s2 + $0x208] sm:$0xff]
      %v510 = vld [vmem:[%s2 + $0x210] sm:$0xff]
      %v511 = vld [vmem:[%s2 + $0x218] sm:$0xff]
      %v512 = vld [vmem:[%s2 + $0x220] sm:$0xff]
      %v513 = vld [vmem:[%s2 + $0x228] sm:$0xff]
      %v514 = vld [vmem:[%s2 + $0x230] sm:$0xff]
      %v515 = vld [vmem:[%s2 + $0x238] sm:$0xff]
      %v516 = vld [vmem:[%s2 + $0x240] sm:$0xff]
      %v517 = vld [vmem:[%s2 + $0x248] sm:$0xff]
      %v518 = vld [vmem:[%s2 + $0x250] sm:$0xff]
      %v519 = vld [vmem:[%s2 + $0x258] sm:$0xff]
      %v520 = vld [vmem:[%s2 + $0x260] sm:$0xff]
      %v521 = vld [vmem:[%s2 + $0x268] sm:$0xff]
      %v522 = vld [vmem:[%s2 + $0x270] sm:$0xff]
      %v523 = vld [vmem:[%s2 + $0x278] sm:$0xff]
      %v524 = vld [vmem:[%s2 + $0x280] sm:$0xff]
      %v525 = vld [vmem:[%s2 + $0x288] sm:$0xff]
      %v526 = vld [vmem:[%s2 + $0x290] sm:$0xff]
      %v527 = vld [vmem:[%s2 + $0x298] sm:$0xff]
      %v528 = vld [vmem:[%s2 + $0x2a0] sm:$0xff]
      %v529 = vld [vmem:[%s2 + $0x2a8] sm:$0xff]
      %v530 = vld [vmem:[%s2 + $0x2b0] sm:$0xff]
      %v531 = vld [vmem:[%s2 + $0x2b8] sm:$0xff]
      %v532 = vld [vmem:[%s2 + $0x2c0] sm:$0xff]
      %v533 = vld [vmem:[%s2 + $0x2c8] sm:$0xff]
      %v534 = vld [vmem:[%s2 + $0x2d0] sm:$0xff]
      %v535 = vld [vmem:[%s2 + $0x2d8] sm:$0xff]
      %v536 = vld [vmem:[%s2 + $0x2e0] sm:$0xff]
      %v537 = vld [vmem:[%s2 + $0x2e8] sm:$0xff]
      %v538 = vld [vmem:[%s2 + $0x2f0] sm:$0xff]
      %v539 = vld [vmem:[%s2 + $0x2f8] sm:$0xff]
      %v540 = vld [vmem:[%s2 + $0x300] sm:$0xff]
      %v541 = vld [vmem:[%s2 + $0x308] sm:$0xff]
      %v542 = vld [vmem:[%s2 + $0x310] sm:$0xff]
      %v543 = vld [vmem:[%s2 + $0x318] sm:$0xff]
      %v544 = vld [vmem:[%s2 + $0x320] sm:$0xff]
      %v545 = vld [vmem:[%s2 + $0x328] sm:$0xff]
      %v546 = vld [vmem:[%s2 + $0x330] sm:$0xff]
      %v547 = vld [vmem:[%s2 + $0x338] sm:$0xff]
      %v548 = vld [vmem:[%s2 + $0x340] sm:$0xff]
      %v549 = vld [vmem:[%s2 + $0x348] sm:$0xff]
      %v550 = vld [vmem:[%s2 + $0x350] sm:$0xff]
      %v551 = vld [vmem:[%s2 + $0x358] sm:$0xff]
      %v552 = vld [vmem:[%s2 + $0x360] sm:$0xff]
      %v553 = vld [vmem:[%s2 + $0x368] sm:$0xff]
      %v554 = vld [vmem:[%s2 + $0x370] sm:$0xff]
      %v555 = vld [vmem:[%s2 + $0x378] sm:$0xff]
      %v556 = vld [vmem:[%s2 + $0x380] sm:$0xff]
      %v557 = vld [vmem:[%s2 + $0x388] sm:$0xff]
      %v558 = vld [vmem:[%s2 + $0x390] sm:$0xff]
      %v559 = vld [vmem:[%s2 + $0x398] sm:$0xff]
      %v560 = vld [vmem:[%s2 + $0x3a0] sm:$0xff]
      %v561 = vld [vmem:[%s2 + $0x3a8] sm:$0xff]
      %v562 = vld [vmem:[%s2 + $0x3b0] sm:$0xff]
      %v563 = vld [vmem:[%s2 + $0x3b8] sm:$0xff]
      %v564 = vld [vmem:[%s2 + $0x3c0] sm:$0xff]
      %v565 = vld [vmem:[%s2 + $0x3c8] sm:$0xff]
      %v566 = vld [vmem:[%s2 + $0x3d0] sm:$0xff]
      %v567 = vld [vmem:[%s2 + $0x3d8] sm:$0xff]
      %v568 = vld [vmem:[%s2 + $0x3e0] sm:$0xff]
      %v569 = vld [vmem:[%s2 + $0x3e8] sm:$0xff]
      %v570 = vld [vmem:[%s2 + $0x3f0] sm:$0xff]
      %v571 = vld [vmem:[%s2 + $0x3f8] sm:$0xff]
      %573 = vset.pattern.permute.xlu0 0
      %574 = vperm.xlu0 %573, %v444
      %v575 = vpop.permute.xlu0 %574
      %578 = vset.pattern.permute.xlu0 0
      %579 = vperm.xlu0 %578, %v445
      %v580 = vpop.permute.xlu0 %579
      %583 = vset.pattern.permute.xlu0 0
      %584 = vperm.xlu0 %583, %v446
      %v585 = vpop.permute.xlu0 %584
      %588 = vset.pattern.permute.xlu0 0
      %589 = vperm.xlu0 %588, %v447
      %v590 = vpop.permute.xlu0 %589
      %593 = vset.pattern.permute.xlu0 0
      %594 = vperm.xlu0 %593, %v448
      %v595 = vpop.permute.xlu0 %594
      %598 = vset.pattern.permute.xlu0 0
      %599 = vperm.xlu0 %598, %v449
      %v600 = vpop.permute.xlu0 %599
      %603 = vset.pattern.permute.xlu0 0
      %604 = vperm.xlu0 %603, %v450
      %v605 = vpop.permute.xlu0 %604
      %608 = vset.pattern.permute.xlu0 0
      %609 = vperm.xlu0 %608, %v451
      %v610 = vpop.permute.xlu0 %609
      %613 = vset.pattern.permute.xlu0 0
      %614 = vperm.xlu0 %613, %v452
      %v615 = vpop.permute.xlu0 %614
      %618 = vset.pattern.permute.xlu0 0
      %619 = vperm.xlu0 %618, %v453
      %v620 = vpop.permute.xlu0 %619
      %623 = vset.pattern.permute.xlu0 0
      %624 = vperm.xlu0 %623, %v454
      %v625 = vpop.permute.xlu0 %624
      %628 = vset.pattern.permute.xlu0 0
      %629 = vperm.xlu0 %628, %v455
      %v630 = vpop.permute.xlu0 %629
      %633 = vset.pattern.permute.xlu0 0
      %634 = vperm.xlu0 %633, %v456
      %v635 = vpop.permute.xlu0 %634
      %638 = vset.pattern.permute.xlu0 0
      %639 = vperm.xlu0 %638, %v457
      %v640 = vpop.permute.xlu0 %639
      %643 = vset.pattern.permute.xlu0 0
      %644 = vperm.xlu0 %643, %v458
      %v645 = vpop.permute.xlu0 %644
      %648 = vset.pattern.permute.xlu0 0
      %649 = vperm.xlu0 %648, %v459
      %v650 = vpop.permute.xlu0 %649
      %653 = vset.pattern.permute.xlu0 0
      %654 = vperm.xlu0 %653, %v460
      %v655 = vpop.permute.xlu0 %654
      %658 = vset.pattern.permute.xlu0 0
      %659 = vperm.xlu0 %658, %v461
      %v660 = vpop.permute.xlu0 %659
      %663 = vset.pattern.permute.xlu0 0
      %664 = vperm.xlu0 %663, %v462
      %v665 = vpop.permute.xlu0 %664
      %668 = vset.pattern.permute.xlu0 0
      %669 = vperm.xlu0 %668, %v463
      %v670 = vpop.permute.xlu0 %669
      %673 = vset.pattern.permute.xlu0 0
      %674 = vperm.xlu0 %673, %v464
      %v675 = vpop.permute.xlu0 %674
      %678 = vset.pattern.permute.xlu0 0
      %679 = vperm.xlu0 %678, %v465
      %v680 = vpop.permute.xlu0 %679
      %683 = vset.pattern.permute.xlu0 0
      %684 = vperm.xlu0 %683, %v466
      %v685 = vpop.permute.xlu0 %684
      %688 = vset.pattern.permute.xlu0 0
      %689 = vperm.xlu0 %688, %v467
      %v690 = vpop.permute.xlu0 %689
      %693 = vset.pattern.permute.xlu0 0
      %694 = vperm.xlu0 %693, %v468
      %v695 = vpop.permute.xlu0 %694
      %698 = vset.pattern.permute.xlu0 0
      %699 = vperm.xlu0 %698, %v469
      %v700 = vpop.permute.xlu0 %699
      %703 = vset.pattern.permute.xlu0 0
      %704 = vperm.xlu0 %703, %v470
      %v705 = vpop.permute.xlu0 %704
      %708 = vset.pattern.permute.xlu0 0
      %709 = vperm.xlu0 %708, %v471
      %v710 = vpop.permute.xlu0 %709
      %713 = vset.pattern.permute.xlu0 0
      %714 = vperm.xlu0 %713, %v472
      %v715 = vpop.permute.xlu0 %714
      %718 = vset.pattern.permute.xlu0 0
      %719 = vperm.xlu0 %718, %v473
      %v720 = vpop.permute.xlu0 %719
      %723 = vset.pattern.permute.xlu0 0
      %724 = vperm.xlu0 %723, %v474
      %v725 = vpop.permute.xlu0 %724
      %728 = vset.pattern.permute.xlu0 0
      %729 = vperm.xlu0 %728, %v475
      %v730 = vpop.permute.xlu0 %729
      %733 = vset.pattern.permute.xlu0 0
      %734 = vperm.xlu0 %733, %v476
      %v735 = vpop.permute.xlu0 %734
      %738 = vset.pattern.permute.xlu0 0
      %739 = vperm.xlu0 %738, %v477
      %v740 = vpop.permute.xlu0 %739
      %743 = vset.pattern.permute.xlu0 0
      %744 = vperm.xlu0 %743, %v478
      %v745 = vpop.permute.xlu0 %744
      %748 = vset.pattern.permute.xlu0 0
      %749 = vperm.xlu0 %748, %v479
      %v750 = vpop.permute.xlu0 %749
      %753 = vset.pattern.permute.xlu0 0
      %754 = vperm.xlu0 %753, %v480
      %v755 = vpop.permute.xlu0 %754
      %758 = vset.pattern.permute.xlu0 0
      %759 = vperm.xlu0 %758, %v481
      %v760 = vpop.permute.xlu0 %759
      %763 = vset.pattern.permute.xlu0 0
      %764 = vperm.xlu0 %763, %v482
      %v765 = vpop.permute.xlu0 %764
      %768 = vset.pattern.permute.xlu0 0
      %769 = vperm.xlu0 %768, %v483
      %v770 = vpop.permute.xlu0 %769
      %773 = vset.pattern.permute.xlu0 0
      %774 = vperm.xlu0 %773, %v484
      %v775 = vpop.permute.xlu0 %774
      %778 = vset.pattern.permute.xlu0 0
      %779 = vperm.xlu0 %778, %v485
      %v780 = vpop.permute.xlu0 %779
      %783 = vset.pattern.permute.xlu0 0
      %784 = vperm.xlu0 %783, %v486
      %v785 = vpop.permute.xlu0 %784
      %788 = vset.pattern.permute.xlu0 0
      %789 = vperm.xlu0 %788, %v487
      %v790 = vpop.permute.xlu0 %789
      %793 = vset.pattern.permute.xlu0 0
      %794 = vperm.xlu0 %793, %v488
      %v795 = vpop.permute.xlu0 %794
      %798 = vset.pattern.permute.xlu0 0
      %799 = vperm.xlu0 %798, %v489
      %v800 = vpop.permute.xlu0 %799
      %803 = vset.pattern.permute.xlu0 0
      %804 = vperm.xlu0 %803, %v490
      %v805 = vpop.permute.xlu0 %804
      %808 = vset.pattern.permute.xlu0 0
      %809 = vperm.xlu0 %808, %v491
      %v810 = vpop.permute.xlu0 %809
      %813 = vset.pattern.permute.xlu0 0
      %814 = vperm.xlu0 %813, %v492
      %v815 = vpop.permute.xlu0 %814
      %818 = vset.pattern.permute.xlu0 0
      %819 = vperm.xlu0 %818, %v493
      %v820 = vpop.permute.xlu0 %819
      %823 = vset.pattern.permute.xlu0 0
      %824 = vperm.xlu0 %823, %v494
      %v825 = vpop.permute.xlu0 %824
      %828 = vset.pattern.permute.xlu0 0
      %829 = vperm.xlu0 %828, %v495
      %v830 = vpop.permute.xlu0 %829
      %833 = vset.pattern.permute.xlu0 0
      %834 = vperm.xlu0 %833, %v496
      %v835 = vpop.permute.xlu0 %834
      %838 = vset.pattern.permute.xlu0 0
      %839 = vperm.xlu0 %838, %v497
      %v840 = vpop.permute.xlu0 %839
      %843 = vset.pattern.permute.xlu0 0
      %844 = vperm.xlu0 %843, %v498
      %v845 = vpop.permute.xlu0 %844
      %848 = vset.pattern.permute.xlu0 0
      %849 = vperm.xlu0 %848, %v499
      %v850 = vpop.permute.xlu0 %849
      %853 = vset.pattern.permute.xlu0 0
      %854 = vperm.xlu0 %853, %v500
      %v855 = vpop.permute.xlu0 %854
      %858 = vset.pattern.permute.xlu0 0
      %859 = vperm.xlu0 %858, %v501
      %v860 = vpop.permute.xlu0 %859
      %863 = vset.pattern.permute.xlu0 0
      %864 = vperm.xlu0 %863, %v502
      %v865 = vpop.permute.xlu0 %864
      %868 = vset.pattern.permute.xlu0 0
      %869 = vperm.xlu0 %868, %v503
      %v870 = vpop.permute.xlu0 %869
      %873 = vset.pattern.permute.xlu0 0
      %874 = vperm.xlu0 %873, %v504
      %v875 = vpop.permute.xlu0 %874
      %878 = vset.pattern.permute.xlu0 0
      %879 = vperm.xlu0 %878, %v505
      %v880 = vpop.permute.xlu0 %879
      %883 = vset.pattern.permute.xlu0 0
      %884 = vperm.xlu0 %883, %v506
      %v885 = vpop.permute.xlu0 %884
      %888 = vset.pattern.permute.xlu0 0
      %889 = vperm.xlu0 %888, %v507
      %v890 = vpop.permute.xlu0 %889
      %893 = vset.pattern.permute.xlu0 0
      %894 = vperm.xlu0 %893, %v508
      %v895 = vpop.permute.xlu0 %894
      %898 = vset.pattern.permute.xlu0 0
      %899 = vperm.xlu0 %898, %v509
      %v900 = vpop.permute.xlu0 %899
      %903 = vset.pattern.permute.xlu0 0
      %904 = vperm.xlu0 %903, %v510
      %v905 = vpop.permute.xlu0 %904
      %908 = vset.pattern.permute.xlu0 0
      %909 = vperm.xlu0 %908, %v511
      %v910 = vpop.permute.xlu0 %909
      %913 = vset.pattern.permute.xlu0 0
      %914 = vperm.xlu0 %913, %v512
      %v915 = vpop.permute.xlu0 %914
      %918 = vset.pattern.permute.xlu0 0
      %919 = vperm.xlu0 %918, %v513
      %v920 = vpop.permute.xlu0 %919
      %923 = vset.pattern.permute.xlu0 0
      %924 = vperm.xlu0 %923, %v514
      %v925 = vpop.permute.xlu0 %924
      %928 = vset.pattern.permute.xlu0 0
      %929 = vperm.xlu0 %928, %v515
      %v930 = vpop.permute.xlu0 %929
      %933 = vset.pattern.permute.xlu0 0
      %934 = vperm.xlu0 %933, %v516
      %v935 = vpop.permute.xlu0 %934
      %938 = vset.pattern.permute.xlu0 0
      %939 = vperm.xlu0 %938, %v517
      %v940 = vpop.permute.xlu0 %939
      %943 = vset.pattern.permute.xlu0 0
      %944 = vperm.xlu0 %943, %v518
      %v945 = vpop.permute.xlu0 %944
      %948 = vset.pattern.permute.xlu0 0
      %949 = vperm.xlu0 %948, %v519
      %v950 = vpop.permute.xlu0 %949
      %953 = vset.pattern.permute.xlu0 0
      %954 = vperm.xlu0 %953, %v520
      %v955 = vpop.permute.xlu0 %954
      %958 = vset.pattern.permute.xlu0 0
      %959 = vperm.xlu0 %958, %v521
      %v960 = vpop.permute.xlu0 %959
      %963 = vset.pattern.permute.xlu0 0
      %964 = vperm.xlu0 %963, %v522
      %v965 = vpop.permute.xlu0 %964
      %968 = vset.pattern.permute.xlu0 0
      %969 = vperm.xlu0 %968, %v523
      %v970 = vpop.permute.xlu0 %969
      %973 = vset.pattern.permute.xlu0 0
      %974 = vperm.xlu0 %973, %v524
      %v975 = vpop.permute.xlu0 %974
      %978 = vset.pattern.permute.xlu0 0
      %979 = vperm.xlu0 %978, %v525
      %v980 = vpop.permute.xlu0 %979
      %983 = vset.pattern.permute.xlu0 0
      %984 = vperm.xlu0 %983, %v526
      %v985 = vpop.permute.xlu0 %984
      %988 = vset.pattern.permute.xlu0 0
      %989 = vperm.xlu0 %988, %v527
      %v990 = vpop.permute.xlu0 %989
      %993 = vset.pattern.permute.xlu0 0
      %994 = vperm.xlu0 %993, %v528
      %v995 = vpop.permute.xlu0 %994
      %998 = vset.pattern.permute.xlu0 0
      %999 = vperm.xlu0 %998, %v529
      %v1000 = vpop.permute.xlu0 %999
      %1003 = vset.pattern.permute.xlu0 0
      %1004 = vperm.xlu0 %1003, %v530
      %v1005 = vpop.permute.xlu0 %1004
      %1008 = vset.pattern.permute.xlu0 0
      %1009 = vperm.xlu0 %1008, %v531
      %v1010 = vpop.permute.xlu0 %1009
      %1013 = vset.pattern.permute.xlu0 0
      %1014 = vperm.xlu0 %1013, %v532
      %v1015 = vpop.permute.xlu0 %1014
      %1018 = vset.pattern.permute.xlu0 0
      %1019 = vperm.xlu0 %1018, %v533
      %v1020 = vpop.permute.xlu0 %1019
      %1023 = vset.pattern.permute.xlu0 0
      %1024 = vperm.xlu0 %1023, %v534
      %v1025 = vpop.permute.xlu0 %1024
      %1028 = vset.pattern.permute.xlu0 0
      %1029 = vperm.xlu0 %1028, %v535
      %v1030 = vpop.permute.xlu0 %1029
      %1033 = vset.pattern.permute.xlu0 0
      %1034 = vperm.xlu0 %1033, %v536
      %v1035 = vpop.permute.xlu0 %1034
      %1038 = vset.pattern.permute.xlu0 0
      %1039 = vperm.xlu0 %1038, %v537
      %v1040 = vpop.permute.xlu0 %1039
      %1043 = vset.pattern.permute.xlu0 0
      %1044 = vperm.xlu0 %1043, %v538
      %v1045 = vpop.permute.xlu0 %1044
      %1048 = vset.pattern.permute.xlu0 0
      %1049 = vperm.xlu0 %1048, %v539
      %v1050 = vpop.permute.xlu0 %1049
      %1053 = vset.pattern.permute.xlu0 0
      %1054 = vperm.xlu0 %1053, %v540
      %v1055 = vpop.permute.xlu0 %1054
      %1058 = vset.pattern.permute.xlu0 0
      %1059 = vperm.xlu0 %1058, %v541
      %v1060 = vpop.permute.xlu0 %1059
      %1063 = vset.pattern.permute.xlu0 0
      %1064 = vperm.xlu0 %1063, %v542
      %v1065 = vpop.permute.xlu0 %1064
      %1068 = vset.pattern.permute.xlu0 0
      %1069 = vperm.xlu0 %1068, %v543
      %v1070 = vpop.permute.xlu0 %1069
      %1073 = vset.pattern.permute.xlu0 0
      %1074 = vperm.xlu0 %1073, %v544
      %v1075 = vpop.permute.xlu0 %1074
      %1078 = vset.pattern.permute.xlu0 0
      %1079 = vperm.xlu0 %1078, %v545
      %v1080 = vpop.permute.xlu0 %1079
      %1083 = vset.pattern.permute.xlu0 0
      %1084 = vperm.xlu0 %1083, %v546
      %v1085 = vpop.permute.xlu0 %1084
      %1088 = vset.pattern.permute.xlu0 0
      %1089 = vperm.xlu0 %1088, %v547
      %v1090 = vpop.permute.xlu0 %1089
      %1093 = vset.pattern.permute.xlu0 0
      %1094 = vperm.xlu0 %1093, %v548
      %v1095 = vpop.permute.xlu0 %1094
      %1098 = vset.pattern.permute.xlu0 0
      %1099 = vperm.xlu0 %1098, %v549
      %v1100 = vpop.permute.xlu0 %1099
      %1103 = vset.pattern.permute.xlu0 0
      %1104 = vperm.xlu0 %1103, %v550
      %v1105 = vpop.permute.xlu0 %1104
      %1108 = vset.pattern.permute.xlu0 0
      %1109 = vperm.xlu0 %1108, %v551
      %v1110 = vpop.permute.xlu0 %1109
      %1113 = vset.pattern.permute.xlu0 0
      %1114 = vperm.xlu0 %1113, %v552
      %v1115 = vpop.permute.xlu0 %1114
      %1118 = vset.pattern.permute.xlu0 0
      %1119 = vperm.xlu0 %1118, %v553
      %v1120 = vpop.permute.xlu0 %1119
      %1123 = vset.pattern.permute.xlu0 0
      %1124 = vperm.xlu0 %1123, %v554
      %v1125 = vpop.permute.xlu0 %1124
      %1128 = vset.pattern.permute.xlu0 0
      %1129 = vperm.xlu0 %1128, %v555
      %v1130 = vpop.permute.xlu0 %1129
      %1133 = vset.pattern.permute.xlu0 0
      %1134 = vperm.xlu0 %1133, %v556
      %v1135 = vpop.permute.xlu0 %1134
      %1138 = vset.pattern.permute.xlu0 0
      %1139 = vperm.xlu0 %1138, %v557
      %v1140 = vpop.permute.xlu0 %1139
      %1143 = vset.pattern.permute.xlu0 0
      %1144 = vperm.xlu0 %1143, %v558
      %v1145 = vpop.permute.xlu0 %1144
      %1148 = vset.pattern.permute.xlu0 0
      %1149 = vperm.xlu0 %1148, %v559
      %v1150 = vpop.permute.xlu0 %1149
      %1153 = vset.pattern.permute.xlu0 0
      %1154 = vperm.xlu0 %1153, %v560
      %v1155 = vpop.permute.xlu0 %1154
      %1158 = vset.pattern.permute.xlu0 0
      %1159 = vperm.xlu0 %1158, %v561
      %v1160 = vpop.permute.xlu0 %1159
      %1163 = vset.pattern.permute.xlu0 0
      %1164 = vperm.xlu0 %1163, %v562
      %v1165 = vpop.permute.xlu0 %1164
      %1168 = vset.pattern.permute.xlu0 0
      %1169 = vperm.xlu0 %1168, %v563
      %v1170 = vpop.permute.xlu0 %1169
      %1173 = vset.pattern.permute.xlu0 0
      %1174 = vperm.xlu0 %1173, %v564
      %v1175 = vpop.permute.xlu0 %1174
      %1178 = vset.pattern.permute.xlu0 0
      %1179 = vperm.xlu0 %1178, %v565
      %v1180 = vpop.permute.xlu0 %1179
      %1183 = vset.pattern.permute.xlu0 0
      %1184 = vperm.xlu0 %1183, %v566
      %v1185 = vpop.permute.xlu0 %1184
      %1188 = vset.pattern.permute.xlu0 0
      %1189 = vperm.xlu0 %1188, %v567
      %v1190 = vpop.permute.xlu0 %1189
      %1193 = vset.pattern.permute.xlu0 0
      %1194 = vperm.xlu0 %1193, %v568
      %v1195 = vpop.permute.xlu0 %1194
      %1198 = vset.pattern.permute.xlu0 0
      %1199 = vperm.xlu0 %1198, %v569
      %v1200 = vpop.permute.xlu0 %1199
      %1203 = vset.pattern.permute.xlu0 0
      %1204 = vperm.xlu0 %1203, %v570
      %v1205 = vpop.permute.xlu0 %1204
      %1208 = vset.pattern.permute.xlu0 0
      %1209 = vperm.xlu0 %1208, %v571
      %v1210 = vpop.permute.xlu0 %1209
      %v1213 = vcombine.high %v315, %v315
      %vm1214 = vcmask 31744
      %v1216 = vsel %vm1214, %v316, 0
      %v1219 = vsel %vm1214, %v317, 0
      %v1222 = vsel %vm1214, %v318, 0
      %v1225 = vsel %vm1214, %v319, 0
      %v1228 = vsel %vm1214, %v320, 0
      %v1231 = vsel %vm1214, %v321, 0
      %v1234 = vsel %vm1214, %v322, 0
      %v1237 = vsel %vm1214, %v323, 0
      %v1240 = vsel %vm1214, %v324, 0
      %v1243 = vsel %vm1214, %v325, 0
      %v1246 = vsel %vm1214, %v326, 0
      %v1249 = vsel %vm1214, %v327, 0
      %v1252 = vsel %vm1214, %v328, 0
      %v1255 = vsel %vm1214, %v329, 0
      %v1258 = vsel %vm1214, %v330, 0
      %v1261 = vsel %vm1214, %v331, 0
      %v1264 = vsel %vm1214, %v332, 0
      %v1267 = vsel %vm1214, %v333, 0
      %v1270 = vsel %vm1214, %v334, 0
      %v1273 = vsel %vm1214, %v335, 0
      %v1276 = vsel %vm1214, %v336, 0
      %v1279 = vsel %vm1214, %v337, 0
      %v1282 = vsel %vm1214, %v338, 0
      %v1285 = vsel %vm1214, %v339, 0
      %v1288 = vsel %vm1214, %v340, 0
      %v1291 = vsel %vm1214, %v341, 0
      %v1294 = vsel %vm1214, %v342, 0
      %v1297 = vsel %vm1214, %v343, 0
      %v1300 = vsel %vm1214, %v344, 0
      %v1303 = vsel %vm1214, %v345, 0
      %v1306 = vsel %vm1214, %v346, 0
      %v1309 = vsel %vm1214, %v347, 0
      %v1312 = vsel %vm1214, %v348, 0
      %v1315 = vsel %vm1214, %v349, 0
      %v1318 = vsel %vm1214, %v350, 0
      %v1321 = vsel %vm1214, %v351, 0
      %v1324 = vsel %vm1214, %v352, 0
      %v1327 = vsel %vm1214, %v353, 0
      %v1330 = vsel %vm1214, %v354, 0
      %v1333 = vsel %vm1214, %v355, 0
      %v1336 = vsel %vm1214, %v356, 0
      %v1339 = vsel %vm1214, %v357, 0
      %v1342 = vsel %vm1214, %v358, 0
      %v1345 = vsel %vm1214, %v359, 0
      %v1348 = vsel %vm1214, %v360, 0
      %v1351 = vsel %vm1214, %v361, 0
      %v1354 = vsel %vm1214, %v362, 0
      %v1357 = vsel %vm1214, %v363, 0
      %v1360 = vsel %vm1214, %v364, 0
      %v1363 = vsel %vm1214, %v365, 0
      %v1366 = vsel %vm1214, %v366, 0
      %v1369 = vsel %vm1214, %v367, 0
      %v1372 = vsel %vm1214, %v368, 0
      %v1375 = vsel %vm1214, %v369, 0
      %v1378 = vsel %vm1214, %v370, 0
      %v1381 = vsel %vm1214, %v371, 0
      %v1384 = vsel %vm1214, %v372, 0
      %v1387 = vsel %vm1214, %v373, 0
      %v1390 = vsel %vm1214, %v374, 0
      %v1393 = vsel %vm1214, %v375, 0
      %v1396 = vsel %vm1214, %v376, 0
      %v1399 = vsel %vm1214, %v377, 0
      %v1402 = vsel %vm1214, %v378, 0
      %v1405 = vsel %vm1214, %v379, 0
      %v1408 = vsel %vm1214, %v380, 0
      %v1411 = vsel %vm1214, %v381, 0
      %v1414 = vsel %vm1214, %v382, 0
      %v1417 = vsel %vm1214, %v383, 0
      %v1420 = vsel %vm1214, %v384, 0
      %v1423 = vsel %vm1214, %v385, 0
      %v1426 = vsel %vm1214, %v386, 0
      %v1429 = vsel %vm1214, %v387, 0
      %v1432 = vsel %vm1214, %v388, 0
      %v1435 = vsel %vm1214, %v389, 0
      %v1438 = vsel %vm1214, %v390, 0
      %v1441 = vsel %vm1214, %v391, 0
      %v1444 = vsel %vm1214, %v392, 0
      %v1447 = vsel %vm1214, %v393, 0
      %v1450 = vsel %vm1214, %v394, 0
      %v1453 = vsel %vm1214, %v395, 0
      %v1456 = vsel %vm1214, %v396, 0
      %v1459 = vsel %vm1214, %v397, 0
      %v1462 = vsel %vm1214, %v398, 0
      %v1465 = vsel %vm1214, %v399, 0
      %v1468 = vsel %vm1214, %v400, 0
      %v1471 = vsel %vm1214, %v401, 0
      %v1474 = vsel %vm1214, %v402, 0
      %v1477 = vsel %vm1214, %v403, 0
      %v1480 = vsel %vm1214, %v404, 0
      %v1483 = vsel %vm1214, %v405, 0
      %v1486 = vsel %vm1214, %v406, 0
      %v1489 = vsel %vm1214, %v407, 0
      %v1492 = vsel %vm1214, %v408, 0
      %v1495 = vsel %vm1214, %v409, 0
      %v1498 = vsel %vm1214, %v410, 0
      %v1501 = vsel %vm1214, %v411, 0
      %v1504 = vsel %vm1214, %v412, 0
      %v1507 = vsel %vm1214, %v413, 0
      %v1510 = vsel %vm1214, %v414, 0
      %v1513 = vsel %vm1214, %v415, 0
      %v1516 = vsel %vm1214, %v416, 0
      %v1519 = vsel %vm1214, %v417, 0
      %v1522 = vsel %vm1214, %v418, 0
      %v1525 = vsel %vm1214, %v419, 0
      %v1528 = vsel %vm1214, %v420, 0
      %v1531 = vsel %vm1214, %v421, 0
      %v1534 = vsel %vm1214, %v422, 0
      %v1537 = vsel %vm1214, %v423, 0
      %v1540 = vsel %vm1214, %v424, 0
      %v1543 = vsel %vm1214, %v425, 0
      %v1546 = vsel %vm1214, %v426, 0
      %v1549 = vsel %vm1214, %v427, 0
      %v1552 = vsel %vm1214, %v428, 0
      %v1555 = vsel %vm1214, %v429, 0
      %v1558 = vsel %vm1214, %v430, 0
      %v1561 = vsel %vm1214, %v431, 0
      %v1564 = vsel %vm1214, %v432, 0
      %v1567 = vsel %vm1214, %v433, 0
      %v1570 = vsel %vm1214, %v434, 0
      %v1573 = vsel %vm1214, %v435, 0
      %v1576 = vsel %vm1214, %v436, 0
      %v1579 = vsel %vm1214, %v437, 0
      %v1582 = vsel %vm1214, %v438, 0
      %v1585 = vsel %vm1214, %v439, 0
      %v1588 = vsel %vm1214, %v440, 0
      %v1591 = vsel %vm1214, %v441, 0
      %v1594 = vsel %vm1214, %v442, 0
      %v1597 = vsel %vm1214, %v443, 0
      %vm1599 = vcmask 1043456
      %v1600 = vsel %vm1599, %v315, 0
      %v1602 = vsel %vm1599, %v1213, 0
      %1604 = vmatprep.subr.mxu0 0.0
      %1605 = vmatpush1.msra.mxu0 0.0
      %1606 = vmatprep.subr.mxu0 0.0
      %1607 = vmatpush1.msra.mxu0 0.0
      %1608 = vmatprep.subr.mxu0 0.0
      %1609 = vmatpush1.msra.mxu0 0.0
      %1610 = vmatprep.subr.mxu0 0.0
      %1611 = vmatpush1.msra.mxu0 0.0
      %1612 = vmatprep.subr.mxu0 0.0
      %1613 = vmatpush1.msra.mxu0 0.0
      %1614 = vmatprep.subr.mxu0 0.0
      %1615 = vmatpush1.msra.mxu0 0.0
      %1616 = vmatprep.subr.mxu0 0.0
      %1617 = vmatpush1.msra.mxu0 0.0
      %1618 = vmatprep.subr.mxu0 0.0
      %1619 = vmatpush1.msra.mxu0 0.0
      %1620 = vmatprep.subr.mxu0 0.0
      %1621 = vmatpush1.msra.mxu0 0.0
      %1622 = vmatprep.subr.mxu0 0.0
      %1623 = vmatpush1.msra.mxu0 0.0
      %1624 = vmatprep.subr.mxu0 0.0
      %1625 = vmatpush1.msra.mxu0 0.0
      %1626 = vmatprep.subr.mxu0 0.0
      %1627 = vmatpush1.msra.mxu0 0.0
      %1628 = vmatprep.subr.mxu0 0.0
      %1629 = vmatpush1.msra.mxu0 0.0
      %1630 = vmatprep.subr.mxu0 0.0
      %1631 = vmatpush1.msra.mxu0 0.0
      %1632 = vmatprep.subr.mxu0 0.0
      %1633 = vmatpush1.msra.mxu0 0.0
      %1634 = vmatprep.subr.mxu0 %v1602
      %1635 = vmatpush1.msra.mxu0 %v1600
      %1636 = vmatprep.subr.mxu0 0.0
      %1637 = vmatpush2.msra.mxu0 0.0
      %1638 = vmatprep.subr.mxu0 0.0
      %1639 = vmatpush2.msra.mxu0 0.0
      %1640 = vmatprep.subr.mxu0 0.0
      %1641 = vmatpush2.msra.mxu0 0.0
      %1642 = vmatprep.subr.mxu0 0.0
      %1643 = vmatpush2.msra.mxu0 0.0
      %1644 = vmatprep.subr.mxu0 0.0
      %1645 = vmatpush2.msra.mxu0 0.0
      %1646 = vmatprep.subr.mxu0 0.0
      %1647 = vmatpush2.msra.mxu0 0.0
      %1648 = vmatprep.subr.mxu0 0.0
      %1649 = vmatpush2.msra.mxu0 0.0
      %1650 = vmatprep.subr.mxu0 0.0
      %1651 = vmatpush2.msra.mxu0 0.0
      %1652 = vmatprep.subr.mxu0 0.0
      %1653 = vmatpush2.msra.mxu0 0.0
      %1654 = vmatprep.subr.mxu0 0.0
      %1655 = vmatpush2.msra.mxu0 0.0
      %1656 = vmatprep.subr.mxu0 0.0
      %1657 = vmatpush2.msra.mxu0 0.0
      %1658 = vmatprep.subr.mxu0 0.0
      %1659 = vmatpush2.msra.mxu0 0.0
      %1660 = vmatprep.subr.mxu0 0.0
      %1661 = vmatpush2.msra.mxu0 0.0
      %1662 = vmatprep.subr.mxu0 0.0
      %1663 = vmatpush2.msra.mxu0 0.0
      %1664 = vmatprep.subr.mxu0 0.0
      %1665 = vmatpush2.msra.mxu0 0.0
      %1666 = vmatprep.subr.mxu0 0.0
      %1667 = vmatpush2.msra.mxu0 0.0
      %1668 = vmatprep.mubr.f32.mxu0 0.0
      %1669 = vmatmul.mubr.f32.gmra.mxu0 %v1216
      %v1670 = vpop.f32.mrf.mxu0
      %v1671 = vadd.f32 %v575, %v1670
      %v1672 = vpop.f32.mrf.mxu0
      %v1673 = vadd.f32 %v575, %v1672
      %1674 = vmatprep.mubr.f32.mxu0 0.0
      %1675 = vmatmul.mubr.f32.gmra.mxu0 %v1219
      %v1676 = vpop.f32.mrf.mxu0
      %v1677 = vadd.f32 %v580, %v1676
      %v1678 = vpop.f32.mrf.mxu0
      %v1679 = vadd.f32 %v580, %v1678
      %1680 = vmatprep.mubr.f32.mxu0 0.0
      %1681 = vmatmul.mubr.f32.gmra.mxu0 %v1222
      %v1682 = vpop.f32.mrf.mxu0
      %v1683 = vadd.f32 %v585, %v1682
      %v1684 = vpop.f32.mrf.mxu0
      %v1685 = vadd.f32 %v585, %v1684
      %1686 = vmatprep.mubr.f32.mxu0 0.0
      %1687 = vmatmul.mubr.f32.gmra.mxu0 %v1225
      %v1688 = vpop.f32.mrf.mxu0
      %v1689 = vadd.f32 %v590, %v1688
      %v1690 = vpop.f32.mrf.mxu0
      %v1691 = vadd.f32 %v590, %v1690
      %1692 = vmatprep.mubr.f32.mxu0 0.0
      %1693 = vmatmul.mubr.f32.gmra.mxu0 %v1228
      %v1694 = vpop.f32.mrf.mxu0
      %v1695 = vadd.f32 %v595, %v1694
      %v1696 = vpop.f32.mrf.mxu0
      %v1697 = vadd.f32 %v595, %v1696
      %1698 = vmatprep.mubr.f32.mxu0 0.0
      %1699 = vmatmul.mubr.f32.gmra.mxu0 %v1231
      %v1700 = vpop.f32.mrf.mxu0
      %v1701 = vadd.f32 %v600, %v1700
      %v1702 = vpop.f32.mrf.mxu0
      %v1703 = vadd.f32 %v600, %v1702
      %1704 = vmatprep.mubr.f32.mxu0 0.0
      %1705 = vmatmul.mubr.f32.gmra.mxu0 %v1234
      %v1706 = vpop.f32.mrf.mxu0
      %v1707 = vadd.f32 %v605, %v1706
      %v1708 = vpop.f32.mrf.mxu0
      %v1709 = vadd.f32 %v605, %v1708
      %1710 = vmatprep.mubr.f32.mxu0 0.0
      %1711 = vmatmul.mubr.f32.gmra.mxu0 %v1237
      %v1712 = vpop.f32.mrf.mxu0
      %v1713 = vadd.f32 %v610, %v1712
      %v1714 = vpop.f32.mrf.mxu0
      %v1715 = vadd.f32 %v610, %v1714
      %1716 = vmatprep.mubr.f32.mxu0 0.0
      %1717 = vmatmul.mubr.f32.gmra.mxu0 %v1240
      %v1718 = vpop.f32.mrf.mxu0
      %v1719 = vadd.f32 %v615, %v1718
      %v1720 = vpop.f32.mrf.mxu0
      %v1721 = vadd.f32 %v615, %v1720
      %1722 = vmatprep.mubr.f32.mxu0 0.0
      %1723 = vmatmul.mubr.f32.gmra.mxu0 %v1243
      %v1724 = vpop.f32.mrf.mxu0
      %v1725 = vadd.f32 %v620, %v1724
      %v1726 = vpop.f32.mrf.mxu0
      %v1727 = vadd.f32 %v620, %v1726
      %1728 = vmatprep.mubr.f32.mxu0 0.0
      %1729 = vmatmul.mubr.f32.gmra.mxu0 %v1246
      %v1730 = vpop.f32.mrf.mxu0
      %v1731 = vadd.f32 %v625, %v1730
      %v1732 = vpop.f32.mrf.mxu0
      %v1733 = vadd.f32 %v625, %v1732
      %1734 = vmatprep.mubr.f32.mxu0 0.0
      %1735 = vmatmul.mubr.f32.gmra.mxu0 %v1249
      %v1736 = vpop.f32.mrf.mxu0
      %v1737 = vadd.f32 %v630, %v1736
      %v1738 = vpop.f32.mrf.mxu0
      %v1739 = vadd.f32 %v630, %v1738
      %1740 = vmatprep.mubr.f32.mxu0 0.0
      %1741 = vmatmul.mubr.f32.gmra.mxu0 %v1252
      %v1742 = vpop.f32.mrf.mxu0
      %v1743 = vadd.f32 %v635, %v1742
      %v1744 = vpop.f32.mrf.mxu0
      %v1745 = vadd.f32 %v635, %v1744
      %1746 = vmatprep.mubr.f32.mxu0 0.0
      %1747 = vmatmul.mubr.f32.gmra.mxu0 %v1255
      %v1748 = vpop.f32.mrf.mxu0
      %v1749 = vadd.f32 %v640, %v1748
      %v1750 = vpop.f32.mrf.mxu0
      %v1751 = vadd.f32 %v640, %v1750
      %1752 = vmatprep.mubr.f32.mxu0 0.0
      %1753 = vmatmul.mubr.f32.gmra.mxu0 %v1258
      %v1754 = vpop.f32.mrf.mxu0
      %v1755 = vadd.f32 %v645, %v1754
      %v1756 = vpop.f32.mrf.mxu0
      %v1757 = vadd.f32 %v645, %v1756
      %1758 = vmatprep.mubr.f32.mxu0 0.0
      %1759 = vmatmul.mubr.f32.gmra.mxu0 %v1261
      %v1760 = vpop.f32.mrf.mxu0
      %v1761 = vadd.f32 %v650, %v1760
      %v1762 = vpop.f32.mrf.mxu0
      %v1763 = vadd.f32 %v650, %v1762
      %1764 = vmatprep.mubr.f32.mxu0 0.0
      %1765 = vmatmul.mubr.f32.gmra.mxu0 %v1264
      %v1766 = vpop.f32.mrf.mxu0
      %v1767 = vadd.f32 %v655, %v1766
      %v1768 = vpop.f32.mrf.mxu0
      %v1769 = vadd.f32 %v655, %v1768
      %1770 = vmatprep.mubr.f32.mxu0 0.0
      %1771 = vmatmul.mubr.f32.gmra.mxu0 %v1267
      %v1772 = vpop.f32.mrf.mxu0
      %v1773 = vadd.f32 %v660, %v1772
      %v1774 = vpop.f32.mrf.mxu0
      %v1775 = vadd.f32 %v660, %v1774
      %1776 = vmatprep.mubr.f32.mxu0 0.0
      %1777 = vmatmul.mubr.f32.gmra.mxu0 %v1270
      %v1778 = vpop.f32.mrf.mxu0
      %v1779 = vadd.f32 %v665, %v1778
      %v1780 = vpop.f32.mrf.mxu0
      %v1781 = vadd.f32 %v665, %v1780
      %1782 = vmatprep.mubr.f32.mxu0 0.0
      %1783 = vmatmul.mubr.f32.gmra.mxu0 %v1273
      %v1784 = vpop.f32.mrf.mxu0
      %v1785 = vadd.f32 %v670, %v1784
      %v1786 = vpop.f32.mrf.mxu0
      %v1787 = vadd.f32 %v670, %v1786
      %1788 = vmatprep.mubr.f32.mxu0 0.0
      %1789 = vmatmul.mubr.f32.gmra.mxu0 %v1276
      %v1790 = vpop.f32.mrf.mxu0
      %v1791 = vadd.f32 %v675, %v1790
      %v1792 = vpop.f32.mrf.mxu0
      %v1793 = vadd.f32 %v675, %v1792
      %1794 = vmatprep.mubr.f32.mxu0 0.0
      %1795 = vmatmul.mubr.f32.gmra.mxu0 %v1279
      %v1796 = vpop.f32.mrf.mxu0
      %v1797 = vadd.f32 %v680, %v1796
      %v1798 = vpop.f32.mrf.mxu0
      %v1799 = vadd.f32 %v680, %v1798
      %1800 = vmatprep.mubr.f32.mxu0 0.0
      %1801 = vmatmul.mubr.f32.gmra.mxu0 %v1282
      %v1802 = vpop.f32.mrf.mxu0
      %v1803 = vadd.f32 %v685, %v1802
      %v1804 = vpop.f32.mrf.mxu0
      %v1805 = vadd.f32 %v685, %v1804
      %1806 = vmatprep.mubr.f32.mxu0 0.0
      %1807 = vmatmul.mubr.f32.gmra.mxu0 %v1285
      %v1808 = vpop.f32.mrf.mxu0
      %v1809 = vadd.f32 %v690, %v1808
      %v1810 = vpop.f32.mrf.mxu0
      %v1811 = vadd.f32 %v690, %v1810
      %1812 = vmatprep.mubr.f32.mxu0 0.0
      %1813 = vmatmul.mubr.f32.gmra.mxu0 %v1288
      %v1814 = vpop.f32.mrf.mxu0
      %v1815 = vadd.f32 %v695, %v1814
      %v1816 = vpop.f32.mrf.mxu0
      %v1817 = vadd.f32 %v695, %v1816
      %1818 = vmatprep.mubr.f32.mxu0 0.0
      %1819 = vmatmul.mubr.f32.gmra.mxu0 %v1291
      %v1820 = vpop.f32.mrf.mxu0
      %v1821 = vadd.f32 %v700, %v1820
      %v1822 = vpop.f32.mrf.mxu0
      %v1823 = vadd.f32 %v700, %v1822
      %1824 = vmatprep.mubr.f32.mxu0 0.0
      %1825 = vmatmul.mubr.f32.gmra.mxu0 %v1294
      %v1826 = vpop.f32.mrf.mxu0
      %v1827 = vadd.f32 %v705, %v1826
      %v1828 = vpop.f32.mrf.mxu0
      %v1829 = vadd.f32 %v705, %v1828
      %1830 = vmatprep.mubr.f32.mxu0 0.0
      %1831 = vmatmul.mubr.f32.gmra.mxu0 %v1297
      %v1832 = vpop.f32.mrf.mxu0
      %v1833 = vadd.f32 %v710, %v1832
      %v1834 = vpop.f32.mrf.mxu0
      %v1835 = vadd.f32 %v710, %v1834
      %1836 = vmatprep.mubr.f32.mxu0 0.0
      %1837 = vmatmul.mubr.f32.gmra.mxu0 %v1300
      %v1838 = vpop.f32.mrf.mxu0
      %v1839 = vadd.f32 %v715, %v1838
      %v1840 = vpop.f32.mrf.mxu0
      %v1841 = vadd.f32 %v715, %v1840
      %1842 = vmatprep.mubr.f32.mxu0 0.0
      %1843 = vmatmul.mubr.f32.gmra.mxu0 %v1303
      %v1844 = vpop.f32.mrf.mxu0
      %v1845 = vadd.f32 %v720, %v1844
      %v1846 = vpop.f32.mrf.mxu0
      %v1847 = vadd.f32 %v720, %v1846
      %1848 = vmatprep.mubr.f32.mxu0 0.0
      %1849 = vmatmul.mubr.f32.gmra.mxu0 %v1306
      %v1850 = vpop.f32.mrf.mxu0
      %v1851 = vadd.f32 %v725, %v1850
      %v1852 = vpop.f32.mrf.mxu0
      %v1853 = vadd.f32 %v725, %v1852
      %1854 = vmatprep.mubr.f32.mxu0 0.0
      %1855 = vmatmul.mubr.f32.gmra.mxu0 %v1309
      %v1856 = vpop.f32.mrf.mxu0
      %v1857 = vadd.f32 %v730, %v1856
      %v1858 = vpop.f32.mrf.mxu0
      %v1859 = vadd.f32 %v730, %v1858
      %1860 = vmatprep.mubr.f32.mxu0 0.0
      %1861 = vmatmul.mubr.f32.gmra.mxu0 %v1312
      %v1862 = vpop.f32.mrf.mxu0
      %v1863 = vadd.f32 %v735, %v1862
      %v1864 = vpop.f32.mrf.mxu0
      %v1865 = vadd.f32 %v735, %v1864
      %1866 = vmatprep.mubr.f32.mxu0 0.0
      %1867 = vmatmul.mubr.f32.gmra.mxu0 %v1315
      %v1868 = vpop.f32.mrf.mxu0
      %v1869 = vadd.f32 %v740, %v1868
      %v1870 = vpop.f32.mrf.mxu0
      %v1871 = vadd.f32 %v740, %v1870
      %1872 = vmatprep.mubr.f32.mxu0 0.0
      %1873 = vmatmul.mubr.f32.gmra.mxu0 %v1318
      %v1874 = vpop.f32.mrf.mxu0
      %v1875 = vadd.f32 %v745, %v1874
      %v1876 = vpop.f32.mrf.mxu0
      %v1877 = vadd.f32 %v745, %v1876
      %1878 = vmatprep.mubr.f32.mxu0 0.0
      %1879 = vmatmul.mubr.f32.gmra.mxu0 %v1321
      %v1880 = vpop.f32.mrf.mxu0
      %v1881 = vadd.f32 %v750, %v1880
      %v1882 = vpop.f32.mrf.mxu0
      %v1883 = vadd.f32 %v750, %v1882
      %1884 = vmatprep.mubr.f32.mxu0 0.0
      %1885 = vmatmul.mubr.f32.gmra.mxu0 %v1324
      %v1886 = vpop.f32.mrf.mxu0
      %v1887 = vadd.f32 %v755, %v1886
      %v1888 = vpop.f32.mrf.mxu0
      %v1889 = vadd.f32 %v755, %v1888
      %1890 = vmatprep.mubr.f32.mxu0 0.0
      %1891 = vmatmul.mubr.f32.gmra.mxu0 %v1327
      %v1892 = vpop.f32.mrf.mxu0
      %v1893 = vadd.f32 %v760, %v1892
      %v1894 = vpop.f32.mrf.mxu0
      %v1895 = vadd.f32 %v760, %v1894
      %1896 = vmatprep.mubr.f32.mxu0 0.0
      %1897 = vmatmul.mubr.f32.gmra.mxu0 %v1330
      %v1898 = vpop.f32.mrf.mxu0
      %v1899 = vadd.f32 %v765, %v1898
      %v1900 = vpop.f32.mrf.mxu0
      %v1901 = vadd.f32 %v765, %v1900
      %1902 = vmatprep.mubr.f32.mxu0 0.0
      %1903 = vmatmul.mubr.f32.gmra.mxu0 %v1333
      %v1904 = vpop.f32.mrf.mxu0
      %v1905 = vadd.f32 %v770, %v1904
      %v1906 = vpop.f32.mrf.mxu0
      %v1907 = vadd.f32 %v770, %v1906
      %1908 = vmatprep.mubr.f32.mxu0 0.0
      %1909 = vmatmul.mubr.f32.gmra.mxu0 %v1336
      %v1910 = vpop.f32.mrf.mxu0
      %v1911 = vadd.f32 %v775, %v1910
      %v1912 = vpop.f32.mrf.mxu0
      %v1913 = vadd.f32 %v775, %v1912
      %1914 = vmatprep.mubr.f32.mxu0 0.0
      %1915 = vmatmul.mubr.f32.gmra.mxu0 %v1339
      %v1916 = vpop.f32.mrf.mxu0
      %v1917 = vadd.f32 %v780, %v1916
      %v1918 = vpop.f32.mrf.mxu0
      %v1919 = vadd.f32 %v780, %v1918
      %1920 = vmatprep.mubr.f32.mxu0 0.0
      %1921 = vmatmul.mubr.f32.gmra.mxu0 %v1342
      %v1922 = vpop.f32.mrf.mxu0
      %v1923 = vadd.f32 %v785, %v1922
      %v1924 = vpop.f32.mrf.mxu0
      %v1925 = vadd.f32 %v785, %v1924
      %1926 = vmatprep.mubr.f32.mxu0 0.0
      %1927 = vmatmul.mubr.f32.gmra.mxu0 %v1345
      %v1928 = vpop.f32.mrf.mxu0
      %v1929 = vadd.f32 %v790, %v1928
      %v1930 = vpop.f32.mrf.mxu0
      %v1931 = vadd.f32 %v790, %v1930
      %1932 = vmatprep.mubr.f32.mxu0 0.0
      %1933 = vmatmul.mubr.f32.gmra.mxu0 %v1348
      %v1934 = vpop.f32.mrf.mxu0
      %v1935 = vadd.f32 %v795, %v1934
      %v1936 = vpop.f32.mrf.mxu0
      %v1937 = vadd.f32 %v795, %v1936
      %1938 = vmatprep.mubr.f32.mxu0 0.0
      %1939 = vmatmul.mubr.f32.gmra.mxu0 %v1351
      %v1940 = vpop.f32.mrf.mxu0
      %v1941 = vadd.f32 %v800, %v1940
      %v1942 = vpop.f32.mrf.mxu0
      %v1943 = vadd.f32 %v800, %v1942
      %1944 = vmatprep.mubr.f32.mxu0 0.0
      %1945 = vmatmul.mubr.f32.gmra.mxu0 %v1354
      %v1946 = vpop.f32.mrf.mxu0
      %v1947 = vadd.f32 %v805, %v1946
      %v1948 = vpop.f32.mrf.mxu0
      %v1949 = vadd.f32 %v805, %v1948
      %1950 = vmatprep.mubr.f32.mxu0 0.0
      %1951 = vmatmul.mubr.f32.gmra.mxu0 %v1357
      %v1952 = vpop.f32.mrf.mxu0
      %v1953 = vadd.f32 %v810, %v1952
      %v1954 = vpop.f32.mrf.mxu0
      %v1955 = vadd.f32 %v810, %v1954
      %1956 = vmatprep.mubr.f32.mxu0 0.0
      %1957 = vmatmul.mubr.f32.gmra.mxu0 %v1360
      %v1958 = vpop.f32.mrf.mxu0
      %v1959 = vadd.f32 %v815, %v1958
      %v1960 = vpop.f32.mrf.mxu0
      %v1961 = vadd.f32 %v815, %v1960
      %1962 = vmatprep.mubr.f32.mxu0 0.0
      %1963 = vmatmul.mubr.f32.gmra.mxu0 %v1363
      %v1964 = vpop.f32.mrf.mxu0
      %v1965 = vadd.f32 %v820, %v1964
      %v1966 = vpop.f32.mrf.mxu0
      %v1967 = vadd.f32 %v820, %v1966
      %1968 = vmatprep.mubr.f32.mxu0 0.0
      %1969 = vmatmul.mubr.f32.gmra.mxu0 %v1366
      %v1970 = vpop.f32.mrf.mxu0
      %v1971 = vadd.f32 %v825, %v1970
      %v1972 = vpop.f32.mrf.mxu0
      %v1973 = vadd.f32 %v825, %v1972
      %1974 = vmatprep.mubr.f32.mxu0 0.0
      %1975 = vmatmul.mubr.f32.gmra.mxu0 %v1369
      %v1976 = vpop.f32.mrf.mxu0
      %v1977 = vadd.f32 %v830, %v1976
      %v1978 = vpop.f32.mrf.mxu0
      %v1979 = vadd.f32 %v830, %v1978
      %1980 = vmatprep.mubr.f32.mxu0 0.0
      %1981 = vmatmul.mubr.f32.gmra.mxu0 %v1372
      %v1982 = vpop.f32.mrf.mxu0
      %v1983 = vadd.f32 %v835, %v1982
      %v1984 = vpop.f32.mrf.mxu0
      %v1985 = vadd.f32 %v835, %v1984
      %1986 = vmatprep.mubr.f32.mxu0 0.0
      %1987 = vmatmul.mubr.f32.gmra.mxu0 %v1375
      %v1988 = vpop.f32.mrf.mxu0
      %v1989 = vadd.f32 %v840, %v1988
      %v1990 = vpop.f32.mrf.mxu0
      %v1991 = vadd.f32 %v840, %v1990
      %1992 = vmatprep.mubr.f32.mxu0 0.0
      %1993 = vmatmul.mubr.f32.gmra.mxu0 %v1378
      %v1994 = vpop.f32.mrf.mxu0
      %v1995 = vadd.f32 %v845, %v1994
      %v1996 = vpop.f32.mrf.mxu0
      %v1997 = vadd.f32 %v845, %v1996
      %1998 = vmatprep.mubr.f32.mxu0 0.0
      %1999 = vmatmul.mubr.f32.gmra.mxu0 %v1381
      %v2000 = vpop.f32.mrf.mxu0
      %v2001 = vadd.f32 %v850, %v2000
      %v2002 = vpop.f32.mrf.mxu0
      %v2003 = vadd.f32 %v850, %v2002
      %2004 = vmatprep.mubr.f32.mxu0 0.0
      %2005 = vmatmul.mubr.f32.gmra.mxu0 %v1384
      %v2006 = vpop.f32.mrf.mxu0
      %v2007 = vadd.f32 %v855, %v2006
      %v2008 = vpop.f32.mrf.mxu0
      %v2009 = vadd.f32 %v855, %v2008
      %2010 = vmatprep.mubr.f32.mxu0 0.0
      %2011 = vmatmul.mubr.f32.gmra.mxu0 %v1387
      %v2012 = vpop.f32.mrf.mxu0
      %v2013 = vadd.f32 %v860, %v2012
      %v2014 = vpop.f32.mrf.mxu0
      %v2015 = vadd.f32 %v860, %v2014
      %2016 = vmatprep.mubr.f32.mxu0 0.0
      %2017 = vmatmul.mubr.f32.gmra.mxu0 %v1390
      %v2018 = vpop.f32.mrf.mxu0
      %v2019 = vadd.f32 %v865, %v2018
      %v2020 = vpop.f32.mrf.mxu0
      %v2021 = vadd.f32 %v865, %v2020
      %2022 = vmatprep.mubr.f32.mxu0 0.0
      %2023 = vmatmul.mubr.f32.gmra.mxu0 %v1393
      %v2024 = vpop.f32.mrf.mxu0
      %v2025 = vadd.f32 %v870, %v2024
      %v2026 = vpop.f32.mrf.mxu0
      %v2027 = vadd.f32 %v870, %v2026
      %2028 = vmatprep.mubr.f32.mxu0 0.0
      %2029 = vmatmul.mubr.f32.gmra.mxu0 %v1396
      %v2030 = vpop.f32.mrf.mxu0
      %v2031 = vadd.f32 %v875, %v2030
      %v2032 = vpop.f32.mrf.mxu0
      %v2033 = vadd.f32 %v875, %v2032
      %2034 = vmatprep.mubr.f32.mxu0 0.0
      %2035 = vmatmul.mubr.f32.gmra.mxu0 %v1399
      %v2036 = vpop.f32.mrf.mxu0
      %v2037 = vadd.f32 %v880, %v2036
      %v2038 = vpop.f32.mrf.mxu0
      %v2039 = vadd.f32 %v880, %v2038
      %2040 = vmatprep.mubr.f32.mxu0 0.0
      %2041 = vmatmul.mubr.f32.gmra.mxu0 %v1402
      %v2042 = vpop.f32.mrf.mxu0
      %v2043 = vadd.f32 %v885, %v2042
      %v2044 = vpop.f32.mrf.mxu0
      %v2045 = vadd.f32 %v885, %v2044
      %2046 = vmatprep.mubr.f32.mxu0 0.0
      %2047 = vmatmul.mubr.f32.gmra.mxu0 %v1405
      %v2048 = vpop.f32.mrf.mxu0
      %v2049 = vadd.f32 %v890, %v2048
      %v2050 = vpop.f32.mrf.mxu0
      %v2051 = vadd.f32 %v890, %v2050
      %2052 = vmatprep.mubr.f32.mxu0 0.0
      %2053 = vmatmul.mubr.f32.gmra.mxu0 %v1408
      %v2054 = vpop.f32.mrf.mxu0
      %v2055 = vadd.f32 %v895, %v2054
      %v2056 = vpop.f32.mrf.mxu0
      %v2057 = vadd.f32 %v895, %v2056
      %2058 = vmatprep.mubr.f32.mxu0 0.0
      %2059 = vmatmul.mubr.f32.gmra.mxu0 %v1411
      %v2060 = vpop.f32.mrf.mxu0
      %v2061 = vadd.f32 %v900, %v2060
      %v2062 = vpop.f32.mrf.mxu0
      %v2063 = vadd.f32 %v900, %v2062
      %2064 = vmatprep.mubr.f32.mxu0 0.0
      %2065 = vmatmul.mubr.f32.gmra.mxu0 %v1414
      %v2066 = vpop.f32.mrf.mxu0
      %v2067 = vadd.f32 %v905, %v2066
      %v2068 = vpop.f32.mrf.mxu0
      %v2069 = vadd.f32 %v905, %v2068
      %2070 = vmatprep.mubr.f32.mxu0 0.0
      %2071 = vmatmul.mubr.f32.gmra.mxu0 %v1417
      %v2072 = vpop.f32.mrf.mxu0
      %v2073 = vadd.f32 %v910, %v2072
      %v2074 = vpop.f32.mrf.mxu0
      %v2075 = vadd.f32 %v910, %v2074
      %2076 = vmatprep.mubr.f32.mxu0 0.0
      %2077 = vmatmul.mubr.f32.gmra.mxu0 %v1420
      %v2078 = vpop.f32.mrf.mxu0
      %v2079 = vadd.f32 %v915, %v2078
      %v2080 = vpop.f32.mrf.mxu0
      %v2081 = vadd.f32 %v915, %v2080
      %2082 = vmatprep.mubr.f32.mxu0 0.0
      %2083 = vmatmul.mubr.f32.gmra.mxu0 %v1423
      %v2084 = vpop.f32.mrf.mxu0
      %v2085 = vadd.f32 %v920, %v2084
      %v2086 = vpop.f32.mrf.mxu0
      %v2087 = vadd.f32 %v920, %v2086
      %2088 = vmatprep.mubr.f32.mxu0 0.0
      %2089 = vmatmul.mubr.f32.gmra.mxu0 %v1426
      %v2090 = vpop.f32.mrf.mxu0
      %v2091 = vadd.f32 %v925, %v2090
      %v2092 = vpop.f32.mrf.mxu0
      %v2093 = vadd.f32 %v925, %v2092
      %2094 = vmatprep.mubr.f32.mxu0 0.0
      %2095 = vmatmul.mubr.f32.gmra.mxu0 %v1429
      %v2096 = vpop.f32.mrf.mxu0
      %v2097 = vadd.f32 %v930, %v2096
      %v2098 = vpop.f32.mrf.mxu0
      %v2099 = vadd.f32 %v930, %v2098
      %2100 = vmatprep.mubr.f32.mxu0 0.0
      %2101 = vmatmul.mubr.f32.gmra.mxu0 %v1432
      %v2102 = vpop.f32.mrf.mxu0
      %v2103 = vadd.f32 %v935, %v2102
      %v2104 = vpop.f32.mrf.mxu0
      %v2105 = vadd.f32 %v935, %v2104
      %2106 = vmatprep.mubr.f32.mxu0 0.0
      %2107 = vmatmul.mubr.f32.gmra.mxu0 %v1435
      %v2108 = vpop.f32.mrf.mxu0
      %v2109 = vadd.f32 %v940, %v2108
      %v2110 = vpop.f32.mrf.mxu0
      %v2111 = vadd.f32 %v940, %v2110
      %2112 = vmatprep.mubr.f32.mxu0 0.0
      %2113 = vmatmul.mubr.f32.gmra.mxu0 %v1438
      %v2114 = vpop.f32.mrf.mxu0
      %v2115 = vadd.f32 %v945, %v2114
      %v2116 = vpop.f32.mrf.mxu0
      %v2117 = vadd.f32 %v945, %v2116
      %2118 = vmatprep.mubr.f32.mxu0 0.0
      %2119 = vmatmul.mubr.f32.gmra.mxu0 %v1441
      %v2120 = vpop.f32.mrf.mxu0
      %v2121 = vadd.f32 %v950, %v2120
      %v2122 = vpop.f32.mrf.mxu0
      %v2123 = vadd.f32 %v950, %v2122
      %2124 = vmatprep.mubr.f32.mxu0 0.0
      %2125 = vmatmul.mubr.f32.gmra.mxu0 %v1444
      %v2126 = vpop.f32.mrf.mxu0
      %v2127 = vadd.f32 %v955, %v2126
      %v2128 = vpop.f32.mrf.mxu0
      %v2129 = vadd.f32 %v955, %v2128
      %2130 = vmatprep.mubr.f32.mxu0 0.0
      %2131 = vmatmul.mubr.f32.gmra.mxu0 %v1447
      %v2132 = vpop.f32.mrf.mxu0
      %v2133 = vadd.f32 %v960, %v2132
      %v2134 = vpop.f32.mrf.mxu0
      %v2135 = vadd.f32 %v960, %v2134
      %2136 = vmatprep.mubr.f32.mxu0 0.0
      %2137 = vmatmul.mubr.f32.gmra.mxu0 %v1450
      %v2138 = vpop.f32.mrf.mxu0
      %v2139 = vadd.f32 %v965, %v2138
      %v2140 = vpop.f32.mrf.mxu0
      %v2141 = vadd.f32 %v965, %v2140
      %2142 = vmatprep.mubr.f32.mxu0 0.0
      %2143 = vmatmul.mubr.f32.gmra.mxu0 %v1453
      %v2144 = vpop.f32.mrf.mxu0
      %v2145 = vadd.f32 %v970, %v2144
      %v2146 = vpop.f32.mrf.mxu0
      %v2147 = vadd.f32 %v970, %v2146
      %2148 = vmatprep.mubr.f32.mxu0 0.0
      %2149 = vmatmul.mubr.f32.gmra.mxu0 %v1456
      %v2150 = vpop.f32.mrf.mxu0
      %v2151 = vadd.f32 %v975, %v2150
      %v2152 = vpop.f32.mrf.mxu0
      %v2153 = vadd.f32 %v975, %v2152
      %2154 = vmatprep.mubr.f32.mxu0 0.0
      %2155 = vmatmul.mubr.f32.gmra.mxu0 %v1459
      %v2156 = vpop.f32.mrf.mxu0
      %v2157 = vadd.f32 %v980, %v2156
      %v2158 = vpop.f32.mrf.mxu0
      %v2159 = vadd.f32 %v980, %v2158
      %2160 = vmatprep.mubr.f32.mxu0 0.0
      %2161 = vmatmul.mubr.f32.gmra.mxu0 %v1462
      %v2162 = vpop.f32.mrf.mxu0
      %v2163 = vadd.f32 %v985, %v2162
      %v2164 = vpop.f32.mrf.mxu0
      %v2165 = vadd.f32 %v985, %v2164
      %2166 = vmatprep.mubr.f32.mxu0 0.0
      %2167 = vmatmul.mubr.f32.gmra.mxu0 %v1465
      %v2168 = vpop.f32.mrf.mxu0
      %v2169 = vadd.f32 %v990, %v2168
      %v2170 = vpop.f32.mrf.mxu0
      %v2171 = vadd.f32 %v990, %v2170
      %2172 = vmatprep.mubr.f32.mxu0 0.0
      %2173 = vmatmul.mubr.f32.gmra.mxu0 %v1468
      %v2174 = vpop.f32.mrf.mxu0
      %v2175 = vadd.f32 %v995, %v2174
      %v2176 = vpop.f32.mrf.mxu0
      %v2177 = vadd.f32 %v995, %v2176
      %2178 = vmatprep.mubr.f32.mxu0 0.0
      %2179 = vmatmul.mubr.f32.gmra.mxu0 %v1471
      %v2180 = vpop.f32.mrf.mxu0
      %v2181 = vadd.f32 %v1000, %v2180
      %v2182 = vpop.f32.mrf.mxu0
      %v2183 = vadd.f32 %v1000, %v2182
      %2184 = vmatprep.mubr.f32.mxu0 0.0
      %2185 = vmatmul.mubr.f32.gmra.mxu0 %v1474
      %v2186 = vpop.f32.mrf.mxu0
      %v2187 = vadd.f32 %v1005, %v2186
      %v2188 = vpop.f32.mrf.mxu0
      %v2189 = vadd.f32 %v1005, %v2188
      %2190 = vmatprep.mubr.f32.mxu0 0.0
      %2191 = vmatmul.mubr.f32.gmra.mxu0 %v1477
      %v2192 = vpop.f32.mrf.mxu0
      %v2193 = vadd.f32 %v1010, %v2192
      %v2194 = vpop.f32.mrf.mxu0
      %v2195 = vadd.f32 %v1010, %v2194
      %2196 = vmatprep.mubr.f32.mxu0 0.0
      %2197 = vmatmul.mubr.f32.gmra.mxu0 %v1480
      %v2198 = vpop.f32.mrf.mxu0
      %v2199 = vadd.f32 %v1015, %v2198
      %v2200 = vpop.f32.mrf.mxu0
      %v2201 = vadd.f32 %v1015, %v2200
      %2202 = vmatprep.mubr.f32.mxu0 0.0
      %2203 = vmatmul.mubr.f32.gmra.mxu0 %v1483
      %v2204 = vpop.f32.mrf.mxu0
      %v2205 = vadd.f32 %v1020, %v2204
      %v2206 = vpop.f32.mrf.mxu0
      %v2207 = vadd.f32 %v1020, %v2206
      %2208 = vmatprep.mubr.f32.mxu0 0.0
      %2209 = vmatmul.mubr.f32.gmra.mxu0 %v1486
      %v2210 = vpop.f32.mrf.mxu0
      %v2211 = vadd.f32 %v1025, %v2210
      %v2212 = vpop.f32.mrf.mxu0
      %v2213 = vadd.f32 %v1025, %v2212
      %2214 = vmatprep.mubr.f32.mxu0 0.0
      %2215 = vmatmul.mubr.f32.gmra.mxu0 %v1489
      %v2216 = vpop.f32.mrf.mxu0
      %v2217 = vadd.f32 %v1030, %v2216
      %v2218 = vpop.f32.mrf.mxu0
      %v2219 = vadd.f32 %v1030, %v2218
      %2220 = vmatprep.mubr.f32.mxu0 0.0
      %2221 = vmatmul.mubr.f32.gmra.mxu0 %v1492
      %v2222 = vpop.f32.mrf.mxu0
      %v2223 = vadd.f32 %v1035, %v2222
      %v2224 = vpop.f32.mrf.mxu0
      %v2225 = vadd.f32 %v1035, %v2224
      %2226 = vmatprep.mubr.f32.mxu0 0.0
      %2227 = vmatmul.mubr.f32.gmra.mxu0 %v1495
      %v2228 = vpop.f32.mrf.mxu0
      %v2229 = vadd.f32 %v1040, %v2228
      %v2230 = vpop.f32.mrf.mxu0
      %v2231 = vadd.f32 %v1040, %v2230
      %2232 = vmatprep.mubr.f32.mxu0 0.0
      %2233 = vmatmul.mubr.f32.gmra.mxu0 %v1498
      %v2234 = vpop.f32.mrf.mxu0
      %v2235 = vadd.f32 %v1045, %v2234
      %v2236 = vpop.f32.mrf.mxu0
      %v2237 = vadd.f32 %v1045, %v2236
      %2238 = vmatprep.mubr.f32.mxu0 0.0
      %2239 = vmatmul.mubr.f32.gmra.mxu0 %v1501
      %v2240 = vpop.f32.mrf.mxu0
      %v2241 = vadd.f32 %v1050, %v2240
      %v2242 = vpop.f32.mrf.mxu0
      %v2243 = vadd.f32 %v1050, %v2242
      %2244 = vmatprep.mubr.f32.mxu0 0.0
      %2245 = vmatmul.mubr.f32.gmra.mxu0 %v1504
      %v2246 = vpop.f32.mrf.mxu0
      %v2247 = vadd.f32 %v1055, %v2246
      %v2248 = vpop.f32.mrf.mxu0
      %v2249 = vadd.f32 %v1055, %v2248
      %2250 = vmatprep.mubr.f32.mxu0 0.0
      %2251 = vmatmul.mubr.f32.gmra.mxu0 %v1507
      %v2252 = vpop.f32.mrf.mxu0
      %v2253 = vadd.f32 %v1060, %v2252
      %v2254 = vpop.f32.mrf.mxu0
      %v2255 = vadd.f32 %v1060, %v2254
      %2256 = vmatprep.mubr.f32.mxu0 0.0
      %2257 = vmatmul.mubr.f32.gmra.mxu0 %v1510
      %v2258 = vpop.f32.mrf.mxu0
      %v2259 = vadd.f32 %v1065, %v2258
      %v2260 = vpop.f32.mrf.mxu0
      %v2261 = vadd.f32 %v1065, %v2260
      %2262 = vmatprep.mubr.f32.mxu0 0.0
      %2263 = vmatmul.mubr.f32.gmra.mxu0 %v1513
      %v2264 = vpop.f32.mrf.mxu0
      %v2265 = vadd.f32 %v1070, %v2264
      %v2266 = vpop.f32.mrf.mxu0
      %v2267 = vadd.f32 %v1070, %v2266
      %2268 = vmatprep.mubr.f32.mxu0 0.0
      %2269 = vmatmul.mubr.f32.gmra.mxu0 %v1516
      %v2270 = vpop.f32.mrf.mxu0
      %v2271 = vadd.f32 %v1075, %v2270
      %v2272 = vpop.f32.mrf.mxu0
      %v2273 = vadd.f32 %v1075, %v2272
      %2274 = vmatprep.mubr.f32.mxu0 0.0
      %2275 = vmatmul.mubr.f32.gmra.mxu0 %v1519
      %v2276 = vpop.f32.mrf.mxu0
      %v2277 = vadd.f32 %v1080, %v2276
      %v2278 = vpop.f32.mrf.mxu0
      %v2279 = vadd.f32 %v1080, %v2278
      %2280 = vmatprep.mubr.f32.mxu0 0.0
      %2281 = vmatmul.mubr.f32.gmra.mxu0 %v1522
      %v2282 = vpop.f32.mrf.mxu0
      %v2283 = vadd.f32 %v1085, %v2282
      %v2284 = vpop.f32.mrf.mxu0
      %v2285 = vadd.f32 %v1085, %v2284
      %2286 = vmatprep.mubr.f32.mxu0 0.0
      %2287 = vmatmul.mubr.f32.gmra.mxu0 %v1525
      %v2288 = vpop.f32.mrf.mxu0
      %v2289 = vadd.f32 %v1090, %v2288
      %v2290 = vpop.f32.mrf.mxu0
      %v2291 = vadd.f32 %v1090, %v2290
      %2292 = vmatprep.mubr.f32.mxu0 0.0
      %2293 = vmatmul.mubr.f32.gmra.mxu0 %v1528
      %v2294 = vpop.f32.mrf.mxu0
      %v2295 = vadd.f32 %v1095, %v2294
      %v2296 = vpop.f32.mrf.mxu0
      %v2297 = vadd.f32 %v1095, %v2296
      %2298 = vmatprep.mubr.f32.mxu0 0.0
      %2299 = vmatmul.mubr.f32.gmra.mxu0 %v1531
      %v2300 = vpop.f32.mrf.mxu0
      %v2301 = vadd.f32 %v1100, %v2300
      %v2302 = vpop.f32.mrf.mxu0
      %v2303 = vadd.f32 %v1100, %v2302
      %2304 = vmatprep.mubr.f32.mxu0 0.0
      %2305 = vmatmul.mubr.f32.gmra.mxu0 %v1534
      %v2306 = vpop.f32.mrf.mxu0
      %v2307 = vadd.f32 %v1105, %v2306
      %v2308 = vpop.f32.mrf.mxu0
      %v2309 = vadd.f32 %v1105, %v2308
      %2310 = vmatprep.mubr.f32.mxu0 0.0
      %2311 = vmatmul.mubr.f32.gmra.mxu0 %v1537
      %v2312 = vpop.f32.mrf.mxu0
      %v2313 = vadd.f32 %v1110, %v2312
      %v2314 = vpop.f32.mrf.mxu0
      %v2315 = vadd.f32 %v1110, %v2314
      %2316 = vmatprep.mubr.f32.mxu0 0.0
      %2317 = vmatmul.mubr.f32.gmra.mxu0 %v1540
      %v2318 = vpop.f32.mrf.mxu0
      %v2319 = vadd.f32 %v1115, %v2318
      %v2320 = vpop.f32.mrf.mxu0
      %v2321 = vadd.f32 %v1115, %v2320
      %2322 = vmatprep.mubr.f32.mxu0 0.0
      %2323 = vmatmul.mubr.f32.gmra.mxu0 %v1543
      %v2324 = vpop.f32.mrf.mxu0
      %v2325 = vadd.f32 %v1120, %v2324
      %v2326 = vpop.f32.mrf.mxu0
      %v2327 = vadd.f32 %v1120, %v2326
      %2328 = vmatprep.mubr.f32.mxu0 0.0
      %2329 = vmatmul.mubr.f32.gmra.mxu0 %v1546
      %v2330 = vpop.f32.mrf.mxu0
      %v2331 = vadd.f32 %v1125, %v2330
      %v2332 = vpop.f32.mrf.mxu0
      %v2333 = vadd.f32 %v1125, %v2332
      %2334 = vmatprep.mubr.f32.mxu0 0.0
      %2335 = vmatmul.mubr.f32.gmra.mxu0 %v1549
      %v2336 = vpop.f32.mrf.mxu0
      %v2337 = vadd.f32 %v1130, %v2336
      %v2338 = vpop.f32.mrf.mxu0
      %v2339 = vadd.f32 %v1130, %v2338
      %2340 = vmatprep.mubr.f32.mxu0 0.0
      %2341 = vmatmul.mubr.f32.gmra.mxu0 %v1552
      %v2342 = vpop.f32.mrf.mxu0
      %v2343 = vadd.f32 %v1135, %v2342
      %v2344 = vpop.f32.mrf.mxu0
      %v2345 = vadd.f32 %v1135, %v2344
      %2346 = vmatprep.mubr.f32.mxu0 0.0
      %2347 = vmatmul.mubr.f32.gmra.mxu0 %v1555
      %v2348 = vpop.f32.mrf.mxu0
      %v2349 = vadd.f32 %v1140, %v2348
      %v2350 = vpop.f32.mrf.mxu0
      %v2351 = vadd.f32 %v1140, %v2350
      %2352 = vmatprep.mubr.f32.mxu0 0.0
      %2353 = vmatmul.mubr.f32.gmra.mxu0 %v1558
      %v2354 = vpop.f32.mrf.mxu0
      %v2355 = vadd.f32 %v1145, %v2354
      %v2356 = vpop.f32.mrf.mxu0
      %v2357 = vadd.f32 %v1145, %v2356
      %2358 = vmatprep.mubr.f32.mxu0 0.0
      %2359 = vmatmul.mubr.f32.gmra.mxu0 %v1561
      %v2360 = vpop.f32.mrf.mxu0
      %v2361 = vadd.f32 %v1150, %v2360
      %v2362 = vpop.f32.mrf.mxu0
      %v2363 = vadd.f32 %v1150, %v2362
      %2364 = vmatprep.mubr.f32.mxu0 0.0
      %2365 = vmatmul.mubr.f32.gmra.mxu0 %v1564
      %v2366 = vpop.f32.mrf.mxu0
      %v2367 = vadd.f32 %v1155, %v2366
      %v2368 = vpop.f32.mrf.mxu0
      %v2369 = vadd.f32 %v1155, %v2368
      %2370 = vmatprep.mubr.f32.mxu0 0.0
      %2371 = vmatmul.mubr.f32.gmra.mxu0 %v1567
      %v2372 = vpop.f32.mrf.mxu0
      %v2373 = vadd.f32 %v1160, %v2372
      %v2374 = vpop.f32.mrf.mxu0
      %v2375 = vadd.f32 %v1160, %v2374
      %2376 = vmatprep.mubr.f32.mxu0 0.0
      %2377 = vmatmul.mubr.f32.gmra.mxu0 %v1570
      %v2378 = vpop.f32.mrf.mxu0
      %v2379 = vadd.f32 %v1165, %v2378
      %v2380 = vpop.f32.mrf.mxu0
      %v2381 = vadd.f32 %v1165, %v2380
      %2382 = vmatprep.mubr.f32.mxu0 0.0
      %2383 = vmatmul.mubr.f32.gmra.mxu0 %v1573
      %v2384 = vpop.f32.mrf.mxu0
      %v2385 = vadd.f32 %v1170, %v2384
      %v2386 = vpop.f32.mrf.mxu0
      %v2387 = vadd.f32 %v1170, %v2386
      %2388 = vmatprep.mubr.f32.mxu0 0.0
      %2389 = vmatmul.mubr.f32.gmra.mxu0 %v1576
      %v2390 = vpop.f32.mrf.mxu0
      %v2391 = vadd.f32 %v1175, %v2390
      %v2392 = vpop.f32.mrf.mxu0
      %v2393 = vadd.f32 %v1175, %v2392
      %2394 = vmatprep.mubr.f32.mxu0 0.0
      %2395 = vmatmul.mubr.f32.gmra.mxu0 %v1579
      %v2396 = vpop.f32.mrf.mxu0
      %v2397 = vadd.f32 %v1180, %v2396
      %v2398 = vpop.f32.mrf.mxu0
      %v2399 = vadd.f32 %v1180, %v2398
      %2400 = vmatprep.mubr.f32.mxu0 0.0
      %2401 = vmatmul.mubr.f32.gmra.mxu0 %v1582
      %v2402 = vpop.f32.mrf.mxu0
      %v2403 = vadd.f32 %v1185, %v2402
      %v2404 = vpop.f32.mrf.mxu0
      %v2405 = vadd.f32 %v1185, %v2404
      %2406 = vmatprep.mubr.f32.mxu0 0.0
      %2407 = vmatmul.mubr.f32.gmra.mxu0 %v1585
      %v2408 = vpop.f32.mrf.mxu0
      %v2409 = vadd.f32 %v1190, %v2408
      %v2410 = vpop.f32.mrf.mxu0
      %v2411 = vadd.f32 %v1190, %v2410
      %2412 = vmatprep.mubr.f32.mxu0 0.0
      %2413 = vmatmul.mubr.f32.gmra.mxu0 %v1588
      %v2414 = vpop.f32.mrf.mxu0
      %v2415 = vadd.f32 %v1195, %v2414
      %v2416 = vpop.f32.mrf.mxu0
      %v2417 = vadd.f32 %v1195, %v2416
      %2418 = vmatprep.mubr.f32.mxu0 0.0
      %2419 = vmatmul.mubr.f32.gmra.mxu0 %v1591
      %v2420 = vpop.f32.mrf.mxu0
      %v2421 = vadd.f32 %v1200, %v2420
      %v2422 = vpop.f32.mrf.mxu0
      %v2423 = vadd.f32 %v1200, %v2422
      %2424 = vmatprep.mubr.f32.mxu0 0.0
      %2425 = vmatmul.mubr.f32.gmra.mxu0 %v1594
      %v2426 = vpop.f32.mrf.mxu0
      %v2427 = vadd.f32 %v1205, %v2426
      %v2428 = vpop.f32.mrf.mxu0
      %v2429 = vadd.f32 %v1205, %v2428
      %2430 = vmatprep.mubr.f32.mxu0 0.0
      %2431 = vmatmul.mubr.f32.gmra.mxu0 %v1597
      %v2432 = vpop.f32.mrf.mxu0
      %v2433 = vadd.f32 %v1210, %v2432
      %v2434 = vpop.f32.mrf.mxu0
      %v2435 = vadd.f32 %v1210, %v2434
      %2436 = vdwg.mxu0
      %v2437 = vmul.f32 %v1671, %v1671
      %v2438 = vmul.f32 %v1673, %v1673
      %v2439 = vmul.f32 %v1677, %v1677
      %v2440 = vmul.f32 %v1679, %v1679
      %v2441 = vmul.f32 %v1683, %v1683
      %v2442 = vmul.f32 %v1685, %v1685
      %v2443 = vmul.f32 %v1689, %v1689
      %v2444 = vmul.f32 %v1691, %v1691
      %v2445 = vmul.f32 %v1695, %v1695
      %v2446 = vmul.f32 %v1697, %v1697
      %v2447 = vmul.f32 %v1701, %v1701
      %v2448 = vmul.f32 %v1703, %v1703
      %v2449 = vmul.f32 %v1707, %v1707
      %v2450 = vmul.f32 %v1709, %v1709
      %v2451 = vmul.f32 %v1713, %v1713
      %v2452 = vmul.f32 %v1715, %v1715
      %v2453 = vmul.f32 %v1719, %v1719
      %v2454 = vmul.f32 %v1721, %v1721
      %v2455 = vmul.f32 %v1725, %v1725
      %v2456 = vmul.f32 %v1727, %v1727
      %v2457 = vmul.f32 %v1731, %v1731
      %v2458 = vmul.f32 %v1733, %v1733
      %v2459 = vmul.f32 %v1737, %v1737
      %v2460 = vmul.f32 %v1739, %v1739
      %v2461 = vmul.f32 %v1743, %v1743
      %v2462 = vmul.f32 %v1745, %v1745
      %v2463 = vmul.f32 %v1749, %v1749
      %v2464 = vmul.f32 %v1751, %v1751
      %v2465 = vmul.f32 %v1755, %v1755
      %v2466 = vmul.f32 %v1757, %v1757
      %v2467 = vmul.f32 %v1761, %v1761
      %v2468 = vmul.f32 %v1763, %v1763
      %v2469 = vmul.f32 %v1767, %v1767
      %v2470 = vmul.f32 %v1769, %v1769
      %v2471 = vmul.f32 %v1773, %v1773
      %v2472 = vmul.f32 %v1775, %v1775
      %v2473 = vmul.f32 %v1779, %v1779
      %v2474 = vmul.f32 %v1781, %v1781
      %v2475 = vmul.f32 %v1785, %v1785
      %v2476 = vmul.f32 %v1787, %v1787
      %v2477 = vmul.f32 %v1791, %v1791
      %v2478 = vmul.f32 %v1793, %v1793
      %v2479 = vmul.f32 %v1797, %v1797
      %v2480 = vmul.f32 %v1799, %v1799
      %v2481 = vmul.f32 %v1803, %v1803
      %v2482 = vmul.f32 %v1805, %v1805
      %v2483 = vmul.f32 %v1809, %v1809
      %v2484 = vmul.f32 %v1811, %v1811
      %v2485 = vmul.f32 %v1815, %v1815
      %v2486 = vmul.f32 %v1817, %v1817
      %v2487 = vmul.f32 %v1821, %v1821
      %v2488 = vmul.f32 %v1823, %v1823
      %v2489 = vmul.f32 %v1827, %v1827
      %v2490 = vmul.f32 %v1829, %v1829
      %v2491 = vmul.f32 %v1833, %v1833
      %v2492 = vmul.f32 %v1835, %v1835
      %v2493 = vmul.f32 %v1839, %v1839
      %v2494 = vmul.f32 %v1841, %v1841
      %v2495 = vmul.f32 %v1845, %v1845
      %v2496 = vmul.f32 %v1847, %v1847
      %v2497 = vmul.f32 %v1851, %v1851
      %v2498 = vmul.f32 %v1853, %v1853
      %v2499 = vmul.f32 %v1857, %v1857
      %v2500 = vmul.f32 %v1859, %v1859
      %v2501 = vmul.f32 %v1863, %v1863
      %v2502 = vmul.f32 %v1865, %v1865
      %v2503 = vmul.f32 %v1869, %v1869
      %v2504 = vmul.f32 %v1871, %v1871
      %v2505 = vmul.f32 %v1875, %v1875
      %v2506 = vmul.f32 %v1877, %v1877
      %v2507 = vmul.f32 %v1881, %v1881
      %v2508 = vmul.f32 %v1883, %v1883
      %v2509 = vmul.f32 %v1887, %v1887
      %v2510 = vmul.f32 %v1889, %v1889
      %v2511 = vmul.f32 %v1893, %v1893
      %v2512 = vmul.f32 %v1895, %v1895
      %v2513 = vmul.f32 %v1899, %v1899
      %v2514 = vmul.f32 %v1901, %v1901
      %v2515 = vmul.f32 %v1905, %v1905
      %v2516 = vmul.f32 %v1907, %v1907
      %v2517 = vmul.f32 %v1911, %v1911
      %v2518 = vmul.f32 %v1913, %v1913
      %v2519 = vmul.f32 %v1917, %v1917
      %v2520 = vmul.f32 %v1919, %v1919
      %v2521 = vmul.f32 %v1923, %v1923
      %v2522 = vmul.f32 %v1925, %v1925
      %v2523 = vmul.f32 %v1929, %v1929
      %v2524 = vmul.f32 %v1931, %v1931
      %v2525 = vmul.f32 %v1935, %v1935
      %v2526 = vmul.f32 %v1937, %v1937
      %v2527 = vmul.f32 %v1941, %v1941
      %v2528 = vmul.f32 %v1943, %v1943
      %v2529 = vmul.f32 %v1947, %v1947
      %v2530 = vmul.f32 %v1949, %v1949
      %v2531 = vmul.f32 %v1953, %v1953
      %v2532 = vmul.f32 %v1955, %v1955
      %v2533 = vmul.f32 %v1959, %v1959
      %v2534 = vmul.f32 %v1961, %v1961
      %v2535 = vmul.f32 %v1965, %v1965
      %v2536 = vmul.f32 %v1967, %v1967
      %v2537 = vmul.f32 %v1971, %v1971
      %v2538 = vmul.f32 %v1973, %v1973
      %v2539 = vmul.f32 %v1977, %v1977
      %v2540 = vmul.f32 %v1979, %v1979
      %v2541 = vmul.f32 %v1983, %v1983
      %v2542 = vmul.f32 %v1985, %v1985
      %v2543 = vmul.f32 %v1989, %v1989
      %v2544 = vmul.f32 %v1991, %v1991
      %v2545 = vmul.f32 %v1995, %v1995
      %v2546 = vmul.f32 %v1997, %v1997
      %v2547 = vmul.f32 %v2001, %v2001
      %v2548 = vmul.f32 %v2003, %v2003
      %v2549 = vmul.f32 %v2007, %v2007
      %v2550 = vmul.f32 %v2009, %v2009
      %v2551 = vmul.f32 %v2013, %v2013
      %v2552 = vmul.f32 %v2015, %v2015
      %v2553 = vmul.f32 %v2019, %v2019
      %v2554 = vmul.f32 %v2021, %v2021
      %v2555 = vmul.f32 %v2025, %v2025
      %v2556 = vmul.f32 %v2027, %v2027
      %v2557 = vmul.f32 %v2031, %v2031
      %v2558 = vmul.f32 %v2033, %v2033
      %v2559 = vmul.f32 %v2037, %v2037
      %v2560 = vmul.f32 %v2039, %v2039
      %v2561 = vmul.f32 %v2043, %v2043
      %v2562 = vmul.f32 %v2045, %v2045
      %v2563 = vmul.f32 %v2049, %v2049
      %v2564 = vmul.f32 %v2051, %v2051
      %v2565 = vmul.f32 %v2055, %v2055
      %v2566 = vmul.f32 %v2057, %v2057
      %v2567 = vmul.f32 %v2061, %v2061
      %v2568 = vmul.f32 %v2063, %v2063
      %v2569 = vmul.f32 %v2067, %v2067
      %v2570 = vmul.f32 %v2069, %v2069
      %v2571 = vmul.f32 %v2073, %v2073
      %v2572 = vmul.f32 %v2075, %v2075
      %v2573 = vmul.f32 %v2079, %v2079
      %v2574 = vmul.f32 %v2081, %v2081
      %v2575 = vmul.f32 %v2085, %v2085
      %v2576 = vmul.f32 %v2087, %v2087
      %v2577 = vmul.f32 %v2091, %v2091
      %v2578 = vmul.f32 %v2093, %v2093
      %v2579 = vmul.f32 %v2097, %v2097
      %v2580 = vmul.f32 %v2099, %v2099
      %v2581 = vmul.f32 %v2103, %v2103
      %v2582 = vmul.f32 %v2105, %v2105
      %v2583 = vmul.f32 %v2109, %v2109
      %v2584 = vmul.f32 %v2111, %v2111
      %v2585 = vmul.f32 %v2115, %v2115
      %v2586 = vmul.f32 %v2117, %v2117
      %v2587 = vmul.f32 %v2121, %v2121
      %v2588 = vmul.f32 %v2123, %v2123
      %v2589 = vmul.f32 %v2127, %v2127
      %v2590 = vmul.f32 %v2129, %v2129
      %v2591 = vmul.f32 %v2133, %v2133
      %v2592 = vmul.f32 %v2135, %v2135
      %v2593 = vmul.f32 %v2139, %v2139
      %v2594 = vmul.f32 %v2141, %v2141
      %v2595 = vmul.f32 %v2145, %v2145
      %v2596 = vmul.f32 %v2147, %v2147
      %v2597 = vmul.f32 %v2151, %v2151
      %v2598 = vmul.f32 %v2153, %v2153
      %v2599 = vmul.f32 %v2157, %v2157
      %v2600 = vmul.f32 %v2159, %v2159
      %v2601 = vmul.f32 %v2163, %v2163
      %v2602 = vmul.f32 %v2165, %v2165
      %v2603 = vmul.f32 %v2169, %v2169
      %v2604 = vmul.f32 %v2171, %v2171
      %v2605 = vmul.f32 %v2175, %v2175
      %v2606 = vmul.f32 %v2177, %v2177
      %v2607 = vmul.f32 %v2181, %v2181
      %v2608 = vmul.f32 %v2183, %v2183
      %v2609 = vmul.f32 %v2187, %v2187
      %v2610 = vmul.f32 %v2189, %v2189
      %v2611 = vmul.f32 %v2193, %v2193
      %v2612 = vmul.f32 %v2195, %v2195
      %v2613 = vmul.f32 %v2199, %v2199
      %v2614 = vmul.f32 %v2201, %v2201
      %v2615 = vmul.f32 %v2205, %v2205
      %v2616 = vmul.f32 %v2207, %v2207
      %v2617 = vmul.f32 %v2211, %v2211
      %v2618 = vmul.f32 %v2213, %v2213
      %v2619 = vmul.f32 %v2217, %v2217
      %v2620 = vmul.f32 %v2219, %v2219
      %v2621 = vmul.f32 %v2223, %v2223
      %v2622 = vmul.f32 %v2225, %v2225
      %v2623 = vmul.f32 %v2229, %v2229
      %v2624 = vmul.f32 %v2231, %v2231
      %v2625 = vmul.f32 %v2235, %v2235
      %v2626 = vmul.f32 %v2237, %v2237
      %v2627 = vmul.f32 %v2241, %v2241
      %v2628 = vmul.f32 %v2243, %v2243
      %v2629 = vmul.f32 %v2247, %v2247
      %v2630 = vmul.f32 %v2249, %v2249
      %v2631 = vmul.f32 %v2253, %v2253
      %v2632 = vmul.f32 %v2255, %v2255
      %v2633 = vmul.f32 %v2259, %v2259
      %v2634 = vmul.f32 %v2261, %v2261
      %v2635 = vmul.f32 %v2265, %v2265
      %v2636 = vmul.f32 %v2267, %v2267
      %v2637 = vmul.f32 %v2271, %v2271
      %v2638 = vmul.f32 %v2273, %v2273
      %v2639 = vmul.f32 %v2277, %v2277
      %v2640 = vmul.f32 %v2279, %v2279
      %v2641 = vmul.f32 %v2283, %v2283
      %v2642 = vmul.f32 %v2285, %v2285
      %v2643 = vmul.f32 %v2289, %v2289
      %v2644 = vmul.f32 %v2291, %v2291
      %v2645 = vmul.f32 %v2295, %v2295
      %v2646 = vmul.f32 %v2297, %v2297
      %v2647 = vmul.f32 %v2301, %v2301
      %v2648 = vmul.f32 %v2303, %v2303
      %v2649 = vmul.f32 %v2307, %v2307
      %v2650 = vmul.f32 %v2309, %v2309
      %v2651 = vmul.f32 %v2313, %v2313
      %v2652 = vmul.f32 %v2315, %v2315
      %v2653 = vmul.f32 %v2319, %v2319
      %v2654 = vmul.f32 %v2321, %v2321
      %v2655 = vmul.f32 %v2325, %v2325
      %v2656 = vmul.f32 %v2327, %v2327
      %v2657 = vmul.f32 %v2331, %v2331
      %v2658 = vmul.f32 %v2333, %v2333
      %v2659 = vmul.f32 %v2337, %v2337
      %v2660 = vmul.f32 %v2339, %v2339
      %v2661 = vmul.f32 %v2343, %v2343
      %v2662 = vmul.f32 %v2345, %v2345
      %v2663 = vmul.f32 %v2349, %v2349
      %v2664 = vmul.f32 %v2351, %v2351
      %v2665 = vmul.f32 %v2355, %v2355
      %v2666 = vmul.f32 %v2357, %v2357
      %v2667 = vmul.f32 %v2361, %v2361
      %v2668 = vmul.f32 %v2363, %v2363
      %v2669 = vmul.f32 %v2367, %v2367
      %v2670 = vmul.f32 %v2369, %v2369
      %v2671 = vmul.f32 %v2373, %v2373
      %v2672 = vmul.f32 %v2375, %v2375
      %v2673 = vmul.f32 %v2379, %v2379
      %v2674 = vmul.f32 %v2381, %v2381
      %v2675 = vmul.f32 %v2385, %v2385
      %v2676 = vmul.f32 %v2387, %v2387
      %v2677 = vmul.f32 %v2391, %v2391
      %v2678 = vmul.f32 %v2393, %v2393
      %v2679 = vmul.f32 %v2397, %v2397
      %v2680 = vmul.f32 %v2399, %v2399
      %v2681 = vmul.f32 %v2403, %v2403
      %v2682 = vmul.f32 %v2405, %v2405
      %v2683 = vmul.f32 %v2409, %v2409
      %v2684 = vmul.f32 %v2411, %v2411
      %v2685 = vmul.f32 %v2415, %v2415
      %v2686 = vmul.f32 %v2417, %v2417
      %v2687 = vmul.f32 %v2421, %v2421
      %v2688 = vmul.f32 %v2423, %v2423
      %v2689 = vmul.f32 %v2427, %v2427
      %v2690 = vmul.f32 %v2429, %v2429
      %v2691 = vmul.f32 %v2433, %v2433
      %v2692 = vmul.f32 %v2435, %v2435
      %v2693 = vadd.f32 %v2437, %v2439
      %v2694 = vadd.f32 %v2693, %v2441
      %v2695 = vadd.f32 %v2694, %v2443
      %v2696 = vadd.f32 %v2695, %v2445
      %v2697 = vadd.f32 %v2696, %v2447
      %v2698 = vadd.f32 %v2697, %v2449
      %v2699 = vadd.f32 %v2698, %v2451
      %v2700 = vadd.f32 %v2699, %v2453
      %v2701 = vadd.f32 %v2700, %v2455
      %v2702 = vadd.f32 %v2701, %v2457
      %v2703 = vadd.f32 %v2702, %v2459
      %v2704 = vadd.f32 %v2703, %v2461
      %v2705 = vadd.f32 %v2704, %v2463
      %v2706 = vadd.f32 %v2705, %v2465
      %v2707 = vadd.f32 %v2706, %v2467
      %v2708 = vadd.f32 %v2707, %v2469
      %v2709 = vadd.f32 %v2708, %v2471
      %v2710 = vadd.f32 %v2709, %v2473
      %v2711 = vadd.f32 %v2710, %v2475
      %v2712 = vadd.f32 %v2711, %v2477
      %v2713 = vadd.f32 %v2712, %v2479
      %v2714 = vadd.f32 %v2713, %v2481
      %v2715 = vadd.f32 %v2714, %v2483
      %v2716 = vadd.f32 %v2715, %v2485
      %v2717 = vadd.f32 %v2716, %v2487
      %v2718 = vadd.f32 %v2717, %v2489
      %v2719 = vadd.f32 %v2718, %v2491
      %v2720 = vadd.f32 %v2719, %v2493
      %v2721 = vadd.f32 %v2720, %v2495
      %v2722 = vadd.f32 %v2721, %v2497
      %v2723 = vadd.f32 %v2722, %v2499
      %v2724 = vadd.f32 %v2723, %v2501
      %v2725 = vadd.f32 %v2724, %v2503
      %v2726 = vadd.f32 %v2725, %v2505
      %v2727 = vadd.f32 %v2726, %v2507
      %v2728 = vadd.f32 %v2727, %v2509
      %v2729 = vadd.f32 %v2728, %v2511
      %v2730 = vadd.f32 %v2729, %v2513
      %v2731 = vadd.f32 %v2730, %v2515
      %v2732 = vadd.f32 %v2731, %v2517
      %v2733 = vadd.f32 %v2732, %v2519
      %v2734 = vadd.f32 %v2733, %v2521
      %v2735 = vadd.f32 %v2734, %v2523
      %v2736 = vadd.f32 %v2735, %v2525
      %v2737 = vadd.f32 %v2736, %v2527
      %v2738 = vadd.f32 %v2737, %v2529
      %v2739 = vadd.f32 %v2738, %v2531
      %v2740 = vadd.f32 %v2739, %v2533
      %v2741 = vadd.f32 %v2740, %v2535
      %v2742 = vadd.f32 %v2741, %v2537
      %v2743 = vadd.f32 %v2742, %v2539
      %v2744 = vadd.f32 %v2743, %v2541
      %v2745 = vadd.f32 %v2744, %v2543
      %v2746 = vadd.f32 %v2745, %v2545
      %v2747 = vadd.f32 %v2746, %v2547
      %v2748 = vadd.f32 %v2747, %v2549
      %v2749 = vadd.f32 %v2748, %v2551
      %v2750 = vadd.f32 %v2749, %v2553
      %v2751 = vadd.f32 %v2750, %v2555
      %v2752 = vadd.f32 %v2751, %v2557
      %v2753 = vadd.f32 %v2752, %v2559
      %v2754 = vadd.f32 %v2753, %v2561
      %v2755 = vadd.f32 %v2754, %v2563
      %v2756 = vadd.f32 %v2755, %v2565
      %v2757 = vadd.f32 %v2756, %v2567
      %v2758 = vadd.f32 %v2757, %v2569
      %v2759 = vadd.f32 %v2758, %v2571
      %v2760 = vadd.f32 %v2759, %v2573
      %v2761 = vadd.f32 %v2760, %v2575
      %v2762 = vadd.f32 %v2761, %v2577
      %v2763 = vadd.f32 %v2762, %v2579
      %v2764 = vadd.f32 %v2763, %v2581
      %v2765 = vadd.f32 %v2764, %v2583
      %v2766 = vadd.f32 %v2765, %v2585
      %v2767 = vadd.f32 %v2766, %v2587
      %v2768 = vadd.f32 %v2767, %v2589
      %v2769 = vadd.f32 %v2768, %v2591
      %v2770 = vadd.f32 %v2769, %v2593
      %v2771 = vadd.f32 %v2770, %v2595
      %v2772 = vadd.f32 %v2771, %v2597
      %v2773 = vadd.f32 %v2772, %v2599
      %v2774 = vadd.f32 %v2773, %v2601
      %v2775 = vadd.f32 %v2774, %v2603
      %v2776 = vadd.f32 %v2775, %v2605
      %v2777 = vadd.f32 %v2776, %v2607
      %v2778 = vadd.f32 %v2777, %v2609
      %v2779 = vadd.f32 %v2778, %v2611
      %v2780 = vadd.f32 %v2779, %v2613
      %v2781 = vadd.f32 %v2780, %v2615
      %v2782 = vadd.f32 %v2781, %v2617
      %v2783 = vadd.f32 %v2782, %v2619
      %v2784 = vadd.f32 %v2783, %v2621
      %v2785 = vadd.f32 %v2784, %v2623
      %v2786 = vadd.f32 %v2785, %v2625
      %v2787 = vadd.f32 %v2786, %v2627
      %v2788 = vadd.f32 %v2787, %v2629
      %v2789 = vadd.f32 %v2788, %v2631
      %v2790 = vadd.f32 %v2789, %v2633
      %v2791 = vadd.f32 %v2790, %v2635
      %v2792 = vadd.f32 %v2791, %v2637
      %v2793 = vadd.f32 %v2792, %v2639
      %v2794 = vadd.f32 %v2793, %v2641
      %v2795 = vadd.f32 %v2794, %v2643
      %v2796 = vadd.f32 %v2795, %v2645
      %v2797 = vadd.f32 %v2796, %v2647
      %v2798 = vadd.f32 %v2797, %v2649
      %v2799 = vadd.f32 %v2798, %v2651
      %v2800 = vadd.f32 %v2799, %v2653
      %v2801 = vadd.f32 %v2800, %v2655
      %v2802 = vadd.f32 %v2801, %v2657
      %v2803 = vadd.f32 %v2802, %v2659
      %v2804 = vadd.f32 %v2803, %v2661
      %v2805 = vadd.f32 %v2804, %v2663
      %v2806 = vadd.f32 %v2805, %v2665
      %v2807 = vadd.f32 %v2806, %v2667
      %v2808 = vadd.f32 %v2807, %v2669
      %v2809 = vadd.f32 %v2808, %v2671
      %v2810 = vadd.f32 %v2809, %v2673
      %v2811 = vadd.f32 %v2810, %v2675
      %v2812 = vadd.f32 %v2811, %v2677
      %v2813 = vadd.f32 %v2812, %v2679
      %v2814 = vadd.f32 %v2813, %v2681
      %v2815 = vadd.f32 %v2814, %v2683
      %v2816 = vadd.f32 %v2815, %v2685
      %v2817 = vadd.f32 %v2816, %v2687
      %v2818 = vadd.f32 %v2817, %v2689
      %v2819 = vadd.f32 %v2818, %v2691
      %v2820 = vrot.slane %v2819, 4
      %v2821 = vadd.f32 %v2819, %v2820
      %v2822 = vrot.slane %v2821, 2
      %v2823 = vadd.f32 %v2821, %v2822
      %v2824 = vrot.slane %v2823, 1
      %v2825 = vadd.f32 %v2823, %v2824
      %v2826 = vadd.f32 %v2438, %v2440
      %v2827 = vadd.f32 %v2826, %v2442
      %v2828 = vadd.f32 %v2827, %v2444
      %v2829 = vadd.f32 %v2828, %v2446
      %v2830 = vadd.f32 %v2829, %v2448
      %v2831 = vadd.f32 %v2830, %v2450
      %v2832 = vadd.f32 %v2831, %v2452
      %v2833 = vadd.f32 %v2832, %v2454
      %v2834 = vadd.f32 %v2833, %v2456
      %v2835 = vadd.f32 %v2834, %v2458
      %v2836 = vadd.f32 %v2835, %v2460
      %v2837 = vadd.f32 %v2836, %v2462
      %v2838 = vadd.f32 %v2837, %v2464
      %v2839 = vadd.f32 %v2838, %v2466
      %v2840 = vadd.f32 %v2839, %v2468
      %v2841 = vadd.f32 %v2840, %v2470
      %v2842 = vadd.f32 %v2841, %v2472
      %v2843 = vadd.f32 %v2842, %v2474
      %v2844 = vadd.f32 %v2843, %v2476
      %v2845 = vadd.f32 %v2844, %v2478
      %v2846 = vadd.f32 %v2845, %v2480
      %v2847 = vadd.f32 %v2846, %v2482
      %v2848 = vadd.f32 %v2847, %v2484
      %v2849 = vadd.f32 %v2848, %v2486
      %v2850 = vadd.f32 %v2849, %v2488
      %v2851 = vadd.f32 %v2850, %v2490
      %v2852 = vadd.f32 %v2851, %v2492
      %v2853 = vadd.f32 %v2852, %v2494
      %v2854 = vadd.f32 %v2853, %v2496
      %v2855 = vadd.f32 %v2854, %v2498
      %v2856 = vadd.f32 %v2855, %v2500
      %v2857 = vadd.f32 %v2856, %v2502
      %v2858 = vadd.f32 %v2857, %v2504
      %v2859 = vadd.f32 %v2858, %v2506
      %v2860 = vadd.f32 %v2859, %v2508
      %v2861 = vadd.f32 %v2860, %v2510
      %v2862 = vadd.f32 %v2861, %v2512
      %v2863 = vadd.f32 %v2862, %v2514
      %v2864 = vadd.f32 %v2863, %v2516
      %v2865 = vadd.f32 %v2864, %v2518
      %v2866 = vadd.f32 %v2865, %v2520
      %v2867 = vadd.f32 %v2866, %v2522
      %v2868 = vadd.f32 %v2867, %v2524
      %v2869 = vadd.f32 %v2868, %v2526
      %v2870 = vadd.f32 %v2869, %v2528
      %v2871 = vadd.f32 %v2870, %v2530
      %v2872 = vadd.f32 %v2871, %v2532
      %v2873 = vadd.f32 %v2872, %v2534
      %v2874 = vadd.f32 %v2873, %v2536
      %v2875 = vadd.f32 %v2874, %v2538
      %v2876 = vadd.f32 %v2875, %v2540
      %v2877 = vadd.f32 %v2876, %v2542
      %v2878 = vadd.f32 %v2877, %v2544
      %v2879 = vadd.f32 %v2878, %v2546
      %v2880 = vadd.f32 %v2879, %v2548
      %v2881 = vadd.f32 %v2880, %v2550
      %v2882 = vadd.f32 %v2881, %v2552
      %v2883 = vadd.f32 %v2882, %v2554
      %v2884 = vadd.f32 %v2883, %v2556
      %v2885 = vadd.f32 %v2884, %v2558
      %v2886 = vadd.f32 %v2885, %v2560
      %v2887 = vadd.f32 %v2886, %v2562
      %v2888 = vadd.f32 %v2887, %v2564
      %v2889 = vadd.f32 %v2888, %v2566
      %v2890 = vadd.f32 %v2889, %v2568
      %v2891 = vadd.f32 %v2890, %v2570
      %v2892 = vadd.f32 %v2891, %v2572
      %v2893 = vadd.f32 %v2892, %v2574
      %v2894 = vadd.f32 %v2893, %v2576
      %v2895 = vadd.f32 %v2894, %v2578
      %v2896 = vadd.f32 %v2895, %v2580
      %v2897 = vadd.f32 %v2896, %v2582
      %v2898 = vadd.f32 %v2897, %v2584
      %v2899 = vadd.f32 %v2898, %v2586
      %v2900 = vadd.f32 %v2899, %v2588
      %v2901 = vadd.f32 %v2900, %v2590
      %v2902 = vadd.f32 %v2901, %v2592
      %v2903 = vadd.f32 %v2902, %v2594
      %v2904 = vadd.f32 %v2903, %v2596
      %v2905 = vadd.f32 %v2904, %v2598
      %v2906 = vadd.f32 %v2905, %v2600
      %v2907 = vadd.f32 %v2906, %v2602
      %v2908 = vadd.f32 %v2907, %v2604
      %v2909 = vadd.f32 %v2908, %v2606
      %v2910 = vadd.f32 %v2909, %v2608
      %v2911 = vadd.f32 %v2910, %v2610
      %v2912 = vadd.f32 %v2911, %v2612
      %v2913 = vadd.f32 %v2912, %v2614
      %v2914 = vadd.f32 %v2913, %v2616
      %v2915 = vadd.f32 %v2914, %v2618
      %v2916 = vadd.f32 %v2915, %v2620
      %v2917 = vadd.f32 %v2916, %v2622
      %v2918 = vadd.f32 %v2917, %v2624
      %v2919 = vadd.f32 %v2918, %v2626
      %v2920 = vadd.f32 %v2919, %v2628
      %v2921 = vadd.f32 %v2920, %v2630
      %v2922 = vadd.f32 %v2921, %v2632
      %v2923 = vadd.f32 %v2922, %v2634
      %v2924 = vadd.f32 %v2923, %v2636
      %v2925 = vadd.f32 %v2924, %v2638
      %v2926 = vadd.f32 %v2925, %v2640
      %v2927 = vadd.f32 %v2926, %v2642
      %v2928 = vadd.f32 %v2927, %v2644
      %v2929 = vadd.f32 %v2928, %v2646
      %v2930 = vadd.f32 %v2929, %v2648
      %v2931 = vadd.f32 %v2930, %v2650
      %v2932 = vadd.f32 %v2931, %v2652
      %v2933 = vadd.f32 %v2932, %v2654
      %v2934 = vadd.f32 %v2933, %v2656
      %v2935 = vadd.f32 %v2934, %v2658
      %v2936 = vadd.f32 %v2935, %v2660
      %v2937 = vadd.f32 %v2936, %v2662
      %v2938 = vadd.f32 %v2937, %v2664
      %v2939 = vadd.f32 %v2938, %v2666
      %v2940 = vadd.f32 %v2939, %v2668
      %v2941 = vadd.f32 %v2940, %v2670
      %v2942 = vadd.f32 %v2941, %v2672
      %v2943 = vadd.f32 %v2942, %v2674
      %v2944 = vadd.f32 %v2943, %v2676
      %v2945 = vadd.f32 %v2944, %v2678
      %v2946 = vadd.f32 %v2945, %v2680
      %v2947 = vadd.f32 %v2946, %v2682
      %v2948 = vadd.f32 %v2947, %v2684
      %v2949 = vadd.f32 %v2948, %v2686
      %v2950 = vadd.f32 %v2949, %v2688
      %v2951 = vadd.f32 %v2950, %v2690
      %v2952 = vadd.f32 %v2951, %v2692
      %v2953 = vrot.slane %v2952, 4
      %v2954 = vadd.f32 %v2952, %v2953
      %v2955 = vrot.slane %v2954, 2
      %v2956 = vadd.f32 %v2954, %v2955
      %v2957 = vrot.slane %v2956, 1
      %v2958 = vadd.f32 %v2956, %v2957
      %v2959 = vmax.f32 %v2825, 1e-24
      %v2960 = vmax.f32 %v2958, 1e-24
      %v2961 = vrsqrt.pop %v2959
      %v2962 = vrsqrt.pop %v2960
      %v2963 = vmax.f32 %v1671, 0.0
      %v2964 = vmax.f32 %v1673, 0.0
      %v2965 = vmax.f32 %v1677, 0.0
      %v2966 = vmax.f32 %v1679, 0.0
      %v2967 = vmax.f32 %v1683, 0.0
      %v2968 = vmax.f32 %v1685, 0.0
      %v2969 = vmax.f32 %v1689, 0.0
      %v2970 = vmax.f32 %v1691, 0.0
      %v2971 = vmax.f32 %v1695, 0.0
      %v2972 = vmax.f32 %v1697, 0.0
      %v2973 = vmax.f32 %v1701, 0.0
      %v2974 = vmax.f32 %v1703, 0.0
      %v2975 = vmax.f32 %v1707, 0.0
      %v2976 = vmax.f32 %v1709, 0.0
      %v2977 = vmax.f32 %v1713, 0.0
      %v2978 = vmax.f32 %v1715, 0.0
      %v2979 = vmax.f32 %v1719, 0.0
      %v2980 = vmax.f32 %v1721, 0.0
      %v2981 = vmax.f32 %v1725, 0.0
      %v2982 = vmax.f32 %v1727, 0.0
      %v2983 = vmax.f32 %v1731, 0.0
      %v2984 = vmax.f32 %v1733, 0.0
      %v2985 = vmax.f32 %v1737, 0.0
      %v2986 = vmax.f32 %v1739, 0.0
      %v2987 = vmax.f32 %v1743, 0.0
      %v2988 = vmax.f32 %v1745, 0.0
      %v2989 = vmax.f32 %v1749, 0.0
      %v2990 = vmax.f32 %v1751, 0.0
      %v2991 = vmax.f32 %v1755, 0.0
      %v2992 = vmax.f32 %v1757, 0.0
      %v2993 = vmax.f32 %v1761, 0.0
      %v2994 = vmax.f32 %v1763, 0.0
      %v2995 = vmax.f32 %v1767, 0.0
      %v2996 = vmax.f32 %v1769, 0.0
      %v2997 = vmax.f32 %v1773, 0.0
      %v2998 = vmax.f32 %v1775, 0.0
      %v2999 = vmax.f32 %v1779, 0.0
      %v3000 = vmax.f32 %v1781, 0.0
      %v3001 = vmax.f32 %v1785, 0.0
      %v3002 = vmax.f32 %v1787, 0.0
      %v3003 = vmax.f32 %v1791, 0.0
      %v3004 = vmax.f32 %v1793, 0.0
      %v3005 = vmax.f32 %v1797, 0.0
      %v3006 = vmax.f32 %v1799, 0.0
      %v3007 = vmax.f32 %v1803, 0.0
      %v3008 = vmax.f32 %v1805, 0.0
      %v3009 = vmax.f32 %v1809, 0.0
      %v3010 = vmax.f32 %v1811, 0.0
      %v3011 = vmax.f32 %v1815, 0.0
      %v3012 = vmax.f32 %v1817, 0.0
      %v3013 = vmax.f32 %v1821, 0.0
      %v3014 = vmax.f32 %v1823, 0.0
      %v3015 = vmax.f32 %v1827, 0.0
      %v3016 = vmax.f32 %v1829, 0.0
      %v3017 = vmax.f32 %v1833, 0.0
      %v3018 = vmax.f32 %v1835, 0.0
      %v3019 = vmax.f32 %v1839, 0.0
      %v3020 = vmax.f32 %v1841, 0.0
      %v3021 = vmax.f32 %v1845, 0.0
      %v3022 = vmax.f32 %v1847, 0.0
      %v3023 = vmax.f32 %v1851, 0.0
      %v3024 = vmax.f32 %v1853, 0.0
      %v3025 = vmax.f32 %v1857, 0.0
      %v3026 = vmax.f32 %v1859, 0.0
      %v3027 = vmax.f32 %v1863, 0.0
      %v3028 = vmax.f32 %v1865, 0.0
      %v3029 = vmax.f32 %v1869, 0.0
      %v3030 = vmax.f32 %v1871, 0.0
      %v3031 = vmax.f32 %v1875, 0.0
      %v3032 = vmax.f32 %v1877, 0.0
      %v3033 = vmax.f32 %v1881, 0.0
      %v3034 = vmax.f32 %v1883, 0.0
      %v3035 = vmax.f32 %v1887, 0.0
      %v3036 = vmax.f32 %v1889, 0.0
      %v3037 = vmax.f32 %v1893, 0.0
      %v3038 = vmax.f32 %v1895, 0.0
      %v3039 = vmax.f32 %v1899, 0.0
      %v3040 = vmax.f32 %v1901, 0.0
      %v3041 = vmax.f32 %v1905, 0.0
      %v3042 = vmax.f32 %v1907, 0.0
      %v3043 = vmax.f32 %v1911, 0.0
      %v3044 = vmax.f32 %v1913, 0.0
      %v3045 = vmax.f32 %v1917, 0.0
      %v3046 = vmax.f32 %v1919, 0.0
      %v3047 = vmax.f32 %v1923, 0.0
      %v3048 = vmax.f32 %v1925, 0.0
      %v3049 = vmax.f32 %v1929, 0.0
      %v3050 = vmax.f32 %v1931, 0.0
      %v3051 = vmax.f32 %v1935, 0.0
      %v3052 = vmax.f32 %v1937, 0.0
      %v3053 = vmax.f32 %v1941, 0.0
      %v3054 = vmax.f32 %v1943, 0.0
      %v3055 = vmax.f32 %v1947, 0.0
      %v3056 = vmax.f32 %v1949, 0.0
      %v3057 = vmax.f32 %v1953, 0.0
      %v3058 = vmax.f32 %v1955, 0.0
      %v3059 = vmax.f32 %v1959, 0.0
      %v3060 = vmax.f32 %v1961, 0.0
      %v3061 = vmax.f32 %v1965, 0.0
      %v3062 = vmax.f32 %v1967, 0.0
      %v3063 = vmax.f32 %v1971, 0.0
      %v3064 = vmax.f32 %v1973, 0.0
      %v3065 = vmax.f32 %v1977, 0.0
      %v3066 = vmax.f32 %v1979, 0.0
      %v3067 = vmax.f32 %v1983, 0.0
      %v3068 = vmax.f32 %v1985, 0.0
      %v3069 = vmax.f32 %v1989, 0.0
      %v3070 = vmax.f32 %v1991, 0.0
      %v3071 = vmax.f32 %v1995, 0.0
      %v3072 = vmax.f32 %v1997, 0.0
      %v3073 = vmax.f32 %v2001, 0.0
      %v3074 = vmax.f32 %v2003, 0.0
      %v3075 = vmax.f32 %v2007, 0.0
      %v3076 = vmax.f32 %v2009, 0.0
      %v3077 = vmax.f32 %v2013, 0.0
      %v3078 = vmax.f32 %v2015, 0.0
      %v3079 = vmax.f32 %v2019, 0.0
      %v3080 = vmax.f32 %v2021, 0.0
      %v3081 = vmax.f32 %v2025, 0.0
      %v3082 = vmax.f32 %v2027, 0.0
      %v3083 = vmax.f32 %v2031, 0.0
      %v3084 = vmax.f32 %v2033, 0.0
      %v3085 = vmax.f32 %v2037, 0.0
      %v3086 = vmax.f32 %v2039, 0.0
      %v3087 = vmax.f32 %v2043, 0.0
      %v3088 = vmax.f32 %v2045, 0.0
      %v3089 = vmax.f32 %v2049, 0.0
      %v3090 = vmax.f32 %v2051, 0.0
      %v3091 = vmax.f32 %v2055, 0.0
      %v3092 = vmax.f32 %v2057, 0.0
      %v3093 = vmax.f32 %v2061, 0.0
      %v3094 = vmax.f32 %v2063, 0.0
      %v3095 = vmax.f32 %v2067, 0.0
      %v3096 = vmax.f32 %v2069, 0.0
      %v3097 = vmax.f32 %v2073, 0.0
      %v3098 = vmax.f32 %v2075, 0.0
      %v3099 = vmax.f32 %v2079, 0.0
      %v3100 = vmax.f32 %v2081, 0.0
      %v3101 = vmax.f32 %v2085, 0.0
      %v3102 = vmax.f32 %v2087, 0.0
      %v3103 = vmax.f32 %v2091, 0.0
      %v3104 = vmax.f32 %v2093, 0.0
      %v3105 = vmax.f32 %v2097, 0.0
      %v3106 = vmax.f32 %v2099, 0.0
      %v3107 = vmax.f32 %v2103, 0.0
      %v3108 = vmax.f32 %v2105, 0.0
      %v3109 = vmax.f32 %v2109, 0.0
      %v3110 = vmax.f32 %v2111, 0.0
      %v3111 = vmax.f32 %v2115, 0.0
      %v3112 = vmax.f32 %v2117, 0.0
      %v3113 = vmax.f32 %v2121, 0.0
      %v3114 = vmax.f32 %v2123, 0.0
      %v3115 = vmax.f32 %v2127, 0.0
      %v3116 = vmax.f32 %v2129, 0.0
      %v3117 = vmax.f32 %v2133, 0.0
      %v3118 = vmax.f32 %v2135, 0.0
      %v3119 = vmax.f32 %v2139, 0.0
      %v3120 = vmax.f32 %v2141, 0.0
      %v3121 = vmax.f32 %v2145, 0.0
      %v3122 = vmax.f32 %v2147, 0.0
      %v3123 = vmax.f32 %v2151, 0.0
      %v3124 = vmax.f32 %v2153, 0.0
      %v3125 = vmax.f32 %v2157, 0.0
      %v3126 = vmax.f32 %v2159, 0.0
      %v3127 = vmax.f32 %v2163, 0.0
      %v3128 = vmax.f32 %v2165, 0.0
      %v3129 = vmax.f32 %v2169, 0.0
      %v3130 = vmax.f32 %v2171, 0.0
      %v3131 = vmax.f32 %v2175, 0.0
      %v3132 = vmax.f32 %v2177, 0.0
      %v3133 = vmax.f32 %v2181, 0.0
      %v3134 = vmax.f32 %v2183, 0.0
      %v3135 = vmax.f32 %v2187, 0.0
      %v3136 = vmax.f32 %v2189, 0.0
      %v3137 = vmax.f32 %v2193, 0.0
      %v3138 = vmax.f32 %v2195, 0.0
      %v3139 = vmax.f32 %v2199, 0.0
      %v3140 = vmax.f32 %v2201, 0.0
      %v3141 = vmax.f32 %v2205, 0.0
      %v3142 = vmax.f32 %v2207, 0.0
      %v3143 = vmax.f32 %v2211, 0.0
      %v3144 = vmax.f32 %v2213, 0.0
      %v3145 = vmax.f32 %v2217, 0.0
      %v3146 = vmax.f32 %v2219, 0.0
      %v3147 = vmax.f32 %v2223, 0.0
      %v3148 = vmax.f32 %v2225, 0.0
      %v3149 = vmax.f32 %v2229, 0.0
      %v3150 = vmax.f32 %v2231, 0.0
      %v3151 = vmax.f32 %v2235, 0.0
      %v3152 = vmax.f32 %v2237, 0.0
      %v3153 = vmax.f32 %v2241, 0.0
      %v3154 = vmax.f32 %v2243, 0.0
      %v3155 = vmax.f32 %v2247, 0.0
      %v3156 = vmax.f32 %v2249, 0.0
      %v3157 = vmax.f32 %v2253, 0.0
      %v3158 = vmax.f32 %v2255, 0.0
      %v3159 = vmax.f32 %v2259, 0.0
      %v3160 = vmax.f32 %v2261, 0.0
      %v3161 = vmax.f32 %v2265, 0.0
      %v3162 = vmax.f32 %v2267, 0.0
      %v3163 = vmax.f32 %v2271, 0.0
      %v3164 = vmax.f32 %v2273, 0.0
      %v3165 = vmax.f32 %v2277, 0.0
      %v3166 = vmax.f32 %v2279, 0.0
      %v3167 = vmax.f32 %v2283, 0.0
      %v3168 = vmax.f32 %v2285, 0.0
      %v3169 = vmax.f32 %v2289, 0.0
      %v3170 = vmax.f32 %v2291, 0.0
      %v3171 = vmax.f32 %v2295, 0.0
      %v3172 = vmax.f32 %v2297, 0.0
      %v3173 = vmax.f32 %v2301, 0.0
      %v3174 = vmax.f32 %v2303, 0.0
      %v3175 = vmax.f32 %v2307, 0.0
      %v3176 = vmax.f32 %v2309, 0.0
      %v3177 = vmax.f32 %v2313, 0.0
      %v3178 = vmax.f32 %v2315, 0.0
      %v3179 = vmax.f32 %v2319, 0.0
      %v3180 = vmax.f32 %v2321, 0.0
      %v3181 = vmax.f32 %v2325, 0.0
      %v3182 = vmax.f32 %v2327, 0.0
      %v3183 = vmax.f32 %v2331, 0.0
      %v3184 = vmax.f32 %v2333, 0.0
      %v3185 = vmax.f32 %v2337, 0.0
      %v3186 = vmax.f32 %v2339, 0.0
      %v3187 = vmax.f32 %v2343, 0.0
      %v3188 = vmax.f32 %v2345, 0.0
      %v3189 = vmax.f32 %v2349, 0.0
      %v3190 = vmax.f32 %v2351, 0.0
      %v3191 = vmax.f32 %v2355, 0.0
      %v3192 = vmax.f32 %v2357, 0.0
      %v3193 = vmax.f32 %v2361, 0.0
      %v3194 = vmax.f32 %v2363, 0.0
      %v3195 = vmax.f32 %v2367, 0.0
      %v3196 = vmax.f32 %v2369, 0.0
      %v3197 = vmax.f32 %v2373, 0.0
      %v3198 = vmax.f32 %v2375, 0.0
      %v3199 = vmax.f32 %v2379, 0.0
      %v3200 = vmax.f32 %v2381, 0.0
      %v3201 = vmax.f32 %v2385, 0.0
      %v3202 = vmax.f32 %v2387, 0.0
      %v3203 = vmax.f32 %v2391, 0.0
      %v3204 = vmax.f32 %v2393, 0.0
      %v3205 = vmax.f32 %v2397, 0.0
      %v3206 = vmax.f32 %v2399, 0.0
      %v3207 = vmax.f32 %v2403, 0.0
      %v3208 = vmax.f32 %v2405, 0.0
      %v3209 = vmax.f32 %v2409, 0.0
      %v3210 = vmax.f32 %v2411, 0.0
      %v3211 = vmax.f32 %v2415, 0.0
      %v3212 = vmax.f32 %v2417, 0.0
      %v3213 = vmax.f32 %v2421, 0.0
      %v3214 = vmax.f32 %v2423, 0.0
      %v3215 = vmax.f32 %v2427, 0.0
      %v3216 = vmax.f32 %v2429, 0.0
      %v3217 = vmax.f32 %v2433, 0.0
      %v3218 = vmax.f32 %v2435, 0.0
      %v3219 = vld [vmem:[%s3] sm:$0xff]
      %v3220 = vld [vmem:[#allocation2] sm:$0x1]
      %3222 = vset.pattern.permute.xlu0 0
      %3223 = vperm.xlu0 %3222, %v3220
      %v3224 = vpop.permute.xlu0 %3223
      %v3226 = vlaneseq
      %v3227 = vshrl.u32 %v3226, 7
      %v3228 = vsub.s32 0, %v3227
      %v3229 = vrot.slane %v3224, %v3228
      %v3231 = vlaneseq
      %v3232 = vshrl.u32 %v3231, 7
      %v3233 = vsub.s32 0, %v3232
      %v3234 = vrot.slane %v3219, %v3233
      %v3235 = vlaneseq
      %v3236 = vshrl.u32 %v3235, 7
      %v3237 = vsub.s32 1, %v3236
      %v3238 = vrot.slane %v3219, %v3237
      %v3239 = vlaneseq
      %v3240 = vshrl.u32 %v3239, 7
      %v3241 = vsub.s32 2, %v3240
      %v3242 = vrot.slane %v3219, %v3241
      %v3243 = vlaneseq
      %v3244 = vshrl.u32 %v3243, 7
      %v3245 = vsub.s32 3, %v3244
      %v3246 = vrot.slane %v3219, %v3245
      %v3247 = vlaneseq
      %v3248 = vshrl.u32 %v3247, 7
      %v3249 = vsub.s32 4, %v3248
      %v3250 = vrot.slane %v3219, %v3249
      %v3251 = vlaneseq
      %v3252 = vshrl.u32 %v3251, 7
      %v3253 = vsub.s32 5, %v3252
      %v3254 = vrot.slane %v3219, %v3253
      %v3255 = vlaneseq
      %v3256 = vshrl.u32 %v3255, 7
      %v3257 = vsub.s32 6, %v3256
      %v3258 = vrot.slane %v3219, %v3257
      %v3259 = vlaneseq
      %v3260 = vshrl.u32 %v3259, 7
      %v3261 = vsub.s32 7, %v3260
      %v3262 = vrot.slane %v3219, %v3261
      %3271 = vmatprep.subr.mxu0 %v2994
      %3272 = vmatpush1.msra.mxu0 %v2993
      %3273 = vmatprep.subr.mxu0 %v2992
      %3274 = vmatpush1.msra.mxu0 %v2991
      %3275 = vmatprep.subr.mxu0 %v2990
      %3276 = vmatpush1.msra.mxu0 %v2989
      %3277 = vmatprep.subr.mxu0 %v2988
      %3278 = vmatpush1.msra.mxu0 %v2987
      %3279 = vmatprep.subr.mxu0 %v2986
      %3280 = vmatpush1.msra.mxu0 %v2985
      %3281 = vmatprep.subr.mxu0 %v2984
      %3282 = vmatpush1.msra.mxu0 %v2983
      %3283 = vmatprep.subr.mxu0 %v2982
      %3284 = vmatpush1.msra.mxu0 %v2981
      %3285 = vmatprep.subr.mxu0 %v2980
      %3286 = vmatpush1.msra.mxu0 %v2979
      %3287 = vmatprep.subr.mxu0 %v2978
      %3288 = vmatpush1.msra.mxu0 %v2977
      %3289 = vmatprep.subr.mxu0 %v2976
      %3290 = vmatpush1.msra.mxu0 %v2975
      %3291 = vmatprep.subr.mxu0 %v2974
      %3292 = vmatpush1.msra.mxu0 %v2973
      %3293 = vmatprep.subr.mxu0 %v2972
      %3294 = vmatpush1.msra.mxu0 %v2971
      %3295 = vmatprep.subr.mxu0 %v2970
      %3296 = vmatpush1.msra.mxu0 %v2969
      %3297 = vmatprep.subr.mxu0 %v2968
      %3298 = vmatpush1.msra.mxu0 %v2967
      %3299 = vmatprep.subr.mxu0 %v2966
      %3300 = vmatpush1.msra.mxu0 %v2965
      %3301 = vmatprep.subr.mxu0 %v2964
      %3302 = vmatpush1.msra.mxu0 %v2963
      %3303 = vmatprep.subr.mxu0 %v3026
      %3304 = vmatpush2.msra.mxu0 %v3025
      %3305 = vmatprep.subr.mxu0 %v3024
      %3306 = vmatpush2.msra.mxu0 %v3023
      %3307 = vmatprep.subr.mxu0 %v3022
      %3308 = vmatpush2.msra.mxu0 %v3021
      %3309 = vmatprep.subr.mxu0 %v3020
      %3310 = vmatpush2.msra.mxu0 %v3019
      %3311 = vmatprep.subr.mxu0 %v3018
      %3312 = vmatpush2.msra.mxu0 %v3017
      %3313 = vmatprep.subr.mxu0 %v3016
      %3314 = vmatpush2.msra.mxu0 %v3015
      %3315 = vmatprep.subr.mxu0 %v3014
      %3316 = vmatpush2.msra.mxu0 %v3013
      %3317 = vmatprep.subr.mxu0 %v3012
      %3318 = vmatpush2.msra.mxu0 %v3011
      %3319 = vmatprep.subr.mxu0 %v3010
      %3320 = vmatpush2.msra.mxu0 %v3009
      %3321 = vmatprep.subr.mxu0 %v3008
      %3322 = vmatpush2.msra.mxu0 %v3007
      %3323 = vmatprep.subr.mxu0 %v3006
      %3324 = vmatpush2.msra.mxu0 %v3005
      %3325 = vmatprep.subr.mxu0 %v3004
      %3326 = vmatpush2.msra.mxu0 %v3003
      %3327 = vmatprep.subr.mxu0 %v3002
      %3328 = vmatpush2.msra.mxu0 %v3001
      %3329 = vmatprep.subr.mxu0 %v3000
      %3330 = vmatpush2.msra.mxu0 %v2999
      %3331 = vmatprep.subr.mxu0 %v2998
      %3332 = vmatpush2.msra.mxu0 %v2997
      %3333 = vmatprep.subr.mxu0 %v2996
      %3334 = vmatpush2.msra.mxu0 %v2995
      %3335 = vmatprep.mubr.f32.mxu0 %v3238
      %3336 = vmatmul.mubr.f32.gmra.mxu0 %v3234
      %v3337 = vpop.f32.mrf.mxu0
      %v3338 = vadd.f32 %v3229, %v3337
      %v3339 = vpop.f32.mrf.mxu0
      %v3340 = vadd.f32 %v3229, %v3339
      %3341 = vdwg.mxu0
      %3342 = vmatprep.subr.mxu0 %v3058
      %3343 = vmatpush1.msra.mxu0 %v3057
      %3344 = vmatprep.subr.mxu0 %v3056
      %3345 = vmatpush1.msra.mxu0 %v3055
      %3346 = vmatprep.subr.mxu0 %v3054
      %3347 = vmatpush1.msra.mxu0 %v3053
      %3348 = vmatprep.subr.mxu0 %v3052
      %3349 = vmatpush1.msra.mxu0 %v3051
      %3350 = vmatprep.subr.mxu0 %v3050
      %3351 = vmatpush1.msra.mxu0 %v3049
      %3352 = vmatprep.subr.mxu0 %v3048
      %3353 = vmatpush1.msra.mxu0 %v3047
      %3354 = vmatprep.subr.mxu0 %v3046
      %3355 = vmatpush1.msra.mxu0 %v3045
      %3356 = vmatprep.subr.mxu0 %v3044
      %3357 = vmatpush1.msra.mxu0 %v3043
      %3358 = vmatprep.subr.mxu0 %v3042
      %3359 = vmatpush1.msra.mxu0 %v3041
      %3360 = vmatprep.subr.mxu0 %v3040
      %3361 = vmatpush1.msra.mxu0 %v3039
      %3362 = vmatprep.subr.mxu0 %v3038
      %3363 = vmatpush1.msra.mxu0 %v3037
      %3364 = vmatprep.subr.mxu0 %v3036
      %3365 = vmatpush1.msra.mxu0 %v3035
      %3366 = vmatprep.subr.mxu0 %v3034
      %3367 = vmatpush1.msra.mxu0 %v3033
      %3368 = vmatprep.subr.mxu0 %v3032
      %3369 = vmatpush1.msra.mxu0 %v3031
      %3370 = vmatprep.subr.mxu0 %v3030
      %3371 = vmatpush1.msra.mxu0 %v3029
      %3372 = vmatprep.subr.mxu0 %v3028
      %3373 = vmatpush1.msra.mxu0 %v3027
      %3374 = vmatprep.subr.mxu0 %v3090
      %3375 = vmatpush2.msra.mxu0 %v3089
      %3376 = vmatprep.subr.mxu0 %v3088
      %3377 = vmatpush2.msra.mxu0 %v3087
      %3378 = vmatprep.subr.mxu0 %v3086
      %3379 = vmatpush2.msra.mxu0 %v3085
      %3380 = vmatprep.subr.mxu0 %v3084
      %3381 = vmatpush2.msra.mxu0 %v3083
      %3382 = vmatprep.subr.mxu0 %v3082
      %3383 = vmatpush2.msra.mxu0 %v3081
      %3384 = vmatprep.subr.mxu0 %v3080
      %3385 = vmatpush2.msra.mxu0 %v3079
      %3386 = vmatprep.subr.mxu0 %v3078
      %3387 = vmatpush2.msra.mxu0 %v3077
      %3388 = vmatprep.subr.mxu0 %v3076
      %3389 = vmatpush2.msra.mxu0 %v3075
      %3390 = vmatprep.subr.mxu0 %v3074
      %3391 = vmatpush2.msra.mxu0 %v3073
      %3392 = vmatprep.subr.mxu0 %v3072
      %3393 = vmatpush2.msra.mxu0 %v3071
      %3394 = vmatprep.subr.mxu0 %v3070
      %3395 = vmatpush2.msra.mxu0 %v3069
      %3396 = vmatprep.subr.mxu0 %v3068
      %3397 = vmatpush2.msra.mxu0 %v3067
      %3398 = vmatprep.subr.mxu0 %v3066
      %3399 = vmatpush2.msra.mxu0 %v3065
      %3400 = vmatprep.subr.mxu0 %v3064
      %3401 = vmatpush2.msra.mxu0 %v3063
      %3402 = vmatprep.subr.mxu0 %v3062
      %3403 = vmatpush2.msra.mxu0 %v3061
      %3404 = vmatprep.subr.mxu0 %v3060
      %3405 = vmatpush2.msra.mxu0 %v3059
      %3406 = vmatprep.mubr.f32.mxu0 %v3246
      %3407 = vmatmul.mubr.f32.gmra.mxu0 %v3242
      %v3408 = vpop.f32.mrf.mxu0
      %v3409 = vadd.f32 %v3338, %v3408
      %v3410 = vpop.f32.mrf.mxu0
      %v3411 = vadd.f32 %v3340, %v3410
      %3412 = vdwg.mxu0
      %3413 = vmatprep.subr.mxu0 %v3122
      %3414 = vmatpush1.msra.mxu0 %v3121
      %3415 = vmatprep.subr.mxu0 %v3120
      %3416 = vmatpush1.msra.mxu0 %v3119
      %3417 = vmatprep.subr.mxu0 %v3118
      %3418 = vmatpush1.msra.mxu0 %v3117
      %3419 = vmatprep.subr.mxu0 %v3116
      %3420 = vmatpush1.msra.mxu0 %v3115
      %3421 = vmatprep.subr.mxu0 %v3114
      %3422 = vmatpush1.msra.mxu0 %v3113
      %3423 = vmatprep.subr.mxu0 %v3112
      %3424 = vmatpush1.msra.mxu0 %v3111
      %3425 = vmatprep.subr.mxu0 %v3110
      %3426 = vmatpush1.msra.mxu0 %v3109
      %3427 = vmatprep.subr.mxu0 %v3108
      %3428 = vmatpush1.msra.mxu0 %v3107
      %3429 = vmatprep.subr.mxu0 %v3106
      %3430 = vmatpush1.msra.mxu0 %v3105
      %3431 = vmatprep.subr.mxu0 %v3104
      %3432 = vmatpush1.msra.mxu0 %v3103
      %3433 = vmatprep.subr.mxu0 %v3102
      %3434 = vmatpush1.msra.mxu0 %v3101
      %3435 = vmatprep.subr.mxu0 %v3100
      %3436 = vmatpush1.msra.mxu0 %v3099
      %3437 = vmatprep.subr.mxu0 %v3098
      %3438 = vmatpush1.msra.mxu0 %v3097
      %3439 = vmatprep.subr.mxu0 %v3096
      %3440 = vmatpush1.msra.mxu0 %v3095
      %3441 = vmatprep.subr.mxu0 %v3094
      %3442 = vmatpush1.msra.mxu0 %v3093
      %3443 = vmatprep.subr.mxu0 %v3092
      %3444 = vmatpush1.msra.mxu0 %v3091
      %3445 = vmatprep.subr.mxu0 %v3154
      %3446 = vmatpush2.msra.mxu0 %v3153
      %3447 = vmatprep.subr.mxu0 %v3152
      %3448 = vmatpush2.msra.mxu0 %v3151
      %3449 = vmatprep.subr.mxu0 %v3150
      %3450 = vmatpush2.msra.mxu0 %v3149
      %3451 = vmatprep.subr.mxu0 %v3148
      %3452 = vmatpush2.msra.mxu0 %v3147
      %3453 = vmatprep.subr.mxu0 %v3146
      %3454 = vmatpush2.msra.mxu0 %v3145
      %3455 = vmatprep.subr.mxu0 %v3144
      %3456 = vmatpush2.msra.mxu0 %v3143
      %3457 = vmatprep.subr.mxu0 %v3142
      %3458 = vmatpush2.msra.mxu0 %v3141
      %3459 = vmatprep.subr.mxu0 %v3140
      %3460 = vmatpush2.msra.mxu0 %v3139
      %3461 = vmatprep.subr.mxu0 %v3138
      %3462 = vmatpush2.msra.mxu0 %v3137
      %3463 = vmatprep.subr.mxu0 %v3136
      %3464 = vmatpush2.msra.mxu0 %v3135
      %3465 = vmatprep.subr.mxu0 %v3134
      %3466 = vmatpush2.msra.mxu0 %v3133
      %3467 = vmatprep.subr.mxu0 %v3132
      %3468 = vmatpush2.msra.mxu0 %v3131
      %3469 = vmatprep.subr.mxu0 %v3130
      %3470 = vmatpush2.msra.mxu0 %v3129
      %3471 = vmatprep.subr.mxu0 %v3128
      %3472 = vmatpush2.msra.mxu0 %v3127
      %3473 = vmatprep.subr.mxu0 %v3126
      %3474 = vmatpush2.msra.mxu0 %v3125
      %3475 = vmatprep.subr.mxu0 %v3124
      %3476 = vmatpush2.msra.mxu0 %v3123
      %3477 = vmatprep.mubr.f32.mxu0 %v3254
      %3478 = vmatmul.mubr.f32.gmra.mxu0 %v3250
      %v3479 = vpop.f32.mrf.mxu0
      %v3480 = vadd.f32 %v3409, %v3479
      %v3481 = vpop.f32.mrf.mxu0
      %v3482 = vadd.f32 %v3411, %v3481
      %3483 = vdwg.mxu0
      %3484 = vmatprep.subr.mxu0 %v3186
      %3485 = vmatpush1.msra.mxu0 %v3185
      %3486 = vmatprep.subr.mxu0 %v3184
      %3487 = vmatpush1.msra.mxu0 %v3183
      %3488 = vmatprep.subr.mxu0 %v3182
      %3489 = vmatpush1.msra.mxu0 %v3181
      %3490 = vmatprep.subr.mxu0 %v3180
      %3491 = vmatpush1.msra.mxu0 %v3179
      %3492 = vmatprep.subr.mxu0 %v3178
      %3493 = vmatpush1.msra.mxu0 %v3177
      %3494 = vmatprep.subr.mxu0 %v3176
      %3495 = vmatpush1.msra.mxu0 %v3175
      %3496 = vmatprep.subr.mxu0 %v3174
      %3497 = vmatpush1.msra.mxu0 %v3173
      %3498 = vmatprep.subr.mxu0 %v3172
      %3499 = vmatpush1.msra.mxu0 %v3171
      %3500 = vmatprep.subr.mxu0 %v3170
      %3501 = vmatpush1.msra.mxu0 %v3169
      %3502 = vmatprep.subr.mxu0 %v3168
      %3503 = vmatpush1.msra.mxu0 %v3167
      %3504 = vmatprep.subr.mxu0 %v3166
      %3505 = vmatpush1.msra.mxu0 %v3165
      %3506 = vmatprep.subr.mxu0 %v3164
      %3507 = vmatpush1.msra.mxu0 %v3163
      %3508 = vmatprep.subr.mxu0 %v3162
      %3509 = vmatpush1.msra.mxu0 %v3161
      %3510 = vmatprep.subr.mxu0 %v3160
      %3511 = vmatpush1.msra.mxu0 %v3159
      %3512 = vmatprep.subr.mxu0 %v3158
      %3513 = vmatpush1.msra.mxu0 %v3157
      %3514 = vmatprep.subr.mxu0 %v3156
      %3515 = vmatpush1.msra.mxu0 %v3155
      %3516 = vmatprep.subr.mxu0 %v3218
      %3517 = vmatpush2.msra.mxu0 %v3217
      %3518 = vmatprep.subr.mxu0 %v3216
      %3519 = vmatpush2.msra.mxu0 %v3215
      %3520 = vmatprep.subr.mxu0 %v3214
      %3521 = vmatpush2.msra.mxu0 %v3213
      %3522 = vmatprep.subr.mxu0 %v3212
      %3523 = vmatpush2.msra.mxu0 %v3211
      %3524 = vmatprep.subr.mxu0 %v3210
      %3525 = vmatpush2.msra.mxu0 %v3209
      %3526 = vmatprep.subr.mxu0 %v3208
      %3527 = vmatpush2.msra.mxu0 %v3207
      %3528 = vmatprep.subr.mxu0 %v3206
      %3529 = vmatpush2.msra.mxu0 %v3205
      %3530 = vmatprep.subr.mxu0 %v3204
      %3531 = vmatpush2.msra.mxu0 %v3203
      %3532 = vmatprep.subr.mxu0 %v3202
      %3533 = vmatpush2.msra.mxu0 %v3201
      %3534 = vmatprep.subr.mxu0 %v3200
      %3535 = vmatpush2.msra.mxu0 %v3199
      %3536 = vmatprep.subr.mxu0 %v3198
      %3537 = vmatpush2.msra.mxu0 %v3197
      %3538 = vmatprep.subr.mxu0 %v3196
      %3539 = vmatpush2.msra.mxu0 %v3195
      %3540 = vmatprep.subr.mxu0 %v3194
      %3541 = vmatpush2.msra.mxu0 %v3193
      %3542 = vmatprep.subr.mxu0 %v3192
      %3543 = vmatpush2.msra.mxu0 %v3191
      %3544 = vmatprep.subr.mxu0 %v3190
      %3545 = vmatpush2.msra.mxu0 %v3189
      %3546 = vmatprep.subr.mxu0 %v3188
      %3547 = vmatpush2.msra.mxu0 %v3187
      %3548 = vmatprep.mubr.f32.mxu0 %v3262
      %3549 = vmatmul.mubr.f32.gmra.mxu0 %v3258
      %v3550 = vpop.f32.mrf.mxu0
      %v3551 = vadd.f32 %v3480, %v3550
      %v3552 = vpop.f32.mrf.mxu0
      %v3553 = vadd.f32 %v3482, %v3552
      %3554 = vdwg.mxu0
      %vm3555 = vcmp.gt.f32.partialorder %v3551, 20.0
      %vm3556 = vcmp.gt.f32.partialorder %v3553, 20.0
      %v3557 = vmin.f32 %v3551, 20.0
      %v3558 = vmin.f32 %v3553, 20.0
      %v3559 = vmul.f32 %v3557, 1.442695
      %v3560 = vpow.pop %v3559
      %v3561 = vmul.f32 %v3558, 1.442695
      %v3562 = vpow.pop %v3561
      %v3563 = vadd.f32 %v3560, 1.0
      %v3564 = vlog2.pop %v3563
      %v3565 = vmul.f32 %v3564, 0.6931472
      %v3566 = vmul.f32 -0.5, %v3560
      %v3567 = vadd.f32 %v3566, 1.0
      %v3568 = vmul.f32 %v3567, %v3560
      %v3569 = vand.u32 2147483647, %v3560
      %vm3570 = vcmp.lt.f32.partialorder %v3569, 0.0004427343
      %v3571 = vsel %vm3570, %v3568, %v3565
      %v3572 = vadd.f32 %v3562, 1.0
      %v3573 = vlog2.pop %v3572
      %v3574 = vmul.f32 %v3573, 0.6931472
      %v3575 = vmul.f32 -0.5, %v3562
      %v3576 = vadd.f32 %v3575, 1.0
      %v3577 = vmul.f32 %v3576, %v3562
      %v3578 = vand.u32 2147483647, %v3562
      %vm3579 = vcmp.lt.f32.partialorder %v3578, 0.0004427343
      %v3580 = vsel %vm3579, %v3577, %v3574
      %v3581 = vsel %vm3555, %v3551, %v3571
      %v3582 = vsel %vm3556, %v3553, %v3580
      %v3583 = vmul.f32 %v3581, %v2961
      %v3584 = vmul.f32 %v3582, %v2962
      %v3585 = vlaneseq
      %v3586 = vshrl.u32 %v3585, 7
      %v3587 = vsub.s32 0, %v3586
      %v3588 = vrot.slane %v3583, %v3587
      %v3589 = vlaneseq
      %v3590 = vshrl.u32 %v3589, 7
      %v3591 = vsub.s32 0, %v3590
      %v3592 = vrot.slane %v3584, %v3591
      %v3593 = vmul.f32 %v1671, %v3588
      %v3594 = vmul.f32 %v1673, %v3592
      %v3595 = vmul.f32 %v1677, %v3588
      %v3596 = vmul.f32 %v1679, %v3592
      %v3597 = vmul.f32 %v1683, %v3588
      %v3598 = vmul.f32 %v1685, %v3592
      %v3599 = vmul.f32 %v1689, %v3588
      %v3600 = vmul.f32 %v1691, %v3592
      %v3601 = vmul.f32 %v1695, %v3588
      %v3602 = vmul.f32 %v1697, %v3592
      %v3603 = vmul.f32 %v1701, %v3588
      %v3604 = vmul.f32 %v1703, %v3592
      %v3605 = vmul.f32 %v1707, %v3588
      %v3606 = vmul.f32 %v1709, %v3592
      %v3607 = vmul.f32 %v1713, %v3588
      %v3608 = vmul.f32 %v1715, %v3592
      %v3609 = vmul.f32 %v1719, %v3588
      %v3610 = vmul.f32 %v1721, %v3592
      %v3611 = vmul.f32 %v1725, %v3588
      %v3612 = vmul.f32 %v1727, %v3592
      %v3613 = vmul.f32 %v1731, %v3588
      %v3614 = vmul.f32 %v1733, %v3592
      %v3615 = vmul.f32 %v1737, %v3588
      %v3616 = vmul.f32 %v1739, %v3592
      %v3617 = vmul.f32 %v1743, %v3588
      %v3618 = vmul.f32 %v1745, %v3592
      %v3619 = vmul.f32 %v1749, %v3588
      %v3620 = vmul.f32 %v1751, %v3592
      %v3621 = vmul.f32 %v1755, %v3588
      %v3622 = vmul.f32 %v1757, %v3592
      %v3623 = vmul.f32 %v1761, %v3588
      %v3624 = vmul.f32 %v1763, %v3592
      %v3625 = vmul.f32 %v1767, %v3588
      %v3626 = vmul.f32 %v1769, %v3592
      %v3627 = vmul.f32 %v1773, %v3588
      %v3628 = vmul.f32 %v1775, %v3592
      %v3629 = vmul.f32 %v1779, %v3588
      %v3630 = vmul.f32 %v1781, %v3592
      %v3631 = vmul.f32 %v1785, %v3588
      %v3632 = vmul.f32 %v1787, %v3592
      %v3633 = vmul.f32 %v1791, %v3588
      %v3634 = vmul.f32 %v1793, %v3592
      %v3635 = vmul.f32 %v1797, %v3588
      %v3636 = vmul.f32 %v1799, %v3592
      %v3637 = vmul.f32 %v1803, %v3588
      %v3638 = vmul.f32 %v1805, %v3592
      %v3639 = vmul.f32 %v1809, %v3588
      %v3640 = vmul.f32 %v1811, %v3592
      %v3641 = vmul.f32 %v1815, %v3588
      %v3642 = vmul.f32 %v1817, %v3592
      %v3643 = vmul.f32 %v1821, %v3588
      %v3644 = vmul.f32 %v1823, %v3592
      %v3645 = vmul.f32 %v1827, %v3588
      %v3646 = vmul.f32 %v1829, %v3592
      %v3647 = vmul.f32 %v1833, %v3588
      %v3648 = vmul.f32 %v1835, %v3592
      %v3649 = vmul.f32 %v1839, %v3588
      %v3650 = vmul.f32 %v1841, %v3592
      %v3651 = vmul.f32 %v1845, %v3588
      %v3652 = vmul.f32 %v1847, %v3592
      %v3653 = vmul.f32 %v1851, %v3588
      %v3654 = vmul.f32 %v1853, %v3592
      %v3655 = vmul.f32 %v1857, %v3588
      %v3656 = vmul.f32 %v1859, %v3592
      %v3657 = vmul.f32 %v1863, %v3588
      %v3658 = vmul.f32 %v1865, %v3592
      %v3659 = vmul.f32 %v1869, %v3588
      %v3660 = vmul.f32 %v1871, %v3592
      %v3661 = vmul.f32 %v1875, %v3588
      %v3662 = vmul.f32 %v1877, %v3592
      %v3663 = vmul.f32 %v1881, %v3588
      %v3664 = vmul.f32 %v1883, %v3592
      %v3665 = vmul.f32 %v1887, %v3588
      %v3666 = vmul.f32 %v1889, %v3592
      %v3667 = vmul.f32 %v1893, %v3588
      %v3668 = vmul.f32 %v1895, %v3592
      %v3669 = vmul.f32 %v1899, %v3588
      %v3670 = vmul.f32 %v1901, %v3592
      %v3671 = vmul.f32 %v1905, %v3588
      %v3672 = vmul.f32 %v1907, %v3592
      %v3673 = vmul.f32 %v1911, %v3588
      %v3674 = vmul.f32 %v1913, %v3592
      %v3675 = vmul.f32 %v1917, %v3588
      %v3676 = vmul.f32 %v1919, %v3592
      %v3677 = vmul.f32 %v1923, %v3588
      %v3678 = vmul.f32 %v1925, %v3592
      %v3679 = vmul.f32 %v1929, %v3588
      %v3680 = vmul.f32 %v1931, %v3592
      %v3681 = vmul.f32 %v1935, %v3588
      %v3682 = vmul.f32 %v1937, %v3592
      %v3683 = vmul.f32 %v1941, %v3588
      %v3684 = vmul.f32 %v1943, %v3592
      %v3685 = vmul.f32 %v1947, %v3588
      %v3686 = vmul.f32 %v1949, %v3592
      %v3687 = vmul.f32 %v1953, %v3588
      %v3688 = vmul.f32 %v1955, %v3592
      %v3689 = vmul.f32 %v1959, %v3588
      %v3690 = vmul.f32 %v1961, %v3592
      %v3691 = vmul.f32 %v1965, %v3588
      %v3692 = vmul.f32 %v1967, %v3592
      %v3693 = vmul.f32 %v1971, %v3588
      %v3694 = vmul.f32 %v1973, %v3592
      %v3695 = vmul.f32 %v1977, %v3588
      %v3696 = vmul.f32 %v1979, %v3592
      %v3697 = vmul.f32 %v1983, %v3588
      %v3698 = vmul.f32 %v1985, %v3592
      %v3699 = vmul.f32 %v1989, %v3588
      %v3700 = vmul.f32 %v1991, %v3592
      %v3701 = vmul.f32 %v1995, %v3588
      %v3702 = vmul.f32 %v1997, %v3592
      %v3703 = vmul.f32 %v2001, %v3588
      %v3704 = vmul.f32 %v2003, %v3592
      %v3705 = vmul.f32 %v2007, %v3588
      %v3706 = vmul.f32 %v2009, %v3592
      %v3707 = vmul.f32 %v2013, %v3588
      %v3708 = vmul.f32 %v2015, %v3592
      %v3709 = vmul.f32 %v2019, %v3588
      %v3710 = vmul.f32 %v2021, %v3592
      %v3711 = vmul.f32 %v2025, %v3588
      %v3712 = vmul.f32 %v2027, %v3592
      %v3713 = vmul.f32 %v2031, %v3588
      %v3714 = vmul.f32 %v2033, %v3592
      %v3715 = vmul.f32 %v2037, %v3588
      %v3716 = vmul.f32 %v2039, %v3592
      %v3717 = vmul.f32 %v2043, %v3588
      %v3718 = vmul.f32 %v2045, %v3592
      %v3719 = vmul.f32 %v2049, %v3588
      %v3720 = vmul.f32 %v2051, %v3592
      %v3721 = vmul.f32 %v2055, %v3588
      %v3722 = vmul.f32 %v2057, %v3592
      %v3723 = vmul.f32 %v2061, %v3588
      %v3724 = vmul.f32 %v2063, %v3592
      %v3725 = vmul.f32 %v2067, %v3588
      %v3726 = vmul.f32 %v2069, %v3592
      %v3727 = vmul.f32 %v2073, %v3588
      %v3728 = vmul.f32 %v2075, %v3592
      %v3729 = vmul.f32 %v2079, %v3588
      %v3730 = vmul.f32 %v2081, %v3592
      %v3731 = vmul.f32 %v2085, %v3588
      %v3732 = vmul.f32 %v2087, %v3592
      %v3733 = vmul.f32 %v2091, %v3588
      %v3734 = vmul.f32 %v2093, %v3592
      %v3735 = vmul.f32 %v2097, %v3588
      %v3736 = vmul.f32 %v2099, %v3592
      %v3737 = vmul.f32 %v2103, %v3588
      %v3738 = vmul.f32 %v2105, %v3592
      %v3739 = vmul.f32 %v2109, %v3588
      %v3740 = vmul.f32 %v2111, %v3592
      %v3741 = vmul.f32 %v2115, %v3588
      %v3742 = vmul.f32 %v2117, %v3592
      %v3743 = vmul.f32 %v2121, %v3588
      %v3744 = vmul.f32 %v2123, %v3592
      %v3745 = vmul.f32 %v2127, %v3588
      %v3746 = vmul.f32 %v2129, %v3592
      %v3747 = vmul.f32 %v2133, %v3588
      %v3748 = vmul.f32 %v2135, %v3592
      %v3749 = vmul.f32 %v2139, %v3588
      %v3750 = vmul.f32 %v2141, %v3592
      %v3751 = vmul.f32 %v2145, %v3588
      %v3752 = vmul.f32 %v2147, %v3592
      %v3753 = vmul.f32 %v2151, %v3588
      %v3754 = vmul.f32 %v2153, %v3592
      %v3755 = vmul.f32 %v2157, %v3588
      %v3756 = vmul.f32 %v2159, %v3592
      %v3757 = vmul.f32 %v2163, %v3588
      %v3758 = vmul.f32 %v2165, %v3592
      %v3759 = vmul.f32 %v2169, %v3588
      %v3760 = vmul.f32 %v2171, %v3592
      %v3761 = vmul.f32 %v2175, %v3588
      %v3762 = vmul.f32 %v2177, %v3592
      %v3763 = vmul.f32 %v2181, %v3588
      %v3764 = vmul.f32 %v2183, %v3592
      %v3765 = vmul.f32 %v2187, %v3588
      %v3766 = vmul.f32 %v2189, %v3592
      %v3767 = vmul.f32 %v2193, %v3588
      %v3768 = vmul.f32 %v2195, %v3592
      %v3769 = vmul.f32 %v2199, %v3588
      %v3770 = vmul.f32 %v2201, %v3592
      %v3771 = vmul.f32 %v2205, %v3588
      %v3772 = vmul.f32 %v2207, %v3592
      %v3773 = vmul.f32 %v2211, %v3588
      %v3774 = vmul.f32 %v2213, %v3592
      %v3775 = vmul.f32 %v2217, %v3588
      %v3776 = vmul.f32 %v2219, %v3592
      %v3777 = vmul.f32 %v2223, %v3588
      %v3778 = vmul.f32 %v2225, %v3592
      %v3779 = vmul.f32 %v2229, %v3588
      %v3780 = vmul.f32 %v2231, %v3592
      %v3781 = vmul.f32 %v2235, %v3588
      %v3782 = vmul.f32 %v2237, %v3592
      %v3783 = vmul.f32 %v2241, %v3588
      %v3784 = vmul.f32 %v2243, %v3592
      %v3785 = vmul.f32 %v2247, %v3588
      %v3786 = vmul.f32 %v2249, %v3592
      %v3787 = vmul.f32 %v2253, %v3588
      %v3788 = vmul.f32 %v2255, %v3592
      %v3789 = vmul.f32 %v2259, %v3588
      %v3790 = vmul.f32 %v2261, %v3592
      %v3791 = vmul.f32 %v2265, %v3588
      %v3792 = vmul.f32 %v2267, %v3592
      %v3793 = vmul.f32 %v2271, %v3588
      %v3794 = vmul.f32 %v2273, %v3592
      %v3795 = vmul.f32 %v2277, %v3588
      %v3796 = vmul.f32 %v2279, %v3592
      %v3797 = vmul.f32 %v2283, %v3588
      %v3798 = vmul.f32 %v2285, %v3592
      %v3799 = vmul.f32 %v2289, %v3588
      %v3800 = vmul.f32 %v2291, %v3592
      %v3801 = vmul.f32 %v2295, %v3588
      %v3802 = vmul.f32 %v2297, %v3592
      %v3803 = vmul.f32 %v2301, %v3588
      %v3804 = vmul.f32 %v2303, %v3592
      %v3805 = vmul.f32 %v2307, %v3588
      %v3806 = vmul.f32 %v2309, %v3592
      %v3807 = vmul.f32 %v2313, %v3588
      %v3808 = vmul.f32 %v2315, %v3592
      %v3809 = vmul.f32 %v2319, %v3588
      %v3810 = vmul.f32 %v2321, %v3592
      %v3811 = vmul.f32 %v2325, %v3588
      %v3812 = vmul.f32 %v2327, %v3592
      %v3813 = vmul.f32 %v2331, %v3588
      %v3814 = vmul.f32 %v2333, %v3592
      %v3815 = vmul.f32 %v2337, %v3588
      %v3816 = vmul.f32 %v2339, %v3592
      %v3817 = vmul.f32 %v2343, %v3588
      %v3818 = vmul.f32 %v2345, %v3592
      %v3819 = vmul.f32 %v2349, %v3588
      %v3820 = vmul.f32 %v2351, %v3592
      %v3821 = vmul.f32 %v2355, %v3588
      %v3822 = vmul.f32 %v2357, %v3592
      %v3823 = vmul.f32 %v2361, %v3588
      %v3824 = vmul.f32 %v2363, %v3592
      %v3825 = vmul.f32 %v2367, %v3588
      %v3826 = vmul.f32 %v2369, %v3592
      %v3827 = vmul.f32 %v2373, %v3588
      %v3828 = vmul.f32 %v2375, %v3592
      %v3829 = vmul.f32 %v2379, %v3588
      %v3830 = vmul.f32 %v2381, %v3592
      %v3831 = vmul.f32 %v2385, %v3588
      %v3832 = vmul.f32 %v2387, %v3592
      %v3833 = vmul.f32 %v2391, %v3588
      %v3834 = vmul.f32 %v2393, %v3592
      %v3835 = vmul.f32 %v2397, %v3588
      %v3836 = vmul.f32 %v2399, %v3592
      %v3837 = vmul.f32 %v2403, %v3588
      %v3838 = vmul.f32 %v2405, %v3592
      %v3839 = vmul.f32 %v2409, %v3588
      %v3840 = vmul.f32 %v2411, %v3592
      %v3841 = vmul.f32 %v2415, %v3588
      %v3842 = vmul.f32 %v2417, %v3592
      %v3843 = vmul.f32 %v2421, %v3588
      %v3844 = vmul.f32 %v2423, %v3592
      %v3845 = vmul.f32 %v2427, %v3588
      %v3846 = vmul.f32 %v2429, %v3592
      %v3847 = vmul.f32 %v2433, %v3588
      %v3848 = vmul.f32 %v2435, %v3592
      %3849 = vst [vmem:[%s304] sm:$0xff] %v3593
      %3850 = vst [vmem:[%s304 + $0x8] sm:$0xff] %v3594
      %3851 = vst [vmem:[%s304 + $0x10] sm:$0xff] %v3595
      %3852 = vst [vmem:[%s304 + $0x18] sm:$0xff] %v3596
      %3853 = vst [vmem:[%s304 + $0x20] sm:$0xff] %v3597
      %3854 = vst [vmem:[%s304 + $0x28] sm:$0xff] %v3598
      %3855 = vst [vmem:[%s304 + $0x30] sm:$0xff] %v3599
      %3856 = vst [vmem:[%s304 + $0x38] sm:$0xff] %v3600
      %3857 = vst [vmem:[%s304 + $0x40] sm:$0xff] %v3601
      %3858 = vst [vmem:[%s304 + $0x48] sm:$0xff] %v3602
      %3859 = vst [vmem:[%s304 + $0x50] sm:$0xff] %v3603
      %3860 = vst [vmem:[%s304 + $0x58] sm:$0xff] %v3604
      %3861 = vst [vmem:[%s304 + $0x60] sm:$0xff] %v3605
      %3862 = vst [vmem:[%s304 + $0x68] sm:$0xff] %v3606
      %3863 = vst [vmem:[%s304 + $0x70] sm:$0xff] %v3607
      %3864 = vst [vmem:[%s304 + $0x78] sm:$0xff] %v3608
      %3865 = vst [vmem:[%s304 + $0x80] sm:$0xff] %v3609
      %3866 = vst [vmem:[%s304 + $0x88] sm:$0xff] %v3610
      %3867 = vst [vmem:[%s304 + $0x90] sm:$0xff] %v3611
      %3868 = vst [vmem:[%s304 + $0x98] sm:$0xff] %v3612
      %3869 = vst [vmem:[%s304 + $0xa0] sm:$0xff] %v3613
      %3870 = vst [vmem:[%s304 + $0xa8] sm:$0xff] %v3614
      %3871 = vst [vmem:[%s304 + $0xb0] sm:$0xff] %v3615
      %3872 = vst [vmem:[%s304 + $0xb8] sm:$0xff] %v3616
      %3873 = vst [vmem:[%s304 + $0xc0] sm:$0xff] %v3617
      %3874 = vst [vmem:[%s304 + $0xc8] sm:$0xff] %v3618
      %3875 = vst [vmem:[%s304 + $0xd0] sm:$0xff] %v3619
      %3876 = vst [vmem:[%s304 + $0xd8] sm:$0xff] %v3620
      %3877 = vst [vmem:[%s304 + $0xe0] sm:$0xff] %v3621
      %3878 = vst [vmem:[%s304 + $0xe8] sm:$0xff] %v3622
      %3879 = vst [vmem:[%s304 + $0xf0] sm:$0xff] %v3623
      %3880 = vst [vmem:[%s304 + $0xf8] sm:$0xff] %v3624
      %3881 = vst [vmem:[%s304 + $0x100] sm:$0xff] %v3625
      %3882 = vst [vmem:[%s304 + $0x108] sm:$0xff] %v3626
      %3883 = vst [vmem:[%s304 + $0x110] sm:$0xff] %v3627
      %3884 = vst [vmem:[%s304 + $0x118] sm:$0xff] %v3628
      %3885 = vst [vmem:[%s304 + $0x120] sm:$0xff] %v3629
      %3886 = vst [vmem:[%s304 + $0x128] sm:$0xff] %v3630
      %3887 = vst [vmem:[%s304 + $0x130] sm:$0xff] %v3631
      %3888 = vst [vmem:[%s304 + $0x138] sm:$0xff] %v3632
      %3889 = vst [vmem:[%s304 + $0x140] sm:$0xff] %v3633
      %3890 = vst [vmem:[%s304 + $0x148] sm:$0xff] %v3634
      %3891 = vst [vmem:[%s304 + $0x150] sm:$0xff] %v3635
      %3892 = vst [vmem:[%s304 + $0x158] sm:$0xff] %v3636
      %3893 = vst [vmem:[%s304 + $0x160] sm:$0xff] %v3637
      %3894 = vst [vmem:[%s304 + $0x168] sm:$0xff] %v3638
      %3895 = vst [vmem:[%s304 + $0x170] sm:$0xff] %v3639
      %3896 = vst [vmem:[%s304 + $0x178] sm:$0xff] %v3640
      %3897 = vst [vmem:[%s304 + $0x180] sm:$0xff] %v3641
      %3898 = vst [vmem:[%s304 + $0x188] sm:$0xff] %v3642
      %3899 = vst [vmem:[%s304 + $0x190] sm:$0xff] %v3643
      %3900 = vst [vmem:[%s304 + $0x198] sm:$0xff] %v3644
      %3901 = vst [vmem:[%s304 + $0x1a0] sm:$0xff] %v3645
      %3902 = vst [vmem:[%s304 + $0x1a8] sm:$0xff] %v3646
      %3903 = vst [vmem:[%s304 + $0x1b0] sm:$0xff] %v3647
      %3904 = vst [vmem:[%s304 + $0x1b8] sm:$0xff] %v3648
      %3905 = vst [vmem:[%s304 + $0x1c0] sm:$0xff] %v3649
      %3906 = vst [vmem:[%s304 + $0x1c8] sm:$0xff] %v3650
      %3907 = vst [vmem:[%s304 + $0x1d0] sm:$0xff] %v3651
      %3908 = vst [vmem:[%s304 + $0x1d8] sm:$0xff] %v3652
      %3909 = vst [vmem:[%s304 + $0x1e0] sm:$0xff] %v3653
      %3910 = vst [vmem:[%s304 + $0x1e8] sm:$0xff] %v3654
      %3911 = vst [vmem:[%s304 + $0x1f0] sm:$0xff] %v3655
      %3912 = vst [vmem:[%s304 + $0x1f8] sm:$0xff] %v3656
      %3913 = vst [vmem:[%s304 + $0x200] sm:$0xff] %v3657
      %3914 = vst [vmem:[%s304 + $0x208] sm:$0xff] %v3658
      %3915 = vst [vmem:[%s304 + $0x210] sm:$0xff] %v3659
      %3916 = vst [vmem:[%s304 + $0x218] sm:$0xff] %v3660
      %3917 = vst [vmem:[%s304 + $0x220] sm:$0xff] %v3661
      %3918 = vst [vmem:[%s304 + $0x228] sm:$0xff] %v3662
      %3919 = vst [vmem:[%s304 + $0x230] sm:$0xff] %v3663
      %3920 = vst [vmem:[%s304 + $0x238] sm:$0xff] %v3664
      %3921 = vst [vmem:[%s304 + $0x240] sm:$0xff] %v3665
      %3922 = vst [vmem:[%s304 + $0x248] sm:$0xff] %v3666
      %3923 = vst [vmem:[%s304 + $0x250] sm:$0xff] %v3667
      %3924 = vst [vmem:[%s304 + $0x258] sm:$0xff] %v3668
      %3925 = vst [vmem:[%s304 + $0x260] sm:$0xff] %v3669
      %3926 = vst [vmem:[%s304 + $0x268] sm:$0xff] %v3670
      %3927 = vst [vmem:[%s304 + $0x270] sm:$0xff] %v3671
      %3928 = vst [vmem:[%s304 + $0x278] sm:$0xff] %v3672
      %3929 = vst [vmem:[%s304 + $0x280] sm:$0xff] %v3673
      %3930 = vst [vmem:[%s304 + $0x288] sm:$0xff] %v3674
      %3931 = vst [vmem:[%s304 + $0x290] sm:$0xff] %v3675
      %3932 = vst [vmem:[%s304 + $0x298] sm:$0xff] %v3676
      %3933 = vst [vmem:[%s304 + $0x2a0] sm:$0xff] %v3677
      %3934 = vst [vmem:[%s304 + $0x2a8] sm:$0xff] %v3678
      %3935 = vst [vmem:[%s304 + $0x2b0] sm:$0xff] %v3679
      %3936 = vst [vmem:[%s304 + $0x2b8] sm:$0xff] %v3680
      %3937 = vst [vmem:[%s304 + $0x2c0] sm:$0xff] %v3681
      %3938 = vst [vmem:[%s304 + $0x2c8] sm:$0xff] %v3682
      %3939 = vst [vmem:[%s304 + $0x2d0] sm:$0xff] %v3683
      %3940 = vst [vmem:[%s304 + $0x2d8] sm:$0xff] %v3684
      %3941 = vst [vmem:[%s304 + $0x2e0] sm:$0xff] %v3685
      %3942 = vst [vmem:[%s304 + $0x2e8] sm:$0xff] %v3686
      %3943 = vst [vmem:[%s304 + $0x2f0] sm:$0xff] %v3687
      %3944 = vst [vmem:[%s304 + $0x2f8] sm:$0xff] %v3688
      %3945 = vst [vmem:[%s304 + $0x300] sm:$0xff] %v3689
      %3946 = vst [vmem:[%s304 + $0x308] sm:$0xff] %v3690
      %3947 = vst [vmem:[%s304 + $0x310] sm:$0xff] %v3691
      %3948 = vst [vmem:[%s304 + $0x318] sm:$0xff] %v3692
      %3949 = vst [vmem:[%s304 + $0x320] sm:$0xff] %v3693
      %3950 = vst [vmem:[%s304 + $0x328] sm:$0xff] %v3694
      %3951 = vst [vmem:[%s304 + $0x330] sm:$0xff] %v3695
      %3952 = vst [vmem:[%s304 + $0x338] sm:$0xff] %v3696
      %3953 = vst [vmem:[%s304 + $0x340] sm:$0xff] %v3697
      %3954 = vst [vmem:[%s304 + $0x348] sm:$0xff] %v3698
      %3955 = vst [vmem:[%s304 + $0x350] sm:$0xff] %v3699
      %3956 = vst [vmem:[%s304 + $0x358] sm:$0xff] %v3700
      %3957 = vst [vmem:[%s304 + $0x360] sm:$0xff] %v3701
      %3958 = vst [vmem:[%s304 + $0x368] sm:$0xff] %v3702
      %3959 = vst [vmem:[%s304 + $0x370] sm:$0xff] %v3703
      %3960 = vst [vmem:[%s304 + $0x378] sm:$0xff] %v3704
      %3961 = vst [vmem:[%s304 + $0x380] sm:$0xff] %v3705
      %3962 = vst [vmem:[%s304 + $0x388] sm:$0xff] %v3706
      %3963 = vst [vmem:[%s304 + $0x390] sm:$0xff] %v3707
      %3964 = vst [vmem:[%s304 + $0x398] sm:$0xff] %v3708
      %3965 = vst [vmem:[%s304 + $0x3a0] sm:$0xff] %v3709
      %3966 = vst [vmem:[%s304 + $0x3a8] sm:$0xff] %v3710
      %3967 = vst [vmem:[%s304 + $0x3b0] sm:$0xff] %v3711
      %3968 = vst [vmem:[%s304 + $0x3b8] sm:$0xff] %v3712
      %3969 = vst [vmem:[%s304 + $0x3c0] sm:$0xff] %v3713
      %3970 = vst [vmem:[%s304 + $0x3c8] sm:$0xff] %v3714
      %3971 = vst [vmem:[%s304 + $0x3d0] sm:$0xff] %v3715
      %3972 = vst [vmem:[%s304 + $0x3d8] sm:$0xff] %v3716
      %3973 = vst [vmem:[%s304 + $0x3e0] sm:$0xff] %v3717
      %3974 = vst [vmem:[%s304 + $0x3e8] sm:$0xff] %v3718
      %3975 = vst [vmem:[%s304 + $0x3f0] sm:$0xff] %v3719
      %3976 = vst [vmem:[%s304 + $0x3f8] sm:$0xff] %v3720
      %3977 = vst [vmem:[%s304 + $0x400] sm:$0xff] %v3721
      %3978 = vst [vmem:[%s304 + $0x408] sm:$0xff] %v3722
      %3979 = vst [vmem:[%s304 + $0x410] sm:$0xff] %v3723
      %3980 = vst [vmem:[%s304 + $0x418] sm:$0xff] %v3724
      %3981 = vst [vmem:[%s304 + $0x420] sm:$0xff] %v3725
      %3982 = vst [vmem:[%s304 + $0x428] sm:$0xff] %v3726
      %3983 = vst [vmem:[%s304 + $0x430] sm:$0xff] %v3727
      %3984 = vst [vmem:[%s304 + $0x438] sm:$0xff] %v3728
      %3985 = vst [vmem:[%s304 + $0x440] sm:$0xff] %v3729
      %3986 = vst [vmem:[%s304 + $0x448] sm:$0xff] %v3730
      %3987 = vst [vmem:[%s304 + $0x450] sm:$0xff] %v3731
      %3988 = vst [vmem:[%s304 + $0x458] sm:$0xff] %v3732
      %3989 = vst [vmem:[%s304 + $0x460] sm:$0xff] %v3733
      %3990 = vst [vmem:[%s304 + $0x468] sm:$0xff] %v3734
      %3991 = vst [vmem:[%s304 + $0x470] sm:$0xff] %v3735
      %3992 = vst [vmem:[%s304 + $0x478] sm:$0xff] %v3736
      %3993 = vst [vmem:[%s304 + $0x480] sm:$0xff] %v3737
      %3994 = vst [vmem:[%s304 + $0x488] sm:$0xff] %v3738
      %3995 = vst [vmem:[%s304 + $0x490] sm:$0xff] %v3739
      %3996 = vst [vmem:[%s304 + $0x498] sm:$0xff] %v3740
      %3997 = vst [vmem:[%s304 + $0x4a0] sm:$0xff] %v3741
      %3998 = vst [vmem:[%s304 + $0x4a8] sm:$0xff] %v3742
      %3999 = vst [vmem:[%s304 + $0x4b0] sm:$0xff] %v3743
      %4000 = vst [vmem:[%s304 + $0x4b8] sm:$0xff] %v3744
      %4001 = vst [vmem:[%s304 + $0x4c0] sm:$0xff] %v3745
      %4002 = vst [vmem:[%s304 + $0x4c8] sm:$0xff] %v3746
      %4003 = vst [vmem:[%s304 + $0x4d0] sm:$0xff] %v3747
      %4004 = vst [vmem:[%s304 + $0x4d8] sm:$0xff] %v3748
      %4005 = vst [vmem:[%s304 + $0x4e0] sm:$0xff] %v3749
      %4006 = vst [vmem:[%s304 + $0x4e8] sm:$0xff] %v3750
      %4007 = vst [vmem:[%s304 + $0x4f0] sm:$0xff] %v3751
      %4008 = vst [vmem:[%s304 + $0x4f8] sm:$0xff] %v3752
      %4009 = vst [vmem:[%s304 + $0x500] sm:$0xff] %v3753
      %4010 = vst [vmem:[%s304 + $0x508] sm:$0xff] %v3754
      %4011 = vst [vmem:[%s304 + $0x510] sm:$0xff] %v3755
      %4012 = vst [vmem:[%s304 + $0x518] sm:$0xff] %v3756
      %4013 = vst [vmem:[%s304 + $0x520] sm:$0xff] %v3757
      %4014 = vst [vmem:[%s304 + $0x528] sm:$0xff] %v3758
      %4015 = vst [vmem:[%s304 + $0x530] sm:$0xff] %v3759
      %4016 = vst [vmem:[%s304 + $0x538] sm:$0xff] %v3760
      %4017 = vst [vmem:[%s304 + $0x540] sm:$0xff] %v3761
      %4018 = vst [vmem:[%s304 + $0x548] sm:$0xff] %v3762
      %4019 = vst [vmem:[%s304 + $0x550] sm:$0xff] %v3763
      %4020 = vst [vmem:[%s304 + $0x558] sm:$0xff] %v3764
      %4021 = vst [vmem:[%s304 + $0x560] sm:$0xff] %v3765
      %4022 = vst [vmem:[%s304 + $0x568] sm:$0xff] %v3766
      %4023 = vst [vmem:[%s304 + $0x570] sm:$0xff] %v3767
      %4024 = vst [vmem:[%s304 + $0x578] sm:$0xff] %v3768
      %4025 = vst [vmem:[%s304 + $0x580] sm:$0xff] %v3769
      %4026 = vst [vmem:[%s304 + $0x588] sm:$0xff] %v3770
      %4027 = vst [vmem:[%s304 + $0x590] sm:$0xff] %v3771
      %4028 = vst [vmem:[%s304 + $0x598] sm:$0xff] %v3772
      %4029 = vst [vmem:[%s304 + $0x5a0] sm:$0xff] %v3773
      %4030 = vst [vmem:[%s304 + $0x5a8] sm:$0xff] %v3774
      %4031 = vst [vmem:[%s304 + $0x5b0] sm:$0xff] %v3775
      %4032 = vst [vmem:[%s304 + $0x5b8] sm:$0xff] %v3776
      %4033 = vst [vmem:[%s304 + $0x5c0] sm:$0xff] %v3777
      %4034 = vst [vmem:[%s304 + $0x5c8] sm:$0xff] %v3778
      %4035 = vst [vmem:[%s304 + $0x5d0] sm:$0xff] %v3779
      %4036 = vst [vmem:[%s304 + $0x5d8] sm:$0xff] %v3780
      %4037 = vst [vmem:[%s304 + $0x5e0] sm:$0xff] %v3781
      %4038 = vst [vmem:[%s304 + $0x5e8] sm:$0xff] %v3782
      %4039 = vst [vmem:[%s304 + $0x5f0] sm:$0xff] %v3783
      %4040 = vst [vmem:[%s304 + $0x5f8] sm:$0xff] %v3784
      %4041 = vst [vmem:[%s304 + $0x600] sm:$0xff] %v3785
      %4042 = vst [vmem:[%s304 + $0x608] sm:$0xff] %v3786
      %4043 = vst [vmem:[%s304 + $0x610] sm:$0xff] %v3787
      %4044 = vst [vmem:[%s304 + $0x618] sm:$0xff] %v3788
      %4045 = vst [vmem:[%s304 + $0x620] sm:$0xff] %v3789
      %4046 = vst [vmem:[%s304 + $0x628] sm:$0xff] %v3790
      %4047 = vst [vmem:[%s304 + $0x630] sm:$0xff] %v3791
      %4048 = vst [vmem:[%s304 + $0x638] sm:$0xff] %v3792
      %4049 = vst [vmem:[%s304 + $0x640] sm:$0xff] %v3793
      %4050 = vst [vmem:[%s304 + $0x648] sm:$0xff] %v3794
      %4051 = vst [vmem:[%s304 + $0x650] sm:$0xff] %v3795
      %4052 = vst [vmem:[%s304 + $0x658] sm:$0xff] %v3796
      %4053 = vst [vmem:[%s304 + $0x660] sm:$0xff] %v3797
      %4054 = vst [vmem:[%s304 + $0x668] sm:$0xff] %v3798
      %4055 = vst [vmem:[%s304 + $0x670] sm:$0xff] %v3799
      %4056 = vst [vmem:[%s304 + $0x678] sm:$0xff] %v3800
      %4057 = vst [vmem:[%s304 + $0x680] sm:$0xff] %v3801
      %4058 = vst [vmem:[%s304 + $0x688] sm:$0xff] %v3802
      %4059 = vst [vmem:[%s304 + $0x690] sm:$0xff] %v3803
      %4060 = vst [vmem:[%s304 + $0x698] sm:$0xff] %v3804
      %4061 = vst [vmem:[%s304 + $0x6a0] sm:$0xff] %v3805
      %4062 = vst [vmem:[%s304 + $0x6a8] sm:$0xff] %v3806
      %4063 = vst [vmem:[%s304 + $0x6b0] sm:$0xff] %v3807
      %4064 = vst [vmem:[%s304 + $0x6b8] sm:$0xff] %v3808
      %4065 = vst [vmem:[%s304 + $0x6c0] sm:$0xff] %v3809
      %4066 = vst [vmem:[%s304 + $0x6c8] sm:$0xff] %v3810
      %4067 = vst [vmem:[%s304 + $0x6d0] sm:$0xff] %v3811
      %4068 = vst [vmem:[%s304 + $0x6d8] sm:$0xff] %v3812
      %4069 = vst [vmem:[%s304 + $0x6e0] sm:$0xff] %v3813
      %4070 = vst [vmem:[%s304 + $0x6e8] sm:$0xff] %v3814
      %4071 = vst [vmem:[%s304 + $0x6f0] sm:$0xff] %v3815
      %4072 = vst [vmem:[%s304 + $0x6f8] sm:$0xff] %v3816
      %4073 = vst [vmem:[%s304 + $0x700] sm:$0xff] %v3817
      %4074 = vst [vmem:[%s304 + $0x708] sm:$0xff] %v3818
      %4075 = vst [vmem:[%s304 + $0x710] sm:$0xff] %v3819
      %4076 = vst [vmem:[%s304 + $0x718] sm:$0xff] %v3820
      %4077 = vst [vmem:[%s304 + $0x720] sm:$0xff] %v3821
      %4078 = vst [vmem:[%s304 + $0x728] sm:$0xff] %v3822
      %4079 = vst [vmem:[%s304 + $0x730] sm:$0xff] %v3823
      %4080 = vst [vmem:[%s304 + $0x738] sm:$0xff] %v3824
      %4081 = vst [vmem:[%s304 + $0x740] sm:$0xff] %v3825
      %4082 = vst [vmem:[%s304 + $0x748] sm:$0xff] %v3826
      %4083 = vst [vmem:[%s304 + $0x750] sm:$0xff] %v3827
      %4084 = vst [vmem:[%s304 + $0x758] sm:$0xff] %v3828
      %4085 = vst [vmem:[%s304 + $0x760] sm:$0xff] %v3829
      %4086 = vst [vmem:[%s304 + $0x768] sm:$0xff] %v3830
      %4087 = vst [vmem:[%s304 + $0x770] sm:$0xff] %v3831
      %4088 = vst [vmem:[%s304 + $0x778] sm:$0xff] %v3832
      %4089 = vst [vmem:[%s304 + $0x780] sm:$0xff] %v3833
      %4090 = vst [vmem:[%s304 + $0x788] sm:$0xff] %v3834
      %4091 = vst [vmem:[%s304 + $0x790] sm:$0xff] %v3835
      %4092 = vst [vmem:[%s304 + $0x798] sm:$0xff] %v3836
      %4093 = vst [vmem:[%s304 + $0x7a0] sm:$0xff] %v3837
      %4094 = vst [vmem:[%s304 + $0x7a8] sm:$0xff] %v3838
      %4095 = vst [vmem:[%s304 + $0x7b0] sm:$0xff] %v3839
      %4096 = vst [vmem:[%s304 + $0x7b8] sm:$0xff] %v3840
      %4097 = vst [vmem:[%s304 + $0x7c0] sm:$0xff] %v3841
      %4098 = vst [vmem:[%s304 + $0x7c8] sm:$0xff] %v3842
      %4099 = vst [vmem:[%s304 + $0x7d0] sm:$0xff] %v3843
      %4100 = vst [vmem:[%s304 + $0x7d8] sm:$0xff] %v3844
      %4101 = vst [vmem:[%s304 + $0x7e0] sm:$0xff] %v3845
      %4102 = vst [vmem:[%s304 + $0x7e8] sm:$0xff] %v3846
      %4103 = vst [vmem:[%s304 + $0x7f0] sm:$0xff] %v3847
      %4104 = vst [vmem:[%s304 + $0x7f8] sm:$0xff] %v3848
      %v4107 = vcombine.low %v3581, %v3582
      %v4109 = vunpack.c.l.s4 1966171168
      %v4110 = vunpack.c.0.s8 %v4109
      %v4111 = vlaneseq
      %v4112 = vshrl.u32 %v4111, 7
      %v4113 = vsub.s32 %v4110, %v4112
      %v4114 = vrot.slane %v4107, %v4113
      %v4116 = vunpack.c.l.s4 1966171168
      %v4117 = vunpack.c.0.s8 %v4116
      %v4118 = vlaneseq
      %v4119 = vshrl.u32 %v4118, 7
      %v4120 = vsub.s32 %v4117, %v4119
      %v4121 = vrot.slane %v4114, %v4120
      %v4123 = vlaneseq
      %vm4124 = vcmp.ge.s32.totalorder %v4123, 0
      %vm4125 = vcmp.lt.s32.totalorder %v4123, 256
      %vm4126 = vmand %vm4124, %vm4125
      %4127 = vst.msk [vmem:[%s313] sm:$0x3] %vm4126, %v4121
      %s4128 = smul.u32 2, %s25
      %p4129 = scmp.lt.s32.totalorder %s24, 1
      %s4130 = scalar_select %p4129, %s24, 1
      %p4131 = scmp.lt.s32.totalorder %s4128, 1
      %s4132 = scalar_select %p4131, %s4128, 1
      %s4133 = smul.addr %s4130, 256
      %s4134 = sadd.s32 %s4132, %s4133
      %s4135 = smul.addr %s4134, 8
      %s4136 = scalar_lea.vmem %s5, %s4135
      %s4137 = smul.u32 2, %s25
      %p4138 = scmp.lt.s32.totalorder %s24, 1
      %s4139 = scalar_select %p4138, %s24, 1
      %p4140 = scmp.lt.s32.totalorder %s4137, 1
      %s4141 = scalar_select %p4140, %s4137, 1
      %s4142 = smul.addr %s4139, 2
      %s4143 = sadd.s32 %s4141, %s4142
      %s4144 = scalar_lea.vmem %s6, %s4143
      // Predicated region
      $region41: #{spatial_attention_2d.1} parent=39 // pred_check
        %p4145 = pneg %p164
      $region42: #{spatial_attention_2d.1} parent=39 // pred_check_branch
        %4147 = sbr.rel (%p4145) target = $region44
      $region43: #{spatial_attention_2d.1} parent=39 // pred_region
        %s4148 = smul.u32 2, %s25
      $region44: #{spatial_attention_2d.1} parent=39 // pred_fallthru
        _
      // Predicated region
      $region45: #{spatial_attention_2d.1} parent=39 // pred_check
        %p4149 = pneg %p192
      $region46: #{spatial_attention_2d.1} parent=39 // pred_check_branch
        %4151 = sbr.rel (%p4149) target = $region48
      $region47: #{spatial_attention_2d.1} parent=39 // pred_region
        %s4152 = smul.u32 2, %s25
      $region48: #{spatial_attention_2d.1} parent=39 // pred_fallthru
        _
    $region40: #{spatial_attention_2d.1} parent=5 // pred_fallthru
      _
    %p4153 = scmp.le.s32.totalorder 2, %s15
    // Predicated region
    $region49: #{spatial_attention_2d.1} parent=5 // pred_check
      %p4154 = pneg %p4153
    $region50: #{spatial_attention_2d.1} parent=5 // pred_check_branch
      %4156 = sbr.rel (%p4154) target = $region52
    $region51: #{spatial_attention_2d.1} parent=5 // pred_region
      %s4157 = ssub.s32 %s15, 2
      // Predicated region
      $region53: #{spatial_attention_2d.1} parent=51 // pred_check
        %p4158 = pneg %p170
      $region54: #{spatial_attention_2d.1} parent=51 // pred_check_branch
        %4160 = sbr.rel (%p4158) target = $region56
      $region55: #{spatial_attention_2d.1} parent=51 // pred_region
        %s4161 = smul.u32 2, %s27
        %p4162 = scmp.lt.s32.totalorder %s26, 1
        %s4163 = scalar_select %p4162, %s26, 1
        %p4164 = scmp.lt.s32.totalorder %s4161, 1
        %s4165 = scalar_select %p4164, %s4161, 1
        %s4166 = smul.addr %s4163, 256
        %s4167 = sadd.s32 %s4165, %s4166
        %s4168 = smul.addr %s4167, 8
        %s4169 = scalar_lea.vmem %s5, %s4168
      $region56: #{spatial_attention_2d.1} parent=51 // pred_fallthru
        _
      // Predicated region
      $region57: #{spatial_attention_2d.1} parent=51 // pred_check
        %p4170 = pneg %p198
      $region58: #{spatial_attention_2d.1} parent=51 // pred_check_branch
        %4172 = sbr.rel (%p4170) target = $region60
      $region59: #{spatial_attention_2d.1} parent=51 // pred_region
        %s4173 = smul.u32 2, %s27
        %p4174 = scmp.lt.s32.totalorder %s26, 1
        %s4175 = scalar_select %p4174, %s26, 1
        %p4176 = scmp.lt.s32.totalorder %s4173, 1
        %s4177 = scalar_select %p4176, %s4173, 1
        %s4178 = smul.addr %s4175, 2
        %s4179 = sadd.s32 %s4177, %s4178
        %s4180 = scalar_lea.vmem %s6, %s4179
      $region60: #{spatial_attention_2d.1} parent=51 // pred_fallthru
        _
    $region52: #{spatial_attention_2d.1} parent=5 // pred_fallthru
      _
  $region6: #{spatial_attention_2d.1} parent=0 // loop_footer
    %s19 = sadd.s32 1, %s15
  $region7: #{spatial_attention_2d.1} parent=0 // loop_footer_branch
    %14 = sbr.rel target = $region3
  $region8: #{spatial_attention_2d.1} parent=0 // loop_exit
    _

</llo_original>
